<compile_context>
chip_gen: v7x
topology: tpu7x:2x2x1
jax: 0.10.0
libtpu: 0.0.40
codegen_flags: <defaults>
</compile_context>

<pallas_src>
import functools

import numpy as np

import jax
import jax.numpy as jnp
from jax.experimental import pallas as pl
from jax.experimental.pallas import tpu as pltpu


# ----------------------------------------------------------------------------
# Fused forward kernel: one grid step == BT images.
#
# Row layout everywhere: row index = spatial_row * BT + image_in_tile.
# Lane layouts (channels*width folded into lanes):
#   conv1 out : [24*BT, 240]  lanes = oc*24 + ow   (oc in [0,10))
#   pool1 out : [12*BT, 120]  lanes = ic*12 + w
#   conv2 out : [ 8*BT, 160]  lanes = oc*8  + ow   (oc in [0,20))
#   pool2 out : [ 4*BT,  80]  lanes = oc*4  + w
#   fc1 / fc2 : [   BT, 128]  (padded lanes)
# ----------------------------------------------------------------------------
def _lenet_kernel(x_ref, w1b_ref, b1_ref, cs1e_ref, cs1o_ref,
                  w2b_ref, b2_ref, cs2e_ref, cs2o_ref,
                  wf1_ref, bf1_ref, wf2_ref, bf2_ref, mask_ref,
                  o_ref, *, bt):
    f32 = jnp.float32
    bf16 = jnp.bfloat16
    BT = bt

    # Input block: [28*BT, 28] bf16, row = spatial_row*BT + image.
    xw = x_ref[...]

    # ---- conv1 (5x5, 1->10): 5 tap matmuls over all 24 output rows ---------
    acc1 = jnp.zeros((24 * BT, 240), f32)
    for i in range(5):
        acc1 = acc1 + jnp.dot(xw[i * BT:(i + 24) * BT, :], w1b_ref[i],
                              preferred_element_type=f32)
    # 2x2 max-pool, row half: tile-aligned reshape + elementwise max.
    a3 = acc1.reshape(12, 2 * BT, 240)
    m1 = jnp.maximum(a3[:, :BT, :], a3[:, BT:, :]).reshape(12 * BT, 240)
    m1 = m1 + b1_ref[...]
    # Width half via one-hot lane-gather matmuls (bf16, exact), then ReLU.
    m1b = m1.astype(bf16)
    p1 = jnp.maximum(
        jnp.maximum(jnp.dot(m1b, cs1e_ref[...], preferred_element_type=f32),
                    jnp.dot(m1b, cs1o_ref[...], preferred_element_type=f32)),
        0.0)                                                   # [12*BT, 120]
    p1b = p1.astype(bf16)

    # ---- conv2 (5x5, 10->20); Dropout2d is identity in eval mode -----------
    acc2 = jnp.zeros((8 * BT, 160), f32)
    for i in range(5):
        acc2 = acc2 + jnp.dot(p1b[i * BT:(i + 8) * BT, :], w2b_ref[i],
                              preferred_element_type=f32)
    a3 = acc2.reshape(4, 2 * BT, 160)
    m2 = jnp.maximum(a3[:, :BT, :], a3[:, BT:, :]).reshape(4 * BT, 160)
    m2 = m2 + b2_ref[...]
    m2b = m2.astype(bf16)
    p2 = jnp.maximum(
        jnp.maximum(jnp.dot(m2b, cs2e_ref[...], preferred_element_type=f32),
                    jnp.dot(m2b, cs2o_ref[...], preferred_element_type=f32)),
        0.0)                                                   # [4*BT, 80]
    p2b = p2.astype(bf16)

    # ---- fc1 (320 -> 50, padded to 128 lanes) + ReLU ------------------------
    # torch's channel-major .view(-1, 320) is folded into wf1's packing; the
    # per-spatial-row groups are contiguous [BT, 80] slices (no selectors).
    h1 = jnp.zeros((BT, 128), f32)
    for h in range(4):
        h1 = h1 + jnp.dot(p2b[h * BT:(h + 1) * BT, :], wf1_ref[h],
                          preferred_element_type=f32)
    h1 = jnp.maximum(h1 + bf1_ref[...], 0.0)

    # ---- dropout (eval: identity) -> fc2 (padded) -> masked log_softmax ----
    z = jnp.dot(h1.astype(bf16), wf2_ref[...], preferred_element_type=f32)
    z = z + bf2_ref[...] + mask_ref[...]                       # pads -> -1e30
    m = jnp.max(z, axis=1, keepdims=True)
    s = z - m
    out = s - jnp.log(jnp.sum(jnp.exp(s), axis=1, keepdims=True))
    o_ref[...] = out.astype(o_ref.dtype)                       # [BT, 128]


# ----------------------------------------------------------------------------
# One-time host-side repack of torch-layout weights into kernel-ready matrices.
# ----------------------------------------------------------------------------
def prepare_params(params):
    w1 = np.asarray(params["w_conv1"], np.float32)    # [10, 1, 5, 5]
    b1 = np.asarray(params["b_conv1"], np.float32)    # [10]
    w2 = np.asarray(params["w_conv2"], np.float32)    # [20, 10, 5, 5]
    b2 = np.asarray(params["b_conv2"], np.float32)    # [20]
    wf1 = np.asarray(params["w_fc1"], np.float32)     # [50, 320]
    bf1 = np.asarray(params["b_fc1"], np.float32)     # [50]
    wf2 = np.asarray(params["w_fc2"], np.float32)     # [10, 50]
    bf2 = np.asarray(params["b_fc2"], np.float32)     # [10]

    K = 5
    # conv1 banded taps: (x rows) @ w1b[i] -> lanes (oc*24 + ow)
    w1b = np.zeros((K, 28, 10 * 24), np.float32)
    for i in range(K):
        for j in range(K):
            for ow in range(24):
                w1b[i, ow + j, np.arange(10) * 24 + ow] = w1[:, 0, i, j]
    b1row = np.repeat(b1, 24)[None, :]                            # [1, 240]

    # conv2 banded taps: input lanes (ic*12 + w) -> output lanes (oc*8 + ow)
    w2b = np.zeros((K, 10 * 12, 20 * 8), np.float32)
    for i in range(K):
        for j in range(K):
            for ic in range(10):
                for ow in range(8):
                    w2b[i, ic * 12 + ow + j, np.arange(20) * 8 + ow] = w2[:, ic, i, j]
    b2row = np.repeat(b2, 8)[None, :]                             # [1, 160]

    # one-hot lane gathers for the width half of the 2x2 max-pool (bf16-exact)
    def col_pool(nc, w_in):
        w_out = w_in // 2
        e = np.zeros((nc * w_in, nc * w_out), np.float32)
        o = np.zeros((nc * w_in, nc * w_out), np.float32)
        for c in range(nc):
            e[c * w_in + 2 * np.arange(w_out), c * w_out + np.arange(w_out)] = 1.0
            o[c * w_in + 2 * np.arange(w_out) + 1, c * w_out + np.arange(w_out)] = 1.0
        return e, o

    cs1e, cs1o = col_pool(10, 24)                                 # [240, 120]
    cs2e, cs2o = col_pool(20, 8)                                  # [160, 80]

    # fc1: fold torch's channel-major flatten into the weight; pad 50 -> 128
    wf1_r = wf1.reshape(50, 20, 4, 4).transpose(2, 1, 3, 0).reshape(4, 80, 50)
    wf1_p = np.zeros((4, 80, 128), np.float32)
    wf1_p[:, :, :50] = wf1_r
    bf1row = np.zeros((1, 128), np.float32)
    bf1row[0, :50] = bf1

    # fc2: pad K 50 -> 128 and N 10 -> 128; padded logit lanes masked to -1e30
    wf2_p = np.zeros((128, 128), np.float32)
    wf2_p[:50, :10] = wf2.T
    bf2row = np.zeros((1, 128), np.float32)
    bf2row[0, :10] = bf2
    maskrow = np.zeros((1, 128), np.float32)
    maskrow[0, 10:] = -1e30

    bf16, f32 = jnp.bfloat16, jnp.float32
    return (
        jnp.asarray(w1b, bf16), jnp.asarray(b1row, f32),
        jnp.asarray(cs1e, bf16), jnp.asarray(cs1o, bf16),
        jnp.asarray(w2b, bf16), jnp.asarray(b2row, f32),
        jnp.asarray(cs2e, bf16), jnp.asarray(cs2o, bf16),
        jnp.asarray(wf1_p, bf16), jnp.asarray(bf1row, f32),
        jnp.asarray(wf2_p, bf16), jnp.asarray(bf2row, f32),
        jnp.asarray(maskrow, f32),
    )


def _round_up(n, m):
    return ((n + m - 1) // m) * m


# ----------------------------------------------------------------------------
# Forward wrapper: one pallas_call, grid over BT-image batch tiles (parallel).
# ----------------------------------------------------------------------------
@jax.jit
def lenet_forward(x_nchw, prep):
    """LeNet forward (eval mode).  x: [B, 1, 28, 28] -> log-probs [B, 10]."""
    B = x_nchw.shape[0]
    BT = 16 if B <= 16 else 32          # batch tile (multiple of 16)
    Bp = _round_up(B, BT)
    G = Bp // BT

    # Host-side packing: pad the batch, order rows as (group, row, image),
    # flatten to 2D and pre-cast to bf16 (halves the input DMA bytes).
    x3 = jnp.pad(x_nchw.reshape(B, 28, 28), ((0, Bp - B), (0, 0), (0, 0)))
    x2d = (x3.reshape(G, BT, 28, 28)
             .transpose(0, 2, 1, 3)
             .reshape(G * 28 * BT, 28)
             .astype(jnp.bfloat16))

    def const_spec(a):
        nd = a.ndim
        return pl.BlockSpec(a.shape, lambda g, _n=nd: (0,) * _n)

    out = pl.pallas_call(
        functools.partial(_lenet_kernel, bt=BT),
        out_shape=jax.ShapeDtypeStruct((Bp, 128), jnp.float32),
        grid=(G,),
        in_specs=[pl.BlockSpec((28 * BT, 28), lambda g: (g, 0))]
                 + [const_spec(a) for a in prep],
        out_specs=pl.BlockSpec((BT, 128), lambda g: (g, 0)),
        compiler_params=pltpu.CompilerParams(
            dimension_semantics=("parallel",),
            vmem_limit_bytes=32 * 1024 * 1024,
        ),
    )(x2d, *prep)
    return out[:B, :10]


# ----------------------------------------------------------------------------
# Pure-JAX/XLA reference (same bf16-operand / f32-accumulate policy).
# ----------------------------------------------------------------------------
@jax.jit
def lenet_reference(x, params):
    f32, bf16 = jnp.float32, jnp.bfloat16

    def conv(v, w, b):
        y = jax.lax.conv_general_dilated(
            v.astype(bf16), w.astype(bf16), (1, 1), "VALID",
            dimension_numbers=("NCHW", "OIHW", "NCHW"),
            preferred_element_type=f32)
        return y + b.reshape(1, -1, 1, 1)

    def pool_relu(y):
        B, C, H, W = y.shape
        y = y.reshape(B, C, H // 2, 2, W // 2, 2).max(axis=(3, 5))
        return jnp.maximum(y, 0.0)

    a1 = pool_relu(conv(x, params["w_conv1"], params["b_conv1"]))
    a2 = pool_relu(conv(a1, params["w_conv2"], params["b_conv2"]))
    flat = a2.reshape(a2.shape[0], -1)
    h = jnp.maximum(
        jnp.dot(flat.astype(bf16), params["w_fc1"].T.astype(bf16),
                preferred_element_type=f32) + params["b_fc1"], 0.0)
    z = jnp.dot(h.astype(bf16), params["w_fc2"].T.astype(bf16),
                preferred_element_type=f32) + params["b_fc2"]
    return jax.nn.log_softmax(z, axis=-1)


def init_params(key):
    """Parameters in torch layouts: conv [OC,IC,KH,KW], linear [out,in]."""
    ks = jax.random.split(key, 8)
    s = 0.1
    return {
        "w_conv1": s * jax.random.normal(ks[0], (10, 1, 5, 5), jnp.float32),
        "b_conv1": s * jax.random.normal(ks[1], (10,), jnp.float32),
        "w_conv2": s * jax.random.normal(ks[2], (20, 10, 5, 5), jnp.float32),
        "b_conv2": s * jax.random.normal(ks[3], (20,), jnp.float32),
        "w_fc1": s * jax.random.normal(ks[4], (50, 320), jnp.float32),
        "b_fc1": s * jax.random.normal(ks[5], (50,), jnp.float32),
        "w_fc2": s * jax.random.normal(ks[6], (10, 50), jnp.float32),
        "b_fc2": s * jax.random.normal(ks[7], (10,), jnp.float32),
    }


if __name__ == "__main__":
    key = jax.random.PRNGKey(0)
    k_x, k_p = jax.random.split(key)
    # MNIST-sized input implied by the module's .view(-1, 320): [B, 1, 28, 28].
    x = jax.random.normal(k_x, (2, 1, 28, 28), jnp.float32)
    params = init_params(k_p)
    prep = prepare_params(params)

    out = jax.block_until_ready(lenet_forward(x, prep))
    assert out.shape == (2, 10) and out.dtype == jnp.float32

    # Correctness: match the pure-JAX reference and check log-prob normalization.
    ref = jax.block_until_ready(lenet_reference(x, params))
    err = float(np.max(np.abs(np.asarray(out) - np.asarray(ref))))
    assert err < 3e-2, f"max |kernel - reference| = {err}"
    assert np.allclose(np.exp(np.asarray(out)).sum(-1), 1.0, atol=1e-3)

    print("KERNEL_OK")
</pallas_src>

<mosaic_0001>
module attributes {stable_mosaic.version = 11 : i64} {
  func.func @_lenet_kernel(%arg0: i32, %arg1: memref<448x28xbf16, #tpu.memory_space<vmem>>, %arg2: memref<5x28x240xbf16, #tpu.memory_space<vmem>>, %arg3: memref<1x240xf32, #tpu.memory_space<vmem>>, %arg4: memref<240x120xbf16, #tpu.memory_space<vmem>>, %arg5: memref<240x120xbf16, #tpu.memory_space<vmem>>, %arg6: memref<5x120x160xbf16, #tpu.memory_space<vmem>>, %arg7: memref<1x160xf32, #tpu.memory_space<vmem>>, %arg8: memref<160x80xbf16, #tpu.memory_space<vmem>>, %arg9: memref<160x80xbf16, #tpu.memory_space<vmem>>, %arg10: memref<4x80x128xbf16, #tpu.memory_space<vmem>>, %arg11: memref<1x128xf32, #tpu.memory_space<vmem>>, %arg12: memref<128x128xbf16, #tpu.memory_space<vmem>>, %arg13: memref<1x128xf32, #tpu.memory_space<vmem>>, %arg14: memref<1x128xf32, #tpu.memory_space<vmem>>, %arg15: memref<16x128xf32, #tpu.memory_space<vmem>>) attributes {dimension_semantics = [#tpu.dimension_semantics<parallel>], iteration_bounds = array<i64: 1>, scalar_prefetch = 0 : i64, scratch_operands = 0 : i64, tpu.core_type = #tpu.core_type<tc>, window_params = [{transform_indices = @transform_0, window_bounds = array<i64: 448, 28>}, {pipeline_mode = #tpu.pipeline_mode<synchronous>, transform_indices = @transform_1, window_bounds = array<i64: 5, 28, 240>}, {pipeline_mode = #tpu.pipeline_mode<synchronous>, transform_indices = @transform_2, window_bounds = array<i64: 1, 240>}, {pipeline_mode = #tpu.pipeline_mode<synchronous>, transform_indices = @transform_3, window_bounds = array<i64: 240, 120>}, {pipeline_mode = #tpu.pipeline_mode<synchronous>, transform_indices = @transform_4, window_bounds = array<i64: 240, 120>}, {pipeline_mode = #tpu.pipeline_mode<synchronous>, transform_indices = @transform_5, window_bounds = array<i64: 5, 120, 160>}, {pipeline_mode = #tpu.pipeline_mode<synchronous>, transform_indices = @transform_6, window_bounds = array<i64: 1, 160>}, {pipeline_mode = #tpu.pipeline_mode<synchronous>, transform_indices = @transform_7, window_bounds = array<i64: 160, 80>}, {pipeline_mode = #tpu.pipeline_mode<synchronous>, transform_indices = @transform_8, window_bounds = array<i64: 160, 80>}, {pipeline_mode = #tpu.pipeline_mode<synchronous>, transform_indices = @transform_9, window_bounds = array<i64: 4, 80, 128>}, {pipeline_mode = #tpu.pipeline_mode<synchronous>, transform_indices = @transform_10, window_bounds = array<i64: 1, 128>}, {pipeline_mode = #tpu.pipeline_mode<synchronous>, transform_indices = @transform_11, window_bounds = array<i64: 128, 128>}, {pipeline_mode = #tpu.pipeline_mode<synchronous>, transform_indices = @transform_12, window_bounds = array<i64: 1, 128>}, {pipeline_mode = #tpu.pipeline_mode<synchronous>, transform_indices = @transform_13, window_bounds = array<i64: 1, 128>}, {transform_indices = @transform_14, window_bounds = array<i64: 16, 128>}]} {
    %c0 = arith.constant 0 : index
    %c0_0 = arith.constant 0 : index
    %0 = vector.load %arg1[%c0, %c0_0] : memref<448x28xbf16, #tpu.memory_space<vmem>>, vector<448x28xbf16>
    %cst = arith.constant 0.000000e+00 : f32
    %1 = vector.broadcast %cst : f32 to vector<384x240xf32>
    %2 = vector.extract_strided_slice %0 {offsets = [0, 0], sizes = [384, 28], strides = [1, 1]} : vector<448x28xbf16> to vector<384x28xbf16>
    %c0_1 = arith.constant 0 : index
    %c0_2 = arith.constant 0 : index
    %c0_3 = arith.constant 0 : index
    %3 = vector.load %arg2[%c0_1, %c0_2, %c0_3] : memref<5x28x240xbf16, #tpu.memory_space<vmem>>, vector<1x28x240xbf16>
    %4 = vector.shape_cast %3 : vector<1x28x240xbf16> to vector<28x240xbf16>
    %cst_4 = arith.constant dense<0.000000e+00> : vector<384x240xf32>
    %5 = tpu.matmul %2, %4, %cst_4 {dimension_numbers = #tpu.dot_dimension_numbers<[1], [0], [0], [1], [0, 0, 1, 1], [], []>} : vector<384x28xbf16>, vector<28x240xbf16>, vector<384x240xf32> -> vector<384x240xf32>
    %6 = arith.addf %1, %5 : vector<384x240xf32>
    %7 = vector.extract_strided_slice %0 {offsets = [16, 0], sizes = [384, 28], strides = [1, 1]} : vector<448x28xbf16> to vector<384x28xbf16>
    %c1 = arith.constant 1 : index
    %c0_5 = arith.constant 0 : index
    %c0_6 = arith.constant 0 : index
    %8 = vector.load %arg2[%c1, %c0_5, %c0_6] : memref<5x28x240xbf16, #tpu.memory_space<vmem>>, vector<1x28x240xbf16>
    %9 = vector.shape_cast %8 : vector<1x28x240xbf16> to vector<28x240xbf16>
    %cst_7 = arith.constant dense<0.000000e+00> : vector<384x240xf32>
    %10 = tpu.matmul %7, %9, %cst_7 {dimension_numbers = #tpu.dot_dimension_numbers<[1], [0], [0], [1], [0, 0, 1, 1], [], []>} : vector<384x28xbf16>, vector<28x240xbf16>, vector<384x240xf32> -> vector<384x240xf32>
    %11 = arith.addf %6, %10 : vector<384x240xf32>
    %12 = vector.extract_strided_slice %0 {offsets = [32, 0], sizes = [384, 28], strides = [1, 1]} : vector<448x28xbf16> to vector<384x28xbf16>
    %c2 = arith.constant 2 : index
    %c0_8 = arith.constant 0 : index
    %c0_9 = arith.constant 0 : index
    %13 = vector.load %arg2[%c2, %c0_8, %c0_9] : memref<5x28x240xbf16, #tpu.memory_space<vmem>>, vector<1x28x240xbf16>
    %14 = vector.shape_cast %13 : vector<1x28x240xbf16> to vector<28x240xbf16>
    %cst_10 = arith.constant dense<0.000000e+00> : vector<384x240xf32>
    %15 = tpu.matmul %12, %14, %cst_10 {dimension_numbers = #tpu.dot_dimension_numbers<[1], [0], [0], [1], [0, 0, 1, 1], [], []>} : vector<384x28xbf16>, vector<28x240xbf16>, vector<384x240xf32> -> vector<384x240xf32>
    %16 = arith.addf %11, %15 : vector<384x240xf32>
    %17 = vector.extract_strided_slice %0 {offsets = [48, 0], sizes = [384, 28], strides = [1, 1]} : vector<448x28xbf16> to vector<384x28xbf16>
    %c3 = arith.constant 3 : index
    %c0_11 = arith.constant 0 : index
    %c0_12 = arith.constant 0 : index
    %18 = vector.load %arg2[%c3, %c0_11, %c0_12] : memref<5x28x240xbf16, #tpu.memory_space<vmem>>, vector<1x28x240xbf16>
    %19 = vector.shape_cast %18 : vector<1x28x240xbf16> to vector<28x240xbf16>
    %cst_13 = arith.constant dense<0.000000e+00> : vector<384x240xf32>
    %20 = tpu.matmul %17, %19, %cst_13 {dimension_numbers = #tpu.dot_dimension_numbers<[1], [0], [0], [1], [0, 0, 1, 1], [], []>} : vector<384x28xbf16>, vector<28x240xbf16>, vector<384x240xf32> -> vector<384x240xf32>
    %21 = arith.addf %16, %20 : vector<384x240xf32>
    %22 = vector.extract_strided_slice %0 {offsets = [64, 0], sizes = [384, 28], strides = [1, 1]} : vector<448x28xbf16> to vector<384x28xbf16>
    %c4 = arith.constant 4 : index
    %c0_14 = arith.constant 0 : index
    %c0_15 = arith.constant 0 : index
    %23 = vector.load %arg2[%c4, %c0_14, %c0_15] : memref<5x28x240xbf16, #tpu.memory_space<vmem>>, vector<1x28x240xbf16>
    %24 = vector.shape_cast %23 : vector<1x28x240xbf16> to vector<28x240xbf16>
    %cst_16 = arith.constant dense<0.000000e+00> : vector<384x240xf32>
    %25 = tpu.matmul %22, %24, %cst_16 {dimension_numbers = #tpu.dot_dimension_numbers<[1], [0], [0], [1], [0, 0, 1, 1], [], []>} : vector<384x28xbf16>, vector<28x240xbf16>, vector<384x240xf32> -> vector<384x240xf32>
    %26 = arith.addf %21, %25 : vector<384x240xf32>
    %27 = vector.shape_cast %26 : vector<384x240xf32> to vector<12x32x240xf32>
    %28 = vector.extract_strided_slice %27 {offsets = [0, 0, 0], sizes = [12, 16, 240], strides = [1, 1, 1]} : vector<12x32x240xf32> to vector<12x16x240xf32>
    %29 = vector.extract_strided_slice %27 {offsets = [0, 16, 0], sizes = [12, 16, 240], strides = [1, 1, 1]} : vector<12x32x240xf32> to vector<12x16x240xf32>
    %30 = arith.maximumf %28, %29 : vector<12x16x240xf32>
    %31 = vector.shape_cast %30 : vector<12x16x240xf32> to vector<192x240xf32>
    %c0_17 = arith.constant 0 : index
    %c0_18 = arith.constant 0 : index
    %32 = vector.load %arg3[%c0_17, %c0_18] : memref<1x240xf32, #tpu.memory_space<vmem>>, vector<1x240xf32>
    %33 = vector.broadcast %32 : vector<1x240xf32> to vector<192x240xf32>
    %34 = arith.addf %31, %33 : vector<192x240xf32>
    %35 = arith.truncf %34 : vector<192x240xf32> to vector<192x240xbf16>
    %c0_19 = arith.constant 0 : index
    %c0_20 = arith.constant 0 : index
    %36 = vector.load %arg4[%c0_19, %c0_20] : memref<240x120xbf16, #tpu.memory_space<vmem>>, vector<240x120xbf16>
    %cst_21 = arith.constant dense<0.000000e+00> : vector<192x120xf32>
    %37 = tpu.matmul %35, %36, %cst_21 {dimension_numbers = #tpu.dot_dimension_numbers<[1], [0], [0], [1], [0, 0, 1, 1], [], []>} : vector<192x240xbf16>, vector<240x120xbf16>, vector<192x120xf32> -> vector<192x120xf32>
    %c0_22 = arith.constant 0 : index
    %c0_23 = arith.constant 0 : index
    %38 = vector.load %arg5[%c0_22, %c0_23] : memref<240x120xbf16, #tpu.memory_space<vmem>>, vector<240x120xbf16>
    %cst_24 = arith.constant dense<0.000000e+00> : vector<192x120xf32>
    %39 = tpu.matmul %35, %38, %cst_24 {dimension_numbers = #tpu.dot_dimension_numbers<[1], [0], [0], [1], [0, 0, 1, 1], [], []>} : vector<192x240xbf16>, vector<240x120xbf16>, vector<192x120xf32> -> vector<192x120xf32>
    %40 = arith.maximumf %37, %39 : vector<192x120xf32>
    %cst_25 = arith.constant 0.000000e+00 : f32
    %41 = vector.broadcast %cst_25 : f32 to vector<192x120xf32>
    %42 = arith.maximumf %40, %41 : vector<192x120xf32>
    %43 = arith.truncf %42 : vector<192x120xf32> to vector<192x120xbf16>
    %cst_26 = arith.constant 0.000000e+00 : f32
    %44 = vector.broadcast %cst_26 : f32 to vector<128x160xf32>
    %45 = vector.extract_strided_slice %43 {offsets = [0, 0], sizes = [128, 120], strides = [1, 1]} : vector<192x120xbf16> to vector<128x120xbf16>
    %c0_27 = arith.constant 0 : index
    %c0_28 = arith.constant 0 : index
    %c0_29 = arith.constant 0 : index
    %46 = vector.load %arg6[%c0_27, %c0_28, %c0_29] : memref<5x120x160xbf16, #tpu.memory_space<vmem>>, vector<1x120x160xbf16>
    %47 = vector.shape_cast %46 : vector<1x120x160xbf16> to vector<120x160xbf16>
    %cst_30 = arith.constant dense<0.000000e+00> : vector<128x160xf32>
    %48 = tpu.matmul %45, %47, %cst_30 {dimension_numbers = #tpu.dot_dimension_numbers<[1], [0], [0], [1], [0, 0, 1, 1], [], []>} : vector<128x120xbf16>, vector<120x160xbf16>, vector<128x160xf32> -> vector<128x160xf32>
    %49 = arith.addf %44, %48 : vector<128x160xf32>
    %50 = vector.extract_strided_slice %43 {offsets = [16, 0], sizes = [128, 120], strides = [1, 1]} : vector<192x120xbf16> to vector<128x120xbf16>
    %c1_31 = arith.constant 1 : index
    %c0_32 = arith.constant 0 : index
    %c0_33 = arith.constant 0 : index
    %51 = vector.load %arg6[%c1_31, %c0_32, %c0_33] : memref<5x120x160xbf16, #tpu.memory_space<vmem>>, vector<1x120x160xbf16>
    %52 = vector.shape_cast %51 : vector<1x120x160xbf16> to vector<120x160xbf16>
    %cst_34 = arith.constant dense<0.000000e+00> : vector<128x160xf32>
    %53 = tpu.matmul %50, %52, %cst_34 {dimension_numbers = #tpu.dot_dimension_numbers<[1], [0], [0], [1], [0, 0, 1, 1], [], []>} : vector<128x120xbf16>, vector<120x160xbf16>, vector<128x160xf32> -> vector<128x160xf32>
    %54 = arith.addf %49, %53 : vector<128x160xf32>
    %55 = vector.extract_strided_slice %43 {offsets = [32, 0], sizes = [128, 120], strides = [1, 1]} : vector<192x120xbf16> to vector<128x120xbf16>
    %c2_35 = arith.constant 2 : index
    %c0_36 = arith.constant 0 : index
    %c0_37 = arith.constant 0 : index
    %56 = vector.load %arg6[%c2_35, %c0_36, %c0_37] : memref<5x120x160xbf16, #tpu.memory_space<vmem>>, vector<1x120x160xbf16>
    %57 = vector.shape_cast %56 : vector<1x120x160xbf16> to vector<120x160xbf16>
    %cst_38 = arith.constant dense<0.000000e+00> : vector<128x160xf32>
    %58 = tpu.matmul %55, %57, %cst_38 {dimension_numbers = #tpu.dot_dimension_numbers<[1], [0], [0], [1], [0, 0, 1, 1], [], []>} : vector<128x120xbf16>, vector<120x160xbf16>, vector<128x160xf32> -> vector<128x160xf32>
    %59 = arith.addf %54, %58 : vector<128x160xf32>
    %60 = vector.extract_strided_slice %43 {offsets = [48, 0], sizes = [128, 120], strides = [1, 1]} : vector<192x120xbf16> to vector<128x120xbf16>
    %c3_39 = arith.constant 3 : index
    %c0_40 = arith.constant 0 : index
    %c0_41 = arith.constant 0 : index
    %61 = vector.load %arg6[%c3_39, %c0_40, %c0_41] : memref<5x120x160xbf16, #tpu.memory_space<vmem>>, vector<1x120x160xbf16>
    %62 = vector.shape_cast %61 : vector<1x120x160xbf16> to vector<120x160xbf16>
    %cst_42 = arith.constant dense<0.000000e+00> : vector<128x160xf32>
    %63 = tpu.matmul %60, %62, %cst_42 {dimension_numbers = #tpu.dot_dimension_numbers<[1], [0], [0], [1], [0, 0, 1, 1], [], []>} : vector<128x120xbf16>, vector<120x160xbf16>, vector<128x160xf32> -> vector<128x160xf32>
    %64 = arith.addf %59, %63 : vector<128x160xf32>
    %65 = vector.extract_strided_slice %43 {offsets = [64, 0], sizes = [128, 120], strides = [1, 1]} : vector<192x120xbf16> to vector<128x120xbf16>
    %c4_43 = arith.constant 4 : index
    %c0_44 = arith.constant 0 : index
    %c0_45 = arith.constant 0 : index
    %66 = vector.load %arg6[%c4_43, %c0_44, %c0_45] : memref<5x120x160xbf16, #tpu.memory_space<vmem>>, vector<1x120x160xbf16>
    %67 = vector.shape_cast %66 : vector<1x120x160xbf16> to vector<120x160xbf16>
    %cst_46 = arith.constant dense<0.000000e+00> : vector<128x160xf32>
    %68 = tpu.matmul %65, %67, %cst_46 {dimension_numbers = #tpu.dot_dimension_numbers<[1], [0], [0], [1], [0, 0, 1, 1], [], []>} : vector<128x120xbf16>, vector<120x160xbf16>, vector<128x160xf32> -> vector<128x160xf32>
    %69 = arith.addf %64, %68 : vector<128x160xf32>
    %70 = vector.shape_cast %69 : vector<128x160xf32> to vector<4x32x160xf32>
    %71 = vector.extract_strided_slice %70 {offsets = [0, 0, 0], sizes = [4, 16, 160], strides = [1, 1, 1]} : vector<4x32x160xf32> to vector<4x16x160xf32>
    %72 = vector.extract_strided_slice %70 {offsets = [0, 16, 0], sizes = [4, 16, 160], strides = [1, 1, 1]} : vector<4x32x160xf32> to vector<4x16x160xf32>
    %73 = arith.maximumf %71, %72 : vector<4x16x160xf32>
    %74 = vector.shape_cast %73 : vector<4x16x160xf32> to vector<64x160xf32>
    %c0_47 = arith.constant 0 : index
    %c0_48 = arith.constant 0 : index
    %75 = vector.load %arg7[%c0_47, %c0_48] : memref<1x160xf32, #tpu.memory_space<vmem>>, vector<1x160xf32>
    %76 = vector.broadcast %75 : vector<1x160xf32> to vector<64x160xf32>
    %77 = arith.addf %74, %76 : vector<64x160xf32>
    %78 = arith.truncf %77 : vector<64x160xf32> to vector<64x160xbf16>
    %c0_49 = arith.constant 0 : index
    %c0_50 = arith.constant 0 : index
    %79 = vector.load %arg8[%c0_49, %c0_50] : memref<160x80xbf16, #tpu.memory_space<vmem>>, vector<160x80xbf16>
    %cst_51 = arith.constant dense<0.000000e+00> : vector<64x80xf32>
    %80 = tpu.matmul %78, %79, %cst_51 {dimension_numbers = #tpu.dot_dimension_numbers<[1], [0], [0], [1], [0, 0, 1, 1], [], []>} : vector<64x160xbf16>, vector<160x80xbf16>, vector<64x80xf32> -> vector<64x80xf32>
    %c0_52 = arith.constant 0 : index
    %c0_53 = arith.constant 0 : index
    %81 = vector.load %arg9[%c0_52, %c0_53] : memref<160x80xbf16, #tpu.memory_space<vmem>>, vector<160x80xbf16>
    %cst_54 = arith.constant dense<0.000000e+00> : vector<64x80xf32>
    %82 = tpu.matmul %78, %81, %cst_54 {dimension_numbers = #tpu.dot_dimension_numbers<[1], [0], [0], [1], [0, 0, 1, 1], [], []>} : vector<64x160xbf16>, vector<160x80xbf16>, vector<64x80xf32> -> vector<64x80xf32>
    %83 = arith.maximumf %80, %82 : vector<64x80xf32>
    %cst_55 = arith.constant 0.000000e+00 : f32
    %84 = vector.broadcast %cst_55 : f32 to vector<64x80xf32>
    %85 = arith.maximumf %83, %84 : vector<64x80xf32>
    %86 = arith.truncf %85 : vector<64x80xf32> to vector<64x80xbf16>
    %cst_56 = arith.constant 0.000000e+00 : f32
    %87 = vector.broadcast %cst_56 : f32 to vector<16x128xf32>
    %88 = vector.extract_strided_slice %86 {offsets = [0, 0], sizes = [16, 80], strides = [1, 1]} : vector<64x80xbf16> to vector<16x80xbf16>
    %c0_57 = arith.constant 0 : index
    %c0_58 = arith.constant 0 : index
    %c0_59 = arith.constant 0 : index
    %89 = vector.load %arg10[%c0_57, %c0_58, %c0_59] : memref<4x80x128xbf16, #tpu.memory_space<vmem>>, vector<1x80x128xbf16>
    %90 = vector.shape_cast %89 : vector<1x80x128xbf16> to vector<80x128xbf16>
    %cst_60 = arith.constant dense<0.000000e+00> : vector<16x128xf32>
    %91 = tpu.matmul %88, %90, %cst_60 {dimension_numbers = #tpu.dot_dimension_numbers<[1], [0], [0], [1], [0, 0, 1, 1], [], []>} : vector<16x80xbf16>, vector<80x128xbf16>, vector<16x128xf32> -> vector<16x128xf32>
    %92 = arith.addf %87, %91 : vector<16x128xf32>
    %93 = vector.extract_strided_slice %86 {offsets = [16, 0], sizes = [16, 80], strides = [1, 1]} : vector<64x80xbf16> to vector<16x80xbf16>
    %c1_61 = arith.constant 1 : index
    %c0_62 = arith.constant 0 : index
    %c0_63 = arith.constant 0 : index
    %94 = vector.load %arg10[%c1_61, %c0_62, %c0_63] : memref<4x80x128xbf16, #tpu.memory_space<vmem>>, vector<1x80x128xbf16>
    %95 = vector.shape_cast %94 : vector<1x80x128xbf16> to vector<80x128xbf16>
    %cst_64 = arith.constant dense<0.000000e+00> : vector<16x128xf32>
    %96 = tpu.matmul %93, %95, %cst_64 {dimension_numbers = #tpu.dot_dimension_numbers<[1], [0], [0], [1], [0, 0, 1, 1], [], []>} : vector<16x80xbf16>, vector<80x128xbf16>, vector<16x128xf32> -> vector<16x128xf32>
    %97 = arith.addf %92, %96 : vector<16x128xf32>
    %98 = vector.extract_strided_slice %86 {offsets = [32, 0], sizes = [16, 80], strides = [1, 1]} : vector<64x80xbf16> to vector<16x80xbf16>
    %c2_65 = arith.constant 2 : index
    %c0_66 = arith.constant 0 : index
    %c0_67 = arith.constant 0 : index
    %99 = vector.load %arg10[%c2_65, %c0_66, %c0_67] : memref<4x80x128xbf16, #tpu.memory_space<vmem>>, vector<1x80x128xbf16>
    %100 = vector.shape_cast %99 : vector<1x80x128xbf16> to vector<80x128xbf16>
    %cst_68 = arith.constant dense<0.000000e+00> : vector<16x128xf32>
    %101 = tpu.matmul %98, %100, %cst_68 {dimension_numbers = #tpu.dot_dimension_numbers<[1], [0], [0], [1], [0, 0, 1, 1], [], []>} : vector<16x80xbf16>, vector<80x128xbf16>, vector<16x128xf32> -> vector<16x128xf32>
    %102 = arith.addf %97, %101 : vector<16x128xf32>
    %103 = vector.extract_strided_slice %86 {offsets = [48, 0], sizes = [16, 80], strides = [1, 1]} : vector<64x80xbf16> to vector<16x80xbf16>
    %c3_69 = arith.constant 3 : index
    %c0_70 = arith.constant 0 : index
    %c0_71 = arith.constant 0 : index
    %104 = vector.load %arg10[%c3_69, %c0_70, %c0_71] : memref<4x80x128xbf16, #tpu.memory_space<vmem>>, vector<1x80x128xbf16>
    %105 = vector.shape_cast %104 : vector<1x80x128xbf16> to vector<80x128xbf16>
    %cst_72 = arith.constant dense<0.000000e+00> : vector<16x128xf32>
    %106 = tpu.matmul %103, %105, %cst_72 {dimension_numbers = #tpu.dot_dimension_numbers<[1], [0], [0], [1], [0, 0, 1, 1], [], []>} : vector<16x80xbf16>, vector<80x128xbf16>, vector<16x128xf32> -> vector<16x128xf32>
    %107 = arith.addf %102, %106 : vector<16x128xf32>
    %c0_73 = arith.constant 0 : index
    %c0_74 = arith.constant 0 : index
    %108 = vector.load %arg11[%c0_73, %c0_74] : memref<1x128xf32, #tpu.memory_space<vmem>>, vector<1x128xf32>
    %109 = vector.broadcast %108 : vector<1x128xf32> to vector<16x128xf32>
    %110 = arith.addf %107, %109 : vector<16x128xf32>
    %cst_75 = arith.constant 0.000000e+00 : f32
    %111 = vector.broadcast %cst_75 : f32 to vector<16x128xf32>
    %112 = arith.maximumf %110, %111 : vector<16x128xf32>
    %113 = arith.truncf %112 : vector<16x128xf32> to vector<16x128xbf16>
    %c0_76 = arith.constant 0 : index
    %c0_77 = arith.constant 0 : index
    %114 = vector.load %arg12[%c0_76, %c0_77] : memref<128x128xbf16, #tpu.memory_space<vmem>>, vector<128x128xbf16>
    %cst_78 = arith.constant dense<0.000000e+00> : vector<16x128xf32>
    %115 = tpu.matmul %113, %114, %cst_78 {dimension_numbers = #tpu.dot_dimension_numbers<[1], [0], [0], [1], [0, 0, 1, 1], [], []>} : vector<16x128xbf16>, vector<128x128xbf16>, vector<16x128xf32> -> vector<16x128xf32>
    %c0_79 = arith.constant 0 : index
    %c0_80 = arith.constant 0 : index
    %116 = vector.load %arg13[%c0_79, %c0_80] : memref<1x128xf32, #tpu.memory_space<vmem>>, vector<1x128xf32>
    %117 = vector.broadcast %116 : vector<1x128xf32> to vector<16x128xf32>
    %118 = arith.addf %115, %117 : vector<16x128xf32>
    %c0_81 = arith.constant 0 : index
    %c0_82 = arith.constant 0 : index
    %119 = vector.load %arg14[%c0_81, %c0_82] : memref<1x128xf32, #tpu.memory_space<vmem>>, vector<1x128xf32>
    %120 = vector.broadcast %119 : vector<1x128xf32> to vector<16x128xf32>
    %121 = arith.addf %118, %120 : vector<16x128xf32>
    %cst_83 = arith.constant dense<0xFF800000> : vector<16xf32>
    %122 = vector.multi_reduction <maximumf>, %121, %cst_83 [1] : vector<16x128xf32> to vector<16xf32>
    %123 = vector.shape_cast %122 : vector<16xf32> to vector<16x1xf32>
    %124 = vector.broadcast %123 : vector<16x1xf32> to vector<16x128xf32>
    %125 = arith.subf %121, %124 : vector<16x128xf32>
    %126 = math.exp %125 : vector<16x128xf32>
    %cst_84 = arith.constant dense<0.000000e+00> : vector<16xf32>
    %127 = vector.multi_reduction <add>, %126, %cst_84 [1] : vector<16x128xf32> to vector<16xf32>
    %128 = vector.shape_cast %127 : vector<16xf32> to vector<16x1xf32>
    %129 = math.log %128 : vector<16x1xf32>
    %130 = vector.broadcast %129 : vector<16x1xf32> to vector<16x128xf32>
    %131 = arith.subf %125, %130 : vector<16x128xf32>
    %c0_85 = arith.constant 0 : index
    %c0_86 = arith.constant 0 : index
    %132 = vector.load %arg15[%c0_85, %c0_86] : memref<16x128xf32, #tpu.memory_space<vmem>>, vector<16x128xf32>
    tpu.vector_store %arg15[%c0_85, %c0_86], %131 {strides = array<i32>} : memref<16x128xf32, #tpu.memory_space<vmem>>, vector<16x128xf32>,
    return
  }
  func.func @transform_0(%arg0: i32) -> (i32, i32) {
    %c0_i32 = arith.constant 0 : i32
    %c0_i32_0 = arith.constant 0 : i32
    return %arg0, %c0_i32 : i32, i32
  }
  func.func @transform_1(%arg0: i32) -> (i32, i32, i32) {
    %c0_i32 = arith.constant 0 : i32
    %c0_i32_0 = arith.constant 0 : i32
    %c0_i32_1 = arith.constant 0 : i32
    %c0_i32_2 = arith.constant 0 : i32
    return %c0_i32, %c0_i32_0, %c0_i32_1 : i32, i32, i32
  }
  func.func @transform_2(%arg0: i32) -> (i32, i32) {
    %c0_i32 = arith.constant 0 : i32
    %c0_i32_0 = arith.constant 0 : i32
    %c0_i32_1 = arith.constant 0 : i32
    return %c0_i32, %c0_i32_0 : i32, i32
  }
  func.func @transform_3(%arg0: i32) -> (i32, i32) {
    %c0_i32 = arith.constant 0 : i32
    %c0_i32_0 = arith.constant 0 : i32
    %c0_i32_1 = arith.constant 0 : i32
    return %c0_i32, %c0_i32_0 : i32, i32
  }
  func.func @transform_4(%arg0: i32) -> (i32, i32) {
    %c0_i32 = arith.constant 0 : i32
    %c0_i32_0 = arith.constant 0 : i32
    %c0_i32_1 = arith.constant 0 : i32
    return %c0_i32, %c0_i32_0 : i32, i32
  }
  func.func @transform_5(%arg0: i32) -> (i32, i32, i32) {
    %c0_i32 = arith.constant 0 : i32
    %c0_i32_0 = arith.constant 0 : i32
    %c0_i32_1 = arith.constant 0 : i32
    %c0_i32_2 = arith.constant 0 : i32
    return %c0_i32, %c0_i32_0, %c0_i32_1 : i32, i32, i32
  }
  func.func @transform_6(%arg0: i32) -> (i32, i32) {
    %c0_i32 = arith.constant 0 : i32
    %c0_i32_0 = arith.constant 0 : i32
    %c0_i32_1 = arith.constant 0 : i32
    return %c0_i32, %c0_i32_0 : i32, i32
  }
  func.func @transform_7(%arg0: i32) -> (i32, i32) {
    %c0_i32 = arith.constant 0 : i32
    %c0_i32_0 = arith.constant 0 : i32
    %c0_i32_1 = arith.constant 0 : i32
    return %c0_i32, %c0_i32_0 : i32, i32
  }
  func.func @transform_8(%arg0: i32) -> (i32, i32) {
    %c0_i32 = arith.constant 0 : i32
    %c0_i32_0 = arith.constant 0 : i32
    %c0_i32_1 = arith.constant 0 : i32
    return %c0_i32, %c0_i32_0 : i32, i32
  }
  func.func @transform_9(%arg0: i32) -> (i32, i32, i32) {
    %c0_i32 = arith.constant 0 : i32
    %c0_i32_0 = arith.constant 0 : i32
    %c0_i32_1 = arith.constant 0 : i32
    %c0_i32_2 = arith.constant 0 : i32
    return %c0_i32, %c0_i32_0, %c0_i32_1 : i32, i32, i32
  }
  func.func @transform_10(%arg0: i32) -> (i32, i32) {
    %c0_i32 = arith.constant 0 : i32
    %c0_i32_0 = arith.constant 0 : i32
    %c0_i32_1 = arith.constant 0 : i32
    return %c0_i32, %c0_i32_0 : i32, i32
  }
  func.func @transform_11(%arg0: i32) -> (i32, i32) {
    %c0_i32 = arith.constant 0 : i32
    %c0_i32_0 = arith.constant 0 : i32
    %c0_i32_1 = arith.constant 0 : i32
    return %c0_i32, %c0_i32_0 : i32, i32
  }
  func.func @transform_12(%arg0: i32) -> (i32, i32) {
    %c0_i32 = arith.constant 0 : i32
    %c0_i32_0 = arith.constant 0 : i32
    %c0_i32_1 = arith.constant 0 : i32
    return %c0_i32, %c0_i32_0 : i32, i32
  }
  func.func @transform_13(%arg0: i32) -> (i32, i32) {
    %c0_i32 = arith.constant 0 : i32
    %c0_i32_0 = arith.constant 0 : i32
    %c0_i32_1 = arith.constant 0 : i32
    return %c0_i32, %c0_i32_0 : i32, i32
  }
  func.func @transform_14(%arg0: i32) -> (i32, i32) {
    %c0_i32 = arith.constant 0 : i32
    %c0_i32_0 = arith.constant 0 : i32
    return %arg0, %c0_i32 : i32, i32
  }
}

</mosaic_0001>

<llo_original>
// kernel: lenet_forward.1
$region0: #{lenet_forward.1}
  #allocation0 [shape = 'u32[]', space=smem, size = 0x4, offset = 0x4, fixed_abs, tag = 'smem constant byte address 0x4 - core index']
  #allocation1 [shape = 'u32[144,128]{1,0:T(1,128)}', space=vmem, size = 0x12000, scoped, tag = 'internal scratch']
  %s0 = inlined_call_operand.vmem [shape: bf16[448,28], index: 0, kind: input, shape index: {}]
  %s1 = inlined_call_operand.vmem [shape: bf16[5,28,240], index: 1, kind: input, shape index: {}]
  %s2 = inlined_call_operand.vmem [shape: f32[1,240], index: 2, kind: input, shape index: {}]
  %s3 = inlined_call_operand.vmem [shape: bf16[240,120], index: 3, kind: input, shape index: {}]
  %s4 = inlined_call_operand.vmem [shape: bf16[240,120], index: 4, kind: input, shape index: {}]
  %s5 = inlined_call_operand.vmem [shape: bf16[5,120,160], index: 5, kind: input, shape index: {}]
  %s6 = inlined_call_operand.vmem [shape: f32[1,160], index: 6, kind: input, shape index: {}]
  %s7 = inlined_call_operand.vmem [shape: bf16[160,80], index: 7, kind: input, shape index: {}]
  %s8 = inlined_call_operand.vmem [shape: bf16[160,80], index: 8, kind: input, shape index: {}]
  %s9 = inlined_call_operand.vmem [shape: bf16[4,80,128], index: 9, kind: input, shape index: {}]
  %s10 = inlined_call_operand.vmem [shape: f32[1,128], index: 10, kind: input, shape index: {}]
  %s11 = inlined_call_operand.vmem [shape: bf16[128,128], index: 11, kind: input, shape index: {}]
  %s12 = inlined_call_operand.vmem [shape: f32[1,128], index: 12, kind: input, shape index: {}]
  %s13 = inlined_call_operand.vmem [shape: f32[1,128], index: 13, kind: input, shape index: {}]
  %s14 = inlined_call_operand.vmem [shape: f32[16,128], index: 14, kind: output, shape index: {}]
  %s15 = sld [smem:[#allocation0]]
  $region66: #{lenet_forward.1} parent=0
    _
  %s17 = ssub.s32 1, %s15
  %s18 = scalar_select 0, %s17, %s15
  // Predicated region
  $region2: #{lenet_forward.1} parent=0 // pred_check
    _
  $region3: #{lenet_forward.1} parent=0 // pred_check_branch
    %20 = sbr.rel (0) target = $region5
  $region4: #{lenet_forward.1} parent=0 // pred_region
    _
  $region5: #{lenet_forward.1} parent=0 // pred_fallthru
    _
  // Predicated region
  $region6: #{lenet_forward.1} parent=0 // pred_check
    _
  $region7: #{lenet_forward.1} parent=0 // pred_check_branch
    %22 = sbr.rel (0) target = $region9
  $region8: #{lenet_forward.1} parent=0 // pred_region
    _
  $region9: #{lenet_forward.1} parent=0 // pred_fallthru
    _
  // Predicated region
  $region10: #{lenet_forward.1} parent=0 // pred_check
    _
  $region11: #{lenet_forward.1} parent=0 // pred_check_branch
    %24 = sbr.rel (0) target = $region13
  $region12: #{lenet_forward.1} parent=0 // pred_region
    _
  $region13: #{lenet_forward.1} parent=0 // pred_fallthru
    _
  // Predicated region
  $region14: #{lenet_forward.1} parent=0 // pred_check
    _
  $region15: #{lenet_forward.1} parent=0 // pred_check_branch
    %26 = sbr.rel (0) target = $region17
  $region16: #{lenet_forward.1} parent=0 // pred_region
    _
  $region17: #{lenet_forward.1} parent=0 // pred_fallthru
    _
  // Predicated region
  $region18: #{lenet_forward.1} parent=0 // pred_check
    _
  $region19: #{lenet_forward.1} parent=0 // pred_check_branch
    %28 = sbr.rel (0) target = $region21
  $region20: #{lenet_forward.1} parent=0 // pred_region
    _
  $region21: #{lenet_forward.1} parent=0 // pred_fallthru
    _
  // Predicated region
  $region22: #{lenet_forward.1} parent=0 // pred_check
    _
  $region23: #{lenet_forward.1} parent=0 // pred_check_branch
    %30 = sbr.rel (0) target = $region25
  $region24: #{lenet_forward.1} parent=0 // pred_region
    _
  $region25: #{lenet_forward.1} parent=0 // pred_fallthru
    _
  // Predicated region
  $region26: #{lenet_forward.1} parent=0 // pred_check
    _
  $region27: #{lenet_forward.1} parent=0 // pred_check_branch
    %32 = sbr.rel (0) target = $region29
  $region28: #{lenet_forward.1} parent=0 // pred_region
    _
  $region29: #{lenet_forward.1} parent=0 // pred_fallthru
    _
  // Predicated region
  $region30: #{lenet_forward.1} parent=0 // pred_check
    _
  $region31: #{lenet_forward.1} parent=0 // pred_check_branch
    %34 = sbr.rel (0) target = $region33
  $region32: #{lenet_forward.1} parent=0 // pred_region
    _
  $region33: #{lenet_forward.1} parent=0 // pred_fallthru
    _
  // Predicated region
  $region34: #{lenet_forward.1} parent=0 // pred_check
    _
  $region35: #{lenet_forward.1} parent=0 // pred_check_branch
    %36 = sbr.rel (0) target = $region37
  $region36: #{lenet_forward.1} parent=0 // pred_region
    _
  $region37: #{lenet_forward.1} parent=0 // pred_fallthru
    _
  // Predicated region
  $region38: #{lenet_forward.1} parent=0 // pred_check
    _
  $region39: #{lenet_forward.1} parent=0 // pred_check_branch
    %38 = sbr.rel (0) target = $region41
  $region40: #{lenet_forward.1} parent=0 // pred_region
    _
  $region41: #{lenet_forward.1} parent=0 // pred_fallthru
    _
  // Predicated region
  $region42: #{lenet_forward.1} parent=0 // pred_check
    _
  $region43: #{lenet_forward.1} parent=0 // pred_check_branch
    %40 = sbr.rel (0) target = $region45
  $region44: #{lenet_forward.1} parent=0 // pred_region
    _
  $region45: #{lenet_forward.1} parent=0 // pred_fallthru
    _
  // Predicated region
  $region46: #{lenet_forward.1} parent=0 // pred_check
    _
  $region47: #{lenet_forward.1} parent=0 // pred_check_branch
    %42 = sbr.rel (0) target = $region49
  $region48: #{lenet_forward.1} parent=0 // pred_region
    _
  $region49: #{lenet_forward.1} parent=0 // pred_fallthru
    _
  // Predicated region
  $region50: #{lenet_forward.1} parent=0 // pred_check
    _
  $region51: #{lenet_forward.1} parent=0 // pred_check_branch
    %44 = sbr.rel (0) target = $region53
  $region52: #{lenet_forward.1} parent=0 // pred_region
    _
  $region53: #{lenet_forward.1} parent=0 // pred_fallthru
    _
  // Predicated region
  $region54: #{lenet_forward.1} parent=0 // pred_check
    _
  $region55: #{lenet_forward.1} parent=0 // pred_check_branch
    %46 = sbr.rel (0) target = $region57
  $region56: #{lenet_forward.1} parent=0 // pred_region
    _
  $region57: #{lenet_forward.1} parent=0 // pred_fallthru
    _
  %v48 = vld [vmem:[%s0] sm:$0xf]
  %v49 = vld [vmem:[%s0 + $0x4] sm:$0xf]
  %v50 = vld [vmem:[%s0 + $0x8] sm:$0xf]
  %v51 = vld [vmem:[%s0 + $0xc] sm:$0xf]
  %v52 = vld [vmem:[%s0 + $0x10] sm:$0xf]
  %v53 = vld [vmem:[%s0 + $0x14] sm:$0xf]
  %v54 = vld [vmem:[%s0 + $0x18] sm:$0xf]
  %v55 = vld [vmem:[%s0 + $0x1c] sm:$0xf]
  %v56 = vld [vmem:[%s0 + $0x20] sm:$0xf]
  %v57 = vld [vmem:[%s0 + $0x24] sm:$0xf]
  %v58 = vld [vmem:[%s0 + $0x28] sm:$0xf]
  %v59 = vld [vmem:[%s0 + $0x2c] sm:$0xf]
  %v60 = vld [vmem:[%s0 + $0x30] sm:$0xf]
  %v61 = vld [vmem:[%s0 + $0x34] sm:$0xf]
  %v62 = vld [vmem:[%s0 + $0x38] sm:$0xf]
  %v63 = vld [vmem:[%s0 + $0x3c] sm:$0xf]
  %v64 = vld [vmem:[%s0 + $0x40] sm:$0xf]
  %v65 = vld [vmem:[%s0 + $0x44] sm:$0xf]
  %v66 = vld [vmem:[%s0 + $0x48] sm:$0xf]
  %v67 = vld [vmem:[%s0 + $0x4c] sm:$0xf]
  %v68 = vld [vmem:[%s0 + $0x50] sm:$0xf]
  %v69 = vld [vmem:[%s0 + $0x54] sm:$0xf]
  %v70 = vld [vmem:[%s0 + $0x58] sm:$0xf]
  %v71 = vld [vmem:[%s0 + $0x5c] sm:$0xf]
  %v72 = vld [vmem:[%s0 + $0x60] sm:$0xf]
  %v73 = vld [vmem:[%s0 + $0x64] sm:$0xf]
  %v74 = vld [vmem:[%s0 + $0x68] sm:$0xf]
  %v75 = vld [vmem:[%s0 + $0x6c] sm:$0xf]
  %v76 = vld [vmem:[%s0 + $0x70] sm:$0xf]
  %v77 = vld [vmem:[%s0 + $0x74] sm:$0xf]
  %v78 = vld [vmem:[%s0 + $0x78] sm:$0xf]
  %v79 = vld [vmem:[%s0 + $0x7c] sm:$0xf]
  %v80 = vld [vmem:[%s0 + $0x80] sm:$0xf]
  %v81 = vld [vmem:[%s0 + $0x84] sm:$0xf]
  %v82 = vld [vmem:[%s0 + $0x88] sm:$0xf]
  %v83 = vld [vmem:[%s0 + $0x8c] sm:$0xf]
  %v84 = vld [vmem:[%s0 + $0x90] sm:$0xf]
  %v85 = vld [vmem:[%s0 + $0x94] sm:$0xf]
  %v86 = vld [vmem:[%s0 + $0x98] sm:$0xf]
  %v87 = vld [vmem:[%s0 + $0x9c] sm:$0xf]
  %v88 = vld [vmem:[%s0 + $0xa0] sm:$0xf]
  %v89 = vld [vmem:[%s0 + $0xa4] sm:$0xf]
  %v90 = vld [vmem:[%s0 + $0xa8] sm:$0xf]
  %v91 = vld [vmem:[%s0 + $0xac] sm:$0xf]
  %v92 = vld [vmem:[%s0 + $0xb0] sm:$0xf]
  %v93 = vld [vmem:[%s0 + $0xb4] sm:$0xf]
  %v94 = vld [vmem:[%s0 + $0xb8] sm:$0xf]
  %v95 = vld [vmem:[%s0 + $0xbc] sm:$0xf]
  %v96 = vld [vmem:[%s0 + $0xc0] sm:$0xf]
  %v97 = vld [vmem:[%s0 + $0xc4] sm:$0xf]
  %v98 = vld [vmem:[%s0 + $0xc8] sm:$0xf]
  %v99 = vld [vmem:[%s0 + $0xcc] sm:$0xf]
  %v100 = vld [vmem:[%s0 + $0xd0] sm:$0xf]
  %v101 = vld [vmem:[%s0 + $0xd4] sm:$0xf]
  %v102 = vld [vmem:[%s0 + $0xd8] sm:$0xf]
  %v103 = vld [vmem:[%s0 + $0xdc] sm:$0xf]
  %v104 = vld [vmem:[%s1] sm:$0xff]
  %v105 = vld [vmem:[%s1 + $0x8] sm:$0xff]
  %v106 = vld [vmem:[%s1 + $0x10] sm:$0xff]
  %v107 = vld [vmem:[%s1 + $0x18] sm:$0x33]
  %s108 = scalar_lea.vmem %s1, 32
  %v109 = vld [vmem:[%s108] sm:$0xff]
  %v110 = vld [vmem:[%s108 + $0x8] sm:$0xff]
  %v111 = vld [vmem:[%s108 + $0x10] sm:$0xff]
  %v112 = vld [vmem:[%s108 + $0x18] sm:$0x33]
  %v161 = vunpack.c.l.b16 %v50
  %v162 = vunpack.c.l.b16 %v51
  %v163 = vunpack.c.l.b16 %v52
  %v164 = vunpack.c.l.b16 %v53
  %v165 = vunpack.c.l.b16 %v54
  %v166 = vunpack.c.l.b16 %v55
  %v167 = vunpack.c.l.b16 %v56
  %v168 = vunpack.c.l.b16 %v57
  %v169 = vunpack.c.l.b16 %v58
  %v170 = vunpack.c.l.b16 %v59
  %v171 = vunpack.c.l.b16 %v60
  %v172 = vunpack.c.l.b16 %v61
  %v173 = vunpack.c.l.b16 %v62
  %v174 = vunpack.c.l.b16 %v63
  %v175 = vunpack.c.l.b16 %v64
  %v176 = vunpack.c.l.b16 %v65
  %v177 = vunpack.c.l.b16 %v66
  %v178 = vunpack.c.l.b16 %v67
  %v179 = vunpack.c.l.b16 %v68
  %v180 = vunpack.c.l.b16 %v69
  %v181 = vunpack.c.l.b16 %v70
  %v182 = vunpack.c.l.b16 %v71
  %v183 = vunpack.c.l.b16 %v72
  %v184 = vunpack.c.l.b16 %v73
  %v185 = vunpack.c.l.b16 %v74
  %v186 = vunpack.c.l.b16 %v75
  %v187 = vunpack.c.l.b16 %v76
  %v188 = vunpack.c.l.b16 %v77
  %v189 = vunpack.c.l.b16 %v78
  %v190 = vunpack.c.l.b16 %v79
  %v191 = vunpack.c.l.b16 %v80
  %v192 = vunpack.c.l.b16 %v81
  %v193 = vunpack.c.l.b16 %v82
  %v194 = vunpack.c.l.b16 %v83
  %v195 = vunpack.c.l.b16 %v84
  %v196 = vunpack.c.l.b16 %v85
  %v197 = vunpack.c.l.b16 %v86
  %v198 = vunpack.c.l.b16 %v87
  %v199 = vunpack.c.l.b16 %v88
  %v200 = vunpack.c.l.b16 %v89
  %v201 = vunpack.c.l.b16 %v90
  %v202 = vunpack.c.l.b16 %v91
  %v203 = vunpack.c.l.b16 %v92
  %v204 = vunpack.c.l.b16 %v93
  %v205 = vunpack.c.l.b16 %v94
  %v206 = vunpack.c.l.b16 %v95
  %v207 = vunpack.c.l.b16 %v96
  %v208 = vunpack.c.l.b16 %v97
  %v209 = vpack.c.b16 %v162, %v161
  %v210 = vpack.c.b16 %v164, %v163
  %v211 = vpack.c.b16 %v166, %v165
  %v212 = vpack.c.b16 %v168, %v167
  %v213 = vpack.c.b16 %v170, %v169
  %v214 = vpack.c.b16 %v172, %v171
  %v215 = vpack.c.b16 %v174, %v173
  %v216 = vpack.c.b16 %v176, %v175
  %v217 = vpack.c.b16 %v178, %v177
  %v218 = vpack.c.b16 %v180, %v179
  %v219 = vpack.c.b16 %v182, %v181
  %v220 = vpack.c.b16 %v184, %v183
  %v221 = vpack.c.b16 %v186, %v185
  %v222 = vpack.c.b16 %v188, %v187
  %v223 = vpack.c.b16 %v190, %v189
  %v224 = vpack.c.b16 %v192, %v191
  %v225 = vpack.c.b16 %v194, %v193
  %v226 = vpack.c.b16 %v196, %v195
  %v227 = vpack.c.b16 %v198, %v197
  %v228 = vpack.c.b16 %v200, %v199
  %v229 = vpack.c.b16 %v202, %v201
  %v230 = vpack.c.b16 %v204, %v203
  %v231 = vpack.c.b16 %v206, %v205
  %v232 = vpack.c.b16 %v208, %v207
  %v237 = vunpack.c.l.b16 %v109
  %v238 = vunpack.c.h.b16 %v109
  %v239 = vunpack.c.l.b16 %v110
  %v240 = vunpack.c.h.b16 %v110
  %v241 = vunpack.c.l.b16 %v111
  %v242 = vunpack.c.h.b16 %v111
  %v243 = vunpack.c.l.b16 %v112
  %v244 = vunpack.c.h.b16 %v112
  %v245 = vpack.c.b16 %v239, %v237
  %v246 = vpack.c.b16 %v240, %v238
  %v247 = vpack.c.b16 %v243, %v241
  %v248 = vpack.c.b16 %v244, %v242
  %vm251 = vcmask 228352
  %v253 = vsel %vm251, %v209, 0
  %v256 = vsel %vm251, %v210, 0
  %v259 = vsel %vm251, %v211, 0
  %v262 = vsel %vm251, %v212, 0
  %v265 = vsel %vm251, %v213, 0
  %v268 = vsel %vm251, %v214, 0
  %v271 = vsel %vm251, %v215, 0
  %v274 = vsel %vm251, %v216, 0
  %v277 = vsel %vm251, %v217, 0
  %v280 = vsel %vm251, %v218, 0
  %v283 = vsel %vm251, %v219, 0
  %v286 = vsel %vm251, %v220, 0
  %v289 = vsel %vm251, %v221, 0
  %v292 = vsel %vm251, %v222, 0
  %v295 = vsel %vm251, %v223, 0
  %v298 = vsel %vm251, %v224, 0
  %v301 = vsel %vm251, %v225, 0
  %v304 = vsel %vm251, %v226, 0
  %v307 = vsel %vm251, %v227, 0
  %v310 = vsel %vm251, %v228, 0
  %v313 = vsel %vm251, %v229, 0
  %v316 = vsel %vm251, %v230, 0
  %v319 = vsel %vm251, %v231, 0
  %v322 = vsel %vm251, %v232, 0
  %vm324 = vcmask 1045504
  %v326 = vsel %vm324, %v247, 0
  %v329 = vsel %vm324, %v248, 0
  %331 = vmatprep.subr.bf16.mxu0 %v246
  %332 = vmatpush1.bf16.msra.mxu0 %v245
  %333 = vmatprep.subr.bf16.mxu0 %v329
  %334 = vmatpush1.bf16.msra.mxu0 %v326
  %335 = vmatprep.subr.bf16.mxu0 0
  %336 = vmatpush1.bf16.msra.mxu0 0
  %337 = vmatprep.subr.bf16.mxu0 0
  %338 = vmatpush1.bf16.msra.mxu0 0
  %339 = vmatprep.subr.bf16.mxu0 0
  %340 = vmatpush1.bf16.msra.mxu0 0
  %341 = vmatprep.subr.bf16.mxu0 0
  %342 = vmatpush1.bf16.msra.mxu0 0
  %343 = vmatprep.subr.bf16.mxu0 0
  %344 = vmatpush1.bf16.msra.mxu0 0
  %345 = vmatprep.subr.bf16.mxu0 0
  %346 = vmatpush1.bf16.msra.mxu0 0
  %347 = vmatprep.subr.bf16.mxu0 0
  %348 = vmatpush1.bf16.msra.mxu0 0
  %349 = vmatprep.subr.bf16.mxu0 0
  %350 = vmatpush1.bf16.msra.mxu0 0
  %351 = vmatprep.subr.bf16.mxu0 0
  %352 = vmatpush1.bf16.msra.mxu0 0
  %353 = vmatprep.subr.bf16.mxu0 0
  %354 = vmatpush1.bf16.msra.mxu0 0
  %355 = vmatprep.subr.bf16.mxu0 0
  %356 = vmatpush1.bf16.msra.mxu0 0
  %357 = vmatprep.subr.bf16.mxu0 0
  %358 = vmatpush1.bf16.msra.mxu0 0
  %359 = vmatprep.subr.bf16.mxu0 0
  %360 = vmatpush1.bf16.msra.mxu0 0
  %361 = vmatprep.subr.bf16.mxu0 0
  %362 = vmatpush1.bf16.msra.mxu0 0
  %363 = vmatprep.mubr.bf16.mxu0 0
  %364 = vmatmul.mubr.bf16.gmra.mrb[0].mxu0 %v253
  %v365 = vpop.f32.mrb[0].mxu0
  %v366 = vadd.f32 0.0, %v365
  %v367 = vpop.f32.mrb[0].mxu0
  %v368 = vadd.f32 0.0, %v367
  %v369 = vpop.f32.mrb[0].mxu0
  %v370 = vadd.f32 0.0, %v369
  %v371 = vpop.f32.mrb[0].mxu0
  %v372 = vadd.f32 0.0, %v371
  %373 = vmatprep.mubr.bf16.mxu0 0
  %374 = vmatmul.mubr.bf16.gmra.mrb[0].mxu0 %v256
  %v375 = vpop.f32.mrb[0].mxu0
  %v376 = vadd.f32 0.0, %v375
  %v377 = vpop.f32.mrb[0].mxu0
  %v378 = vadd.f32 0.0, %v377
  %v379 = vpop.f32.mrb[0].mxu0
  %v380 = vadd.f32 0.0, %v379
  %v381 = vpop.f32.mrb[0].mxu0
  %v382 = vadd.f32 0.0, %v381
  %383 = vmatprep.mubr.bf16.mxu0 0
  %384 = vmatmul.mubr.bf16.gmra.mrb[0].mxu0 %v259
  %v385 = vpop.f32.mrb[0].mxu0
  %v386 = vadd.f32 0.0, %v385
  %v387 = vpop.f32.mrb[0].mxu0
  %v388 = vadd.f32 0.0, %v387
  %v389 = vpop.f32.mrb[0].mxu0
  %v390 = vadd.f32 0.0, %v389
  %v391 = vpop.f32.mrb[0].mxu0
  %v392 = vadd.f32 0.0, %v391
  %393 = vmatprep.mubr.bf16.mxu0 0
  %394 = vmatmul.mubr.bf16.gmra.mrb[0].mxu0 %v262
  %v395 = vpop.f32.mrb[0].mxu0
  %v396 = vadd.f32 0.0, %v395
  %v397 = vpop.f32.mrb[0].mxu0
  %v398 = vadd.f32 0.0, %v397
  %v399 = vpop.f32.mrb[0].mxu0
  %v400 = vadd.f32 0.0, %v399
  %v401 = vpop.f32.mrb[0].mxu0
  %v402 = vadd.f32 0.0, %v401
  %403 = vmatprep.mubr.bf16.mxu0 0
  %404 = vmatmul.mubr.bf16.gmra.mrb[0].mxu0 %v265
  %v405 = vpop.f32.mrb[0].mxu0
  %v406 = vadd.f32 0.0, %v405
  %v407 = vpop.f32.mrb[0].mxu0
  %v408 = vadd.f32 0.0, %v407
  %v409 = vpop.f32.mrb[0].mxu0
  %v410 = vadd.f32 0.0, %v409
  %v411 = vpop.f32.mrb[0].mxu0
  %v412 = vadd.f32 0.0, %v411
  %413 = vmatprep.mubr.bf16.mxu0 0
  %414 = vmatmul.mubr.bf16.gmra.mrb[0].mxu0 %v268
  %v415 = vpop.f32.mrb[0].mxu0
  %v416 = vadd.f32 0.0, %v415
  %v417 = vpop.f32.mrb[0].mxu0
  %v418 = vadd.f32 0.0, %v417
  %v419 = vpop.f32.mrb[0].mxu0
  %v420 = vadd.f32 0.0, %v419
  %v421 = vpop.f32.mrb[0].mxu0
  %v422 = vadd.f32 0.0, %v421
  %423 = vmatprep.mubr.bf16.mxu0 0
  %424 = vmatmul.mubr.bf16.gmra.mrb[0].mxu0 %v271
  %v425 = vpop.f32.mrb[0].mxu0
  %v426 = vadd.f32 0.0, %v425
  %v427 = vpop.f32.mrb[0].mxu0
  %v428 = vadd.f32 0.0, %v427
  %v429 = vpop.f32.mrb[0].mxu0
  %v430 = vadd.f32 0.0, %v429
  %v431 = vpop.f32.mrb[0].mxu0
  %v432 = vadd.f32 0.0, %v431
  %433 = vmatprep.mubr.bf16.mxu0 0
  %434 = vmatmul.mubr.bf16.gmra.mrb[0].mxu0 %v274
  %v435 = vpop.f32.mrb[0].mxu0
  %v436 = vadd.f32 0.0, %v435
  %v437 = vpop.f32.mrb[0].mxu0
  %v438 = vadd.f32 0.0, %v437
  %v439 = vpop.f32.mrb[0].mxu0
  %v440 = vadd.f32 0.0, %v439
  %v441 = vpop.f32.mrb[0].mxu0
  %v442 = vadd.f32 0.0, %v441
  %443 = vmatprep.mubr.bf16.mxu0 0
  %444 = vmatmul.mubr.bf16.gmra.mrb[0].mxu0 %v277
  %v445 = vpop.f32.mrb[0].mxu0
  %v446 = vadd.f32 0.0, %v445
  %v447 = vpop.f32.mrb[0].mxu0
  %v448 = vadd.f32 0.0, %v447
  %v449 = vpop.f32.mrb[0].mxu0
  %v450 = vadd.f32 0.0, %v449
  %v451 = vpop.f32.mrb[0].mxu0
  %v452 = vadd.f32 0.0, %v451
  %453 = vmatprep.mubr.bf16.mxu0 0
  %454 = vmatmul.mubr.bf16.gmra.mrb[0].mxu0 %v280
  %v455 = vpop.f32.mrb[0].mxu0
  %v456 = vadd.f32 0.0, %v455
  %v457 = vpop.f32.mrb[0].mxu0
  %v458 = vadd.f32 0.0, %v457
  %v459 = vpop.f32.mrb[0].mxu0
  %v460 = vadd.f32 0.0, %v459
  %v461 = vpop.f32.mrb[0].mxu0
  %v462 = vadd.f32 0.0, %v461
  %463 = vmatprep.mubr.bf16.mxu0 0
  %464 = vmatmul.mubr.bf16.gmra.mrb[0].mxu0 %v283
  %v465 = vpop.f32.mrb[0].mxu0
  %v466 = vadd.f32 0.0, %v465
  %v467 = vpop.f32.mrb[0].mxu0
  %v468 = vadd.f32 0.0, %v467
  %v469 = vpop.f32.mrb[0].mxu0
  %v470 = vadd.f32 0.0, %v469
  %v471 = vpop.f32.mrb[0].mxu0
  %v472 = vadd.f32 0.0, %v471
  %473 = vmatprep.mubr.bf16.mxu0 0
  %474 = vmatmul.mubr.bf16.gmra.mrb[0].mxu0 %v286
  %v475 = vpop.f32.mrb[0].mxu0
  %v476 = vadd.f32 0.0, %v475
  %v477 = vpop.f32.mrb[0].mxu0
  %v478 = vadd.f32 0.0, %v477
  %v479 = vpop.f32.mrb[0].mxu0
  %v480 = vadd.f32 0.0, %v479
  %v481 = vpop.f32.mrb[0].mxu0
  %v482 = vadd.f32 0.0, %v481
  %483 = vmatprep.mubr.bf16.mxu0 0
  %484 = vmatmul.mubr.bf16.gmra.mrb[0].mxu0 %v289
  %v485 = vpop.f32.mrb[0].mxu0
  %v486 = vadd.f32 0.0, %v485
  %v487 = vpop.f32.mrb[0].mxu0
  %v488 = vadd.f32 0.0, %v487
  %v489 = vpop.f32.mrb[0].mxu0
  %v490 = vadd.f32 0.0, %v489
  %v491 = vpop.f32.mrb[0].mxu0
  %v492 = vadd.f32 0.0, %v491
  %493 = vmatprep.mubr.bf16.mxu0 0
  %494 = vmatmul.mubr.bf16.gmra.mrb[0].mxu0 %v292
  %v495 = vpop.f32.mrb[0].mxu0
  %v496 = vadd.f32 0.0, %v495
  %v497 = vpop.f32.mrb[0].mxu0
  %v498 = vadd.f32 0.0, %v497
  %v499 = vpop.f32.mrb[0].mxu0
  %v500 = vadd.f32 0.0, %v499
  %v501 = vpop.f32.mrb[0].mxu0
  %v502 = vadd.f32 0.0, %v501
  %503 = vmatprep.mubr.bf16.mxu0 0
  %504 = vmatmul.mubr.bf16.gmra.mrb[0].mxu0 %v295
  %v505 = vpop.f32.mrb[0].mxu0
  %v506 = vadd.f32 0.0, %v505
  %v507 = vpop.f32.mrb[0].mxu0
  %v508 = vadd.f32 0.0, %v507
  %v509 = vpop.f32.mrb[0].mxu0
  %v510 = vadd.f32 0.0, %v509
  %v511 = vpop.f32.mrb[0].mxu0
  %v512 = vadd.f32 0.0, %v511
  %513 = vmatprep.mubr.bf16.mxu0 0
  %514 = vmatmul.mubr.bf16.gmra.mrb[0].mxu0 %v298
  %v515 = vpop.f32.mrb[0].mxu0
  %v516 = vadd.f32 0.0, %v515
  %v517 = vpop.f32.mrb[0].mxu0
  %v518 = vadd.f32 0.0, %v517
  %v519 = vpop.f32.mrb[0].mxu0
  %v520 = vadd.f32 0.0, %v519
  %v521 = vpop.f32.mrb[0].mxu0
  %v522 = vadd.f32 0.0, %v521
  %523 = vmatprep.mubr.bf16.mxu0 0
  %524 = vmatmul.mubr.bf16.gmra.mrb[0].mxu0 %v301
  %v525 = vpop.f32.mrb[0].mxu0
  %v526 = vadd.f32 0.0, %v525
  %v527 = vpop.f32.mrb[0].mxu0
  %v528 = vadd.f32 0.0, %v527
  %v529 = vpop.f32.mrb[0].mxu0
  %v530 = vadd.f32 0.0, %v529
  %v531 = vpop.f32.mrb[0].mxu0
  %v532 = vadd.f32 0.0, %v531
  %533 = vmatprep.mubr.bf16.mxu0 0
  %534 = vmatmul.mubr.bf16.gmra.mrb[0].mxu0 %v304
  %v535 = vpop.f32.mrb[0].mxu0
  %v536 = vadd.f32 0.0, %v535
  %v537 = vpop.f32.mrb[0].mxu0
  %v538 = vadd.f32 0.0, %v537
  %v539 = vpop.f32.mrb[0].mxu0
  %v540 = vadd.f32 0.0, %v539
  %v541 = vpop.f32.mrb[0].mxu0
  %v542 = vadd.f32 0.0, %v541
  %543 = vmatprep.mubr.bf16.mxu0 0
  %544 = vmatmul.mubr.bf16.gmra.mrb[0].mxu0 %v307
  %v545 = vpop.f32.mrb[0].mxu0
  %v546 = vadd.f32 0.0, %v545
  %v547 = vpop.f32.mrb[0].mxu0
  %v548 = vadd.f32 0.0, %v547
  %v549 = vpop.f32.mrb[0].mxu0
  %v550 = vadd.f32 0.0, %v549
  %v551 = vpop.f32.mrb[0].mxu0
  %v552 = vadd.f32 0.0, %v551
  %553 = vmatprep.mubr.bf16.mxu0 0
  %554 = vmatmul.mubr.bf16.gmra.mrb[0].mxu0 %v310
  %v555 = vpop.f32.mrb[0].mxu0
  %v556 = vadd.f32 0.0, %v555
  %v557 = vpop.f32.mrb[0].mxu0
  %v558 = vadd.f32 0.0, %v557
  %v559 = vpop.f32.mrb[0].mxu0
  %v560 = vadd.f32 0.0, %v559
  %v561 = vpop.f32.mrb[0].mxu0
  %v562 = vadd.f32 0.0, %v561
  %563 = vmatprep.mubr.bf16.mxu0 0
  %564 = vmatmul.mubr.bf16.gmra.mrb[0].mxu0 %v313
  %v565 = vpop.f32.mrb[0].mxu0
  %v566 = vadd.f32 0.0, %v565
  %v567 = vpop.f32.mrb[0].mxu0
  %v568 = vadd.f32 0.0, %v567
  %v569 = vpop.f32.mrb[0].mxu0
  %v570 = vadd.f32 0.0, %v569
  %v571 = vpop.f32.mrb[0].mxu0
  %v572 = vadd.f32 0.0, %v571
  %573 = vmatprep.mubr.bf16.mxu0 0
  %574 = vmatmul.mubr.bf16.gmra.mrb[0].mxu0 %v316
  %v575 = vpop.f32.mrb[0].mxu0
  %v576 = vadd.f32 0.0, %v575
  %v577 = vpop.f32.mrb[0].mxu0
  %v578 = vadd.f32 0.0, %v577
  %v579 = vpop.f32.mrb[0].mxu0
  %v580 = vadd.f32 0.0, %v579
  %v581 = vpop.f32.mrb[0].mxu0
  %v582 = vadd.f32 0.0, %v581
  %583 = vmatprep.mubr.bf16.mxu0 0
  %584 = vmatmul.mubr.bf16.gmra.mrb[0].mxu0 %v319
  %v585 = vpop.f32.mrb[0].mxu0
  %v586 = vadd.f32 0.0, %v585
  %v587 = vpop.f32.mrb[0].mxu0
  %v588 = vadd.f32 0.0, %v587
  %v589 = vpop.f32.mrb[0].mxu0
  %v590 = vadd.f32 0.0, %v589
  %v591 = vpop.f32.mrb[0].mxu0
  %v592 = vadd.f32 0.0, %v591
  %593 = vmatprep.mubr.bf16.mxu0 0
  %594 = vmatmul.mubr.bf16.gmra.mrb[0].mxu0 %v322
  %v595 = vpop.f32.mrb[0].mxu0
  %v596 = vadd.f32 0.0, %v595
  %v597 = vpop.f32.mrb[0].mxu0
  %v598 = vadd.f32 0.0, %v597
  %v599 = vpop.f32.mrb[0].mxu0
  %v600 = vadd.f32 0.0, %v599
  %v601 = vpop.f32.mrb[0].mxu0
  %v602 = vadd.f32 0.0, %v601
  %603 = vdwg.mxu0
  %v606 = vunpack.c.l.b16 %v48
  %v607 = vunpack.c.l.b16 %v49
  %v608 = vpack.c.b16 %v607, %v606
  %v613 = vunpack.c.l.b16 %v104
  %v614 = vunpack.c.h.b16 %v104
  %v615 = vunpack.c.l.b16 %v105
  %v616 = vunpack.c.h.b16 %v105
  %v617 = vunpack.c.l.b16 %v106
  %v618 = vunpack.c.h.b16 %v106
  %v619 = vunpack.c.l.b16 %v107
  %v620 = vunpack.c.h.b16 %v107
  %v621 = vpack.c.b16 %v615, %v613
  %v622 = vpack.c.b16 %v616, %v614
  %v623 = vpack.c.b16 %v619, %v617
  %v624 = vpack.c.b16 %v620, %v618
  %v628 = vsel %vm251, %v608, 0
  %v631 = vsel %vm324, %v623, 0
  %v634 = vsel %vm324, %v624, 0
  %636 = vmatprep.subr.bf16.mxu0 %v622
  %637 = vmatpush1.bf16.msra.mxu0 %v621
  %638 = vmatprep.subr.bf16.mxu0 %v634
  %639 = vmatpush1.bf16.msra.mxu0 %v631
  %640 = vmatprep.subr.bf16.mxu0 0
  %641 = vmatpush1.bf16.msra.mxu0 0
  %642 = vmatprep.subr.bf16.mxu0 0
  %643 = vmatpush1.bf16.msra.mxu0 0
  %644 = vmatprep.subr.bf16.mxu0 0
  %645 = vmatpush1.bf16.msra.mxu0 0
  %646 = vmatprep.subr.bf16.mxu0 0
  %647 = vmatpush1.bf16.msra.mxu0 0
  %648 = vmatprep.subr.bf16.mxu0 0
  %649 = vmatpush1.bf16.msra.mxu0 0
  %650 = vmatprep.subr.bf16.mxu0 0
  %651 = vmatpush1.bf16.msra.mxu0 0
  %652 = vmatprep.subr.bf16.mxu0 0
  %653 = vmatpush1.bf16.msra.mxu0 0
  %654 = vmatprep.subr.bf16.mxu0 0
  %655 = vmatpush1.bf16.msra.mxu0 0
  %656 = vmatprep.subr.bf16.mxu0 0
  %657 = vmatpush1.bf16.msra.mxu0 0
  %658 = vmatprep.subr.bf16.mxu0 0
  %659 = vmatpush1.bf16.msra.mxu0 0
  %660 = vmatprep.subr.bf16.mxu0 0
  %661 = vmatpush1.bf16.msra.mxu0 0
  %662 = vmatprep.subr.bf16.mxu0 0
  %663 = vmatpush1.bf16.msra.mxu0 0
  %664 = vmatprep.subr.bf16.mxu0 0
  %665 = vmatpush1.bf16.msra.mxu0 0
  %666 = vmatprep.subr.bf16.mxu0 0
  %667 = vmatpush1.bf16.msra.mxu0 0
  %668 = vmatprep.mubr.bf16.mxu0 0
  %669 = vmatmul.mubr.bf16.gmra.mrb[0].mxu0 %v628
  %v670 = vpop.f32.mrb[0].mxu0
  %v671 = vadd.f32 %v366, %v670
  %v672 = vpop.f32.mrb[0].mxu0
  %v673 = vadd.f32 %v368, %v672
  %v674 = vpop.f32.mrb[0].mxu0
  %v675 = vadd.f32 %v370, %v674
  %v676 = vpop.f32.mrb[0].mxu0
  %v677 = vadd.f32 %v372, %v676
  %678 = vmatprep.mubr.bf16.mxu0 0
  %679 = vmatmul.mubr.bf16.gmra.mrb[0].mxu0 %v253
  %v680 = vpop.f32.mrb[0].mxu0
  %v681 = vadd.f32 %v376, %v680
  %v682 = vpop.f32.mrb[0].mxu0
  %v683 = vadd.f32 %v378, %v682
  %v684 = vpop.f32.mrb[0].mxu0
  %v685 = vadd.f32 %v380, %v684
  %v686 = vpop.f32.mrb[0].mxu0
  %v687 = vadd.f32 %v382, %v686
  %688 = vmatprep.mubr.bf16.mxu0 0
  %689 = vmatmul.mubr.bf16.gmra.mrb[0].mxu0 %v256
  %v690 = vpop.f32.mrb[0].mxu0
  %v691 = vadd.f32 %v386, %v690
  %v692 = vpop.f32.mrb[0].mxu0
  %v693 = vadd.f32 %v388, %v692
  %v694 = vpop.f32.mrb[0].mxu0
  %v695 = vadd.f32 %v390, %v694
  %v696 = vpop.f32.mrb[0].mxu0
  %v697 = vadd.f32 %v392, %v696
  %698 = vmatprep.mubr.bf16.mxu0 0
  %699 = vmatmul.mubr.bf16.gmra.mrb[0].mxu0 %v259
  %v700 = vpop.f32.mrb[0].mxu0
  %v701 = vadd.f32 %v396, %v700
  %v702 = vpop.f32.mrb[0].mxu0
  %v703 = vadd.f32 %v398, %v702
  %v704 = vpop.f32.mrb[0].mxu0
  %v705 = vadd.f32 %v400, %v704
  %v706 = vpop.f32.mrb[0].mxu0
  %v707 = vadd.f32 %v402, %v706
  %708 = vmatprep.mubr.bf16.mxu0 0
  %709 = vmatmul.mubr.bf16.gmra.mrb[0].mxu0 %v262
  %v710 = vpop.f32.mrb[0].mxu0
  %v711 = vadd.f32 %v406, %v710
  %v712 = vpop.f32.mrb[0].mxu0
  %v713 = vadd.f32 %v408, %v712
  %v714 = vpop.f32.mrb[0].mxu0
  %v715 = vadd.f32 %v410, %v714
  %v716 = vpop.f32.mrb[0].mxu0
  %v717 = vadd.f32 %v412, %v716
  %718 = vmatprep.mubr.bf16.mxu0 0
  %719 = vmatmul.mubr.bf16.gmra.mrb[0].mxu0 %v265
  %v720 = vpop.f32.mrb[0].mxu0
  %v721 = vadd.f32 %v416, %v720
  %v722 = vpop.f32.mrb[0].mxu0
  %v723 = vadd.f32 %v418, %v722
  %v724 = vpop.f32.mrb[0].mxu0
  %v725 = vadd.f32 %v420, %v724
  %v726 = vpop.f32.mrb[0].mxu0
  %v727 = vadd.f32 %v422, %v726
  %728 = vmatprep.mubr.bf16.mxu0 0
  %729 = vmatmul.mubr.bf16.gmra.mrb[0].mxu0 %v268
  %v730 = vpop.f32.mrb[0].mxu0
  %v731 = vadd.f32 %v426, %v730
  %v732 = vpop.f32.mrb[0].mxu0
  %v733 = vadd.f32 %v428, %v732
  %v734 = vpop.f32.mrb[0].mxu0
  %v735 = vadd.f32 %v430, %v734
  %v736 = vpop.f32.mrb[0].mxu0
  %v737 = vadd.f32 %v432, %v736
  %738 = vmatprep.mubr.bf16.mxu0 0
  %739 = vmatmul.mubr.bf16.gmra.mrb[0].mxu0 %v271
  %v740 = vpop.f32.mrb[0].mxu0
  %v741 = vadd.f32 %v436, %v740
  %v742 = vpop.f32.mrb[0].mxu0
  %v743 = vadd.f32 %v438, %v742
  %v744 = vpop.f32.mrb[0].mxu0
  %v745 = vadd.f32 %v440, %v744
  %v746 = vpop.f32.mrb[0].mxu0
  %v747 = vadd.f32 %v442, %v746
  %748 = vmatprep.mubr.bf16.mxu0 0
  %749 = vmatmul.mubr.bf16.gmra.mrb[0].mxu0 %v274
  %v750 = vpop.f32.mrb[0].mxu0
  %v751 = vadd.f32 %v446, %v750
  %v752 = vpop.f32.mrb[0].mxu0
  %v753 = vadd.f32 %v448, %v752
  %v754 = vpop.f32.mrb[0].mxu0
  %v755 = vadd.f32 %v450, %v754
  %v756 = vpop.f32.mrb[0].mxu0
  %v757 = vadd.f32 %v452, %v756
  %758 = vmatprep.mubr.bf16.mxu0 0
  %759 = vmatmul.mubr.bf16.gmra.mrb[0].mxu0 %v277
  %v760 = vpop.f32.mrb[0].mxu0
  %v761 = vadd.f32 %v456, %v760
  %v762 = vpop.f32.mrb[0].mxu0
  %v763 = vadd.f32 %v458, %v762
  %v764 = vpop.f32.mrb[0].mxu0
  %v765 = vadd.f32 %v460, %v764
  %v766 = vpop.f32.mrb[0].mxu0
  %v767 = vadd.f32 %v462, %v766
  %768 = vmatprep.mubr.bf16.mxu0 0
  %769 = vmatmul.mubr.bf16.gmra.mrb[0].mxu0 %v280
  %v770 = vpop.f32.mrb[0].mxu0
  %v771 = vadd.f32 %v466, %v770
  %v772 = vpop.f32.mrb[0].mxu0
  %v773 = vadd.f32 %v468, %v772
  %v774 = vpop.f32.mrb[0].mxu0
  %v775 = vadd.f32 %v470, %v774
  %v776 = vpop.f32.mrb[0].mxu0
  %v777 = vadd.f32 %v472, %v776
  %778 = vmatprep.mubr.bf16.mxu0 0
  %779 = vmatmul.mubr.bf16.gmra.mrb[0].mxu0 %v283
  %v780 = vpop.f32.mrb[0].mxu0
  %v781 = vadd.f32 %v476, %v780
  %v782 = vpop.f32.mrb[0].mxu0
  %v783 = vadd.f32 %v478, %v782
  %v784 = vpop.f32.mrb[0].mxu0
  %v785 = vadd.f32 %v480, %v784
  %v786 = vpop.f32.mrb[0].mxu0
  %v787 = vadd.f32 %v482, %v786
  %788 = vmatprep.mubr.bf16.mxu0 0
  %789 = vmatmul.mubr.bf16.gmra.mrb[0].mxu0 %v286
  %v790 = vpop.f32.mrb[0].mxu0
  %v791 = vadd.f32 %v486, %v790
  %v792 = vpop.f32.mrb[0].mxu0
  %v793 = vadd.f32 %v488, %v792
  %v794 = vpop.f32.mrb[0].mxu0
  %v795 = vadd.f32 %v490, %v794
  %v796 = vpop.f32.mrb[0].mxu0
  %v797 = vadd.f32 %v492, %v796
  %798 = vmatprep.mubr.bf16.mxu0 0
  %799 = vmatmul.mubr.bf16.gmra.mrb[0].mxu0 %v289
  %v800 = vpop.f32.mrb[0].mxu0
  %v801 = vadd.f32 %v496, %v800
  %v802 = vpop.f32.mrb[0].mxu0
  %v803 = vadd.f32 %v498, %v802
  %v804 = vpop.f32.mrb[0].mxu0
  %v805 = vadd.f32 %v500, %v804
  %v806 = vpop.f32.mrb[0].mxu0
  %v807 = vadd.f32 %v502, %v806
  %808 = vmatprep.mubr.bf16.mxu0 0
  %809 = vmatmul.mubr.bf16.gmra.mrb[0].mxu0 %v292
  %v810 = vpop.f32.mrb[0].mxu0
  %v811 = vadd.f32 %v506, %v810
  %v812 = vpop.f32.mrb[0].mxu0
  %v813 = vadd.f32 %v508, %v812
  %v814 = vpop.f32.mrb[0].mxu0
  %v815 = vadd.f32 %v510, %v814
  %v816 = vpop.f32.mrb[0].mxu0
  %v817 = vadd.f32 %v512, %v816
  %818 = vmatprep.mubr.bf16.mxu0 0
  %819 = vmatmul.mubr.bf16.gmra.mrb[0].mxu0 %v295
  %v820 = vpop.f32.mrb[0].mxu0
  %v821 = vadd.f32 %v516, %v820
  %v822 = vpop.f32.mrb[0].mxu0
  %v823 = vadd.f32 %v518, %v822
  %v824 = vpop.f32.mrb[0].mxu0
  %v825 = vadd.f32 %v520, %v824
  %v826 = vpop.f32.mrb[0].mxu0
  %v827 = vadd.f32 %v522, %v826
  %828 = vmatprep.mubr.bf16.mxu0 0
  %829 = vmatmul.mubr.bf16.gmra.mrb[0].mxu0 %v298
  %v830 = vpop.f32.mrb[0].mxu0
  %v831 = vadd.f32 %v526, %v830
  %v832 = vpop.f32.mrb[0].mxu0
  %v833 = vadd.f32 %v528, %v832
  %v834 = vpop.f32.mrb[0].mxu0
  %v835 = vadd.f32 %v530, %v834
  %v836 = vpop.f32.mrb[0].mxu0
  %v837 = vadd.f32 %v532, %v836
  %838 = vmatprep.mubr.bf16.mxu0 0
  %839 = vmatmul.mubr.bf16.gmra.mrb[0].mxu0 %v301
  %v840 = vpop.f32.mrb[0].mxu0
  %v841 = vadd.f32 %v536, %v840
  %v842 = vpop.f32.mrb[0].mxu0
  %v843 = vadd.f32 %v538, %v842
  %v844 = vpop.f32.mrb[0].mxu0
  %v845 = vadd.f32 %v540, %v844
  %v846 = vpop.f32.mrb[0].mxu0
  %v847 = vadd.f32 %v542, %v846
  %848 = vmatprep.mubr.bf16.mxu0 0
  %849 = vmatmul.mubr.bf16.gmra.mrb[0].mxu0 %v304
  %v850 = vpop.f32.mrb[0].mxu0
  %v851 = vadd.f32 %v546, %v850
  %v852 = vpop.f32.mrb[0].mxu0
  %v853 = vadd.f32 %v548, %v852
  %v854 = vpop.f32.mrb[0].mxu0
  %v855 = vadd.f32 %v550, %v854
  %v856 = vpop.f32.mrb[0].mxu0
  %v857 = vadd.f32 %v552, %v856
  %858 = vmatprep.mubr.bf16.mxu0 0
  %859 = vmatmul.mubr.bf16.gmra.mrb[0].mxu0 %v307
  %v860 = vpop.f32.mrb[0].mxu0
  %v861 = vadd.f32 %v556, %v860
  %v862 = vpop.f32.mrb[0].mxu0
  %v863 = vadd.f32 %v558, %v862
  %v864 = vpop.f32.mrb[0].mxu0
  %v865 = vadd.f32 %v560, %v864
  %v866 = vpop.f32.mrb[0].mxu0
  %v867 = vadd.f32 %v562, %v866
  %868 = vmatprep.mubr.bf16.mxu0 0
  %869 = vmatmul.mubr.bf16.gmra.mrb[0].mxu0 %v310
  %v870 = vpop.f32.mrb[0].mxu0
  %v871 = vadd.f32 %v566, %v870
  %v872 = vpop.f32.mrb[0].mxu0
  %v873 = vadd.f32 %v568, %v872
  %v874 = vpop.f32.mrb[0].mxu0
  %v875 = vadd.f32 %v570, %v874
  %v876 = vpop.f32.mrb[0].mxu0
  %v877 = vadd.f32 %v572, %v876
  %878 = vmatprep.mubr.bf16.mxu0 0
  %879 = vmatmul.mubr.bf16.gmra.mrb[0].mxu0 %v313
  %v880 = vpop.f32.mrb[0].mxu0
  %v881 = vadd.f32 %v576, %v880
  %v882 = vpop.f32.mrb[0].mxu0
  %v883 = vadd.f32 %v578, %v882
  %v884 = vpop.f32.mrb[0].mxu0
  %v885 = vadd.f32 %v580, %v884
  %v886 = vpop.f32.mrb[0].mxu0
  %v887 = vadd.f32 %v582, %v886
  %888 = vmatprep.mubr.bf16.mxu0 0
  %889 = vmatmul.mubr.bf16.gmra.mrb[0].mxu0 %v316
  %v890 = vpop.f32.mrb[0].mxu0
  %v891 = vadd.f32 %v586, %v890
  %v892 = vpop.f32.mrb[0].mxu0
  %v893 = vadd.f32 %v588, %v892
  %v894 = vpop.f32.mrb[0].mxu0
  %v895 = vadd.f32 %v590, %v894
  %v896 = vpop.f32.mrb[0].mxu0
  %v897 = vadd.f32 %v592, %v896
  %898 = vmatprep.mubr.bf16.mxu0 0
  %899 = vmatmul.mubr.bf16.gmra.mrb[0].mxu0 %v319
  %v900 = vpop.f32.mrb[0].mxu0
  %v901 = vadd.f32 %v596, %v900
  %v902 = vpop.f32.mrb[0].mxu0
  %v903 = vadd.f32 %v598, %v902
  %v904 = vpop.f32.mrb[0].mxu0
  %v905 = vadd.f32 %v600, %v904
  %v906 = vpop.f32.mrb[0].mxu0
  %v907 = vadd.f32 %v602, %v906
  %908 = vdwg.mxu0
  %s909 = scalar_lea.vmem %s1, 64
  %v910 = vld [vmem:[%s909] sm:$0xff]
  %v911 = vld [vmem:[%s909 + $0x8] sm:$0xff]
  %v912 = vld [vmem:[%s909 + $0x10] sm:$0xff]
  %v913 = vld [vmem:[%s909 + $0x18] sm:$0x33]
  %v916 = vunpack.c.l.b16 %v98
  %v917 = vunpack.c.l.b16 %v99
  %v918 = vpack.c.b16 %v917, %v916
  %v923 = vunpack.c.l.b16 %v910
  %v924 = vunpack.c.h.b16 %v910
  %v925 = vunpack.c.l.b16 %v911
  %v926 = vunpack.c.h.b16 %v911
  %v927 = vunpack.c.l.b16 %v912
  %v928 = vunpack.c.h.b16 %v912
  %v929 = vunpack.c.l.b16 %v913
  %v930 = vunpack.c.h.b16 %v913
  %v931 = vpack.c.b16 %v925, %v923
  %v932 = vpack.c.b16 %v926, %v924
  %v933 = vpack.c.b16 %v929, %v927
  %v934 = vpack.c.b16 %v930, %v928
  %v938 = vsel %vm251, %v918, 0
  %v941 = vsel %vm324, %v933, 0
  %v944 = vsel %vm324, %v934, 0
  %946 = vmatprep.subr.bf16.mxu0 %v932
  %947 = vmatpush1.bf16.msra.mxu0 %v931
  %948 = vmatprep.subr.bf16.mxu0 %v944
  %949 = vmatpush1.bf16.msra.mxu0 %v941
  %950 = vmatprep.subr.bf16.mxu0 0
  %951 = vmatpush1.bf16.msra.mxu0 0
  %952 = vmatprep.subr.bf16.mxu0 0
  %953 = vmatpush1.bf16.msra.mxu0 0
  %954 = vmatprep.subr.bf16.mxu0 0
  %955 = vmatpush1.bf16.msra.mxu0 0
  %956 = vmatprep.subr.bf16.mxu0 0
  %957 = vmatpush1.bf16.msra.mxu0 0
  %958 = vmatprep.subr.bf16.mxu0 0
  %959 = vmatpush1.bf16.msra.mxu0 0
  %960 = vmatprep.subr.bf16.mxu0 0
  %961 = vmatpush1.bf16.msra.mxu0 0
  %962 = vmatprep.subr.bf16.mxu0 0
  %963 = vmatpush1.bf16.msra.mxu0 0
  %964 = vmatprep.subr.bf16.mxu0 0
  %965 = vmatpush1.bf16.msra.mxu0 0
  %966 = vmatprep.subr.bf16.mxu0 0
  %967 = vmatpush1.bf16.msra.mxu0 0
  %968 = vmatprep.subr.bf16.mxu0 0
  %969 = vmatpush1.bf16.msra.mxu0 0
  %970 = vmatprep.subr.bf16.mxu0 0
  %971 = vmatpush1.bf16.msra.mxu0 0
  %972 = vmatprep.subr.bf16.mxu0 0
  %973 = vmatpush1.bf16.msra.mxu0 0
  %974 = vmatprep.subr.bf16.mxu0 0
  %975 = vmatpush1.bf16.msra.mxu0 0
  %976 = vmatprep.subr.bf16.mxu0 0
  %977 = vmatpush1.bf16.msra.mxu0 0
  %978 = vmatprep.mubr.bf16.mxu0 0
  %979 = vmatmul.mubr.bf16.gmra.mrb[0].mxu0 %v256
  %v980 = vpop.f32.mrb[0].mxu0
  %v981 = vadd.f32 0.0, %v980
  %v982 = vpop.f32.mrb[0].mxu0
  %v983 = vadd.f32 0.0, %v982
  %v984 = vpop.f32.mrb[0].mxu0
  %v985 = vadd.f32 0.0, %v984
  %v986 = vpop.f32.mrb[0].mxu0
  %v987 = vadd.f32 0.0, %v986
  %988 = vmatprep.mubr.bf16.mxu0 0
  %989 = vmatmul.mubr.bf16.gmra.mrb[0].mxu0 %v259
  %v990 = vpop.f32.mrb[0].mxu0
  %v991 = vadd.f32 0.0, %v990
  %v992 = vpop.f32.mrb[0].mxu0
  %v993 = vadd.f32 0.0, %v992
  %v994 = vpop.f32.mrb[0].mxu0
  %v995 = vadd.f32 0.0, %v994
  %v996 = vpop.f32.mrb[0].mxu0
  %v997 = vadd.f32 0.0, %v996
  %998 = vmatprep.mubr.bf16.mxu0 0
  %999 = vmatmul.mubr.bf16.gmra.mrb[0].mxu0 %v262
  %v1000 = vpop.f32.mrb[0].mxu0
  %v1001 = vadd.f32 0.0, %v1000
  %v1002 = vpop.f32.mrb[0].mxu0
  %v1003 = vadd.f32 0.0, %v1002
  %v1004 = vpop.f32.mrb[0].mxu0
  %v1005 = vadd.f32 0.0, %v1004
  %v1006 = vpop.f32.mrb[0].mxu0
  %v1007 = vadd.f32 0.0, %v1006
  %1008 = vmatprep.mubr.bf16.mxu0 0
  %1009 = vmatmul.mubr.bf16.gmra.mrb[0].mxu0 %v265
  %v1010 = vpop.f32.mrb[0].mxu0
  %v1011 = vadd.f32 0.0, %v1010
  %v1012 = vpop.f32.mrb[0].mxu0
  %v1013 = vadd.f32 0.0, %v1012
  %v1014 = vpop.f32.mrb[0].mxu0
  %v1015 = vadd.f32 0.0, %v1014
  %v1016 = vpop.f32.mrb[0].mxu0
  %v1017 = vadd.f32 0.0, %v1016
  %1018 = vmatprep.mubr.bf16.mxu0 0
  %1019 = vmatmul.mubr.bf16.gmra.mrb[0].mxu0 %v268
  %v1020 = vpop.f32.mrb[0].mxu0
  %v1021 = vadd.f32 0.0, %v1020
  %v1022 = vpop.f32.mrb[0].mxu0
  %v1023 = vadd.f32 0.0, %v1022
  %v1024 = vpop.f32.mrb[0].mxu0
  %v1025 = vadd.f32 0.0, %v1024
  %v1026 = vpop.f32.mrb[0].mxu0
  %v1027 = vadd.f32 0.0, %v1026
  %1028 = vmatprep.mubr.bf16.mxu0 0
  %1029 = vmatmul.mubr.bf16.gmra.mrb[0].mxu0 %v271
  %v1030 = vpop.f32.mrb[0].mxu0
  %v1031 = vadd.f32 0.0, %v1030
  %v1032 = vpop.f32.mrb[0].mxu0
  %v1033 = vadd.f32 0.0, %v1032
  %v1034 = vpop.f32.mrb[0].mxu0
  %v1035 = vadd.f32 0.0, %v1034
  %v1036 = vpop.f32.mrb[0].mxu0
  %v1037 = vadd.f32 0.0, %v1036
  %1038 = vmatprep.mubr.bf16.mxu0 0
  %1039 = vmatmul.mubr.bf16.gmra.mrb[0].mxu0 %v274
  %v1040 = vpop.f32.mrb[0].mxu0
  %v1041 = vadd.f32 0.0, %v1040
  %v1042 = vpop.f32.mrb[0].mxu0
  %v1043 = vadd.f32 0.0, %v1042
  %v1044 = vpop.f32.mrb[0].mxu0
  %v1045 = vadd.f32 0.0, %v1044
  %v1046 = vpop.f32.mrb[0].mxu0
  %v1047 = vadd.f32 0.0, %v1046
  %1048 = vmatprep.mubr.bf16.mxu0 0
  %1049 = vmatmul.mubr.bf16.gmra.mrb[0].mxu0 %v277
  %v1050 = vpop.f32.mrb[0].mxu0
  %v1051 = vadd.f32 0.0, %v1050
  %v1052 = vpop.f32.mrb[0].mxu0
  %v1053 = vadd.f32 0.0, %v1052
  %v1054 = vpop.f32.mrb[0].mxu0
  %v1055 = vadd.f32 0.0, %v1054
  %v1056 = vpop.f32.mrb[0].mxu0
  %v1057 = vadd.f32 0.0, %v1056
  %1058 = vmatprep.mubr.bf16.mxu0 0
  %1059 = vmatmul.mubr.bf16.gmra.mrb[0].mxu0 %v280
  %v1060 = vpop.f32.mrb[0].mxu0
  %v1061 = vadd.f32 0.0, %v1060
  %v1062 = vpop.f32.mrb[0].mxu0
  %v1063 = vadd.f32 0.0, %v1062
  %v1064 = vpop.f32.mrb[0].mxu0
  %v1065 = vadd.f32 0.0, %v1064
  %v1066 = vpop.f32.mrb[0].mxu0
  %v1067 = vadd.f32 0.0, %v1066
  %1068 = vmatprep.mubr.bf16.mxu0 0
  %1069 = vmatmul.mubr.bf16.gmra.mrb[0].mxu0 %v283
  %v1070 = vpop.f32.mrb[0].mxu0
  %v1071 = vadd.f32 0.0, %v1070
  %v1072 = vpop.f32.mrb[0].mxu0
  %v1073 = vadd.f32 0.0, %v1072
  %v1074 = vpop.f32.mrb[0].mxu0
  %v1075 = vadd.f32 0.0, %v1074
  %v1076 = vpop.f32.mrb[0].mxu0
  %v1077 = vadd.f32 0.0, %v1076
  %1078 = vmatprep.mubr.bf16.mxu0 0
  %1079 = vmatmul.mubr.bf16.gmra.mrb[0].mxu0 %v286
  %v1080 = vpop.f32.mrb[0].mxu0
  %v1081 = vadd.f32 0.0, %v1080
  %v1082 = vpop.f32.mrb[0].mxu0
  %v1083 = vadd.f32 0.0, %v1082
  %v1084 = vpop.f32.mrb[0].mxu0
  %v1085 = vadd.f32 0.0, %v1084
  %v1086 = vpop.f32.mrb[0].mxu0
  %v1087 = vadd.f32 0.0, %v1086
  %1088 = vmatprep.mubr.bf16.mxu0 0
  %1089 = vmatmul.mubr.bf16.gmra.mrb[0].mxu0 %v289
  %v1090 = vpop.f32.mrb[0].mxu0
  %v1091 = vadd.f32 0.0, %v1090
  %v1092 = vpop.f32.mrb[0].mxu0
  %v1093 = vadd.f32 0.0, %v1092
  %v1094 = vpop.f32.mrb[0].mxu0
  %v1095 = vadd.f32 0.0, %v1094
  %v1096 = vpop.f32.mrb[0].mxu0
  %v1097 = vadd.f32 0.0, %v1096
  %1098 = vmatprep.mubr.bf16.mxu0 0
  %1099 = vmatmul.mubr.bf16.gmra.mrb[0].mxu0 %v292
  %v1100 = vpop.f32.mrb[0].mxu0
  %v1101 = vadd.f32 0.0, %v1100
  %v1102 = vpop.f32.mrb[0].mxu0
  %v1103 = vadd.f32 0.0, %v1102
  %v1104 = vpop.f32.mrb[0].mxu0
  %v1105 = vadd.f32 0.0, %v1104
  %v1106 = vpop.f32.mrb[0].mxu0
  %v1107 = vadd.f32 0.0, %v1106
  %1108 = vmatprep.mubr.bf16.mxu0 0
  %1109 = vmatmul.mubr.bf16.gmra.mrb[0].mxu0 %v295
  %v1110 = vpop.f32.mrb[0].mxu0
  %v1111 = vadd.f32 0.0, %v1110
  %v1112 = vpop.f32.mrb[0].mxu0
  %v1113 = vadd.f32 0.0, %v1112
  %v1114 = vpop.f32.mrb[0].mxu0
  %v1115 = vadd.f32 0.0, %v1114
  %v1116 = vpop.f32.mrb[0].mxu0
  %v1117 = vadd.f32 0.0, %v1116
  %1118 = vmatprep.mubr.bf16.mxu0 0
  %1119 = vmatmul.mubr.bf16.gmra.mrb[0].mxu0 %v298
  %v1120 = vpop.f32.mrb[0].mxu0
  %v1121 = vadd.f32 0.0, %v1120
  %v1122 = vpop.f32.mrb[0].mxu0
  %v1123 = vadd.f32 0.0, %v1122
  %v1124 = vpop.f32.mrb[0].mxu0
  %v1125 = vadd.f32 0.0, %v1124
  %v1126 = vpop.f32.mrb[0].mxu0
  %v1127 = vadd.f32 0.0, %v1126
  %1128 = vmatprep.mubr.bf16.mxu0 0
  %1129 = vmatmul.mubr.bf16.gmra.mrb[0].mxu0 %v301
  %v1130 = vpop.f32.mrb[0].mxu0
  %v1131 = vadd.f32 0.0, %v1130
  %v1132 = vpop.f32.mrb[0].mxu0
  %v1133 = vadd.f32 0.0, %v1132
  %v1134 = vpop.f32.mrb[0].mxu0
  %v1135 = vadd.f32 0.0, %v1134
  %v1136 = vpop.f32.mrb[0].mxu0
  %v1137 = vadd.f32 0.0, %v1136
  %1138 = vmatprep.mubr.bf16.mxu0 0
  %1139 = vmatmul.mubr.bf16.gmra.mrb[0].mxu0 %v304
  %v1140 = vpop.f32.mrb[0].mxu0
  %v1141 = vadd.f32 0.0, %v1140
  %v1142 = vpop.f32.mrb[0].mxu0
  %v1143 = vadd.f32 0.0, %v1142
  %v1144 = vpop.f32.mrb[0].mxu0
  %v1145 = vadd.f32 0.0, %v1144
  %v1146 = vpop.f32.mrb[0].mxu0
  %v1147 = vadd.f32 0.0, %v1146
  %1148 = vmatprep.mubr.bf16.mxu0 0
  %1149 = vmatmul.mubr.bf16.gmra.mrb[0].mxu0 %v307
  %v1150 = vpop.f32.mrb[0].mxu0
  %v1151 = vadd.f32 0.0, %v1150
  %v1152 = vpop.f32.mrb[0].mxu0
  %v1153 = vadd.f32 0.0, %v1152
  %v1154 = vpop.f32.mrb[0].mxu0
  %v1155 = vadd.f32 0.0, %v1154
  %v1156 = vpop.f32.mrb[0].mxu0
  %v1157 = vadd.f32 0.0, %v1156
  %1158 = vmatprep.mubr.bf16.mxu0 0
  %1159 = vmatmul.mubr.bf16.gmra.mrb[0].mxu0 %v310
  %v1160 = vpop.f32.mrb[0].mxu0
  %v1161 = vadd.f32 0.0, %v1160
  %v1162 = vpop.f32.mrb[0].mxu0
  %v1163 = vadd.f32 0.0, %v1162
  %v1164 = vpop.f32.mrb[0].mxu0
  %v1165 = vadd.f32 0.0, %v1164
  %v1166 = vpop.f32.mrb[0].mxu0
  %v1167 = vadd.f32 0.0, %v1166
  %1168 = vmatprep.mubr.bf16.mxu0 0
  %1169 = vmatmul.mubr.bf16.gmra.mrb[0].mxu0 %v313
  %v1170 = vpop.f32.mrb[0].mxu0
  %v1171 = vadd.f32 0.0, %v1170
  %v1172 = vpop.f32.mrb[0].mxu0
  %v1173 = vadd.f32 0.0, %v1172
  %v1174 = vpop.f32.mrb[0].mxu0
  %v1175 = vadd.f32 0.0, %v1174
  %v1176 = vpop.f32.mrb[0].mxu0
  %v1177 = vadd.f32 0.0, %v1176
  %1178 = vmatprep.mubr.bf16.mxu0 0
  %1179 = vmatmul.mubr.bf16.gmra.mrb[0].mxu0 %v316
  %v1180 = vpop.f32.mrb[0].mxu0
  %v1181 = vadd.f32 0.0, %v1180
  %v1182 = vpop.f32.mrb[0].mxu0
  %v1183 = vadd.f32 0.0, %v1182
  %v1184 = vpop.f32.mrb[0].mxu0
  %v1185 = vadd.f32 0.0, %v1184
  %v1186 = vpop.f32.mrb[0].mxu0
  %v1187 = vadd.f32 0.0, %v1186
  %1188 = vmatprep.mubr.bf16.mxu0 0
  %1189 = vmatmul.mubr.bf16.gmra.mrb[0].mxu0 %v319
  %v1190 = vpop.f32.mrb[0].mxu0
  %v1191 = vadd.f32 0.0, %v1190
  %v1192 = vpop.f32.mrb[0].mxu0
  %v1193 = vadd.f32 0.0, %v1192
  %v1194 = vpop.f32.mrb[0].mxu0
  %v1195 = vadd.f32 0.0, %v1194
  %v1196 = vpop.f32.mrb[0].mxu0
  %v1197 = vadd.f32 0.0, %v1196
  %1198 = vmatprep.mubr.bf16.mxu0 0
  %1199 = vmatmul.mubr.bf16.gmra.mrb[0].mxu0 %v322
  %v1200 = vpop.f32.mrb[0].mxu0
  %v1201 = vadd.f32 0.0, %v1200
  %v1202 = vpop.f32.mrb[0].mxu0
  %v1203 = vadd.f32 0.0, %v1202
  %v1204 = vpop.f32.mrb[0].mxu0
  %v1205 = vadd.f32 0.0, %v1204
  %v1206 = vpop.f32.mrb[0].mxu0
  %v1207 = vadd.f32 0.0, %v1206
  %1208 = vmatprep.mubr.bf16.mxu0 0
  %1209 = vmatmul.mubr.bf16.gmra.mrb[0].mxu0 %v938
  %v1210 = vpop.f32.mrb[0].mxu0
  %v1211 = vadd.f32 0.0, %v1210
  %v1212 = vpop.f32.mrb[0].mxu0
  %v1213 = vadd.f32 0.0, %v1212
  %v1214 = vpop.f32.mrb[0].mxu0
  %v1215 = vadd.f32 0.0, %v1214
  %v1216 = vpop.f32.mrb[0].mxu0
  %v1217 = vadd.f32 0.0, %v1216
  %1218 = vdwg.mxu0
  %v1219 = vadd.f32 %v671, %v981
  %v1220 = vadd.f32 %v673, %v983
  %v1221 = vadd.f32 %v675, %v985
  %v1222 = vadd.f32 %v677, %v987
  %v1223 = vadd.f32 %v681, %v991
  %v1224 = vadd.f32 %v683, %v993
  %v1225 = vadd.f32 %v685, %v995
  %v1226 = vadd.f32 %v687, %v997
  %v1227 = vadd.f32 %v691, %v1001
  %v1228 = vadd.f32 %v693, %v1003
  %v1229 = vadd.f32 %v695, %v1005
  %v1230 = vadd.f32 %v697, %v1007
  %v1231 = vadd.f32 %v701, %v1011
  %v1232 = vadd.f32 %v703, %v1013
  %v1233 = vadd.f32 %v705, %v1015
  %v1234 = vadd.f32 %v707, %v1017
  %v1235 = vadd.f32 %v711, %v1021
  %v1236 = vadd.f32 %v713, %v1023
  %v1237 = vadd.f32 %v715, %v1025
  %v1238 = vadd.f32 %v717, %v1027
  %v1239 = vadd.f32 %v721, %v1031
  %v1240 = vadd.f32 %v723, %v1033
  %v1241 = vadd.f32 %v725, %v1035
  %v1242 = vadd.f32 %v727, %v1037
  %v1243 = vadd.f32 %v731, %v1041
  %v1244 = vadd.f32 %v733, %v1043
  %v1245 = vadd.f32 %v735, %v1045
  %v1246 = vadd.f32 %v737, %v1047
  %v1247 = vadd.f32 %v741, %v1051
  %v1248 = vadd.f32 %v743, %v1053
  %v1249 = vadd.f32 %v745, %v1055
  %v1250 = vadd.f32 %v747, %v1057
  %v1251 = vadd.f32 %v751, %v1061
  %v1252 = vadd.f32 %v753, %v1063
  %v1253 = vadd.f32 %v755, %v1065
  %v1254 = vadd.f32 %v757, %v1067
  %v1255 = vadd.f32 %v761, %v1071
  %v1256 = vadd.f32 %v763, %v1073
  %v1257 = vadd.f32 %v765, %v1075
  %v1258 = vadd.f32 %v767, %v1077
  %v1259 = vadd.f32 %v771, %v1081
  %v1260 = vadd.f32 %v773, %v1083
  %v1261 = vadd.f32 %v775, %v1085
  %v1262 = vadd.f32 %v777, %v1087
  %v1263 = vadd.f32 %v781, %v1091
  %v1264 = vadd.f32 %v783, %v1093
  %v1265 = vadd.f32 %v785, %v1095
  %v1266 = vadd.f32 %v787, %v1097
  %v1267 = vadd.f32 %v791, %v1101
  %v1268 = vadd.f32 %v793, %v1103
  %v1269 = vadd.f32 %v795, %v1105
  %v1270 = vadd.f32 %v797, %v1107
  %v1271 = vadd.f32 %v801, %v1111
  %v1272 = vadd.f32 %v803, %v1113
  %v1273 = vadd.f32 %v805, %v1115
  %v1274 = vadd.f32 %v807, %v1117
  %v1275 = vadd.f32 %v811, %v1121
  %v1276 = vadd.f32 %v813, %v1123
  %v1277 = vadd.f32 %v815, %v1125
  %v1278 = vadd.f32 %v817, %v1127
  %v1279 = vadd.f32 %v821, %v1131
  %v1280 = vadd.f32 %v823, %v1133
  %v1281 = vadd.f32 %v825, %v1135
  %v1282 = vadd.f32 %v827, %v1137
  %v1283 = vadd.f32 %v831, %v1141
  %v1284 = vadd.f32 %v833, %v1143
  %v1285 = vadd.f32 %v835, %v1145
  %v1286 = vadd.f32 %v837, %v1147
  %v1287 = vadd.f32 %v841, %v1151
  %v1288 = vadd.f32 %v843, %v1153
  %v1289 = vadd.f32 %v845, %v1155
  %v1290 = vadd.f32 %v847, %v1157
  %v1291 = vadd.f32 %v851, %v1161
  %v1292 = vadd.f32 %v853, %v1163
  %v1293 = vadd.f32 %v855, %v1165
  %v1294 = vadd.f32 %v857, %v1167
  %v1295 = vadd.f32 %v861, %v1171
  %v1296 = vadd.f32 %v863, %v1173
  %v1297 = vadd.f32 %v865, %v1175
  %v1298 = vadd.f32 %v867, %v1177
  %v1299 = vadd.f32 %v871, %v1181
  %v1300 = vadd.f32 %v873, %v1183
  %v1301 = vadd.f32 %v875, %v1185
  %v1302 = vadd.f32 %v877, %v1187
  %v1303 = vadd.f32 %v881, %v1191
  %v1304 = vadd.f32 %v883, %v1193
  %v1305 = vadd.f32 %v885, %v1195
  %v1306 = vadd.f32 %v887, %v1197
  %v1307 = vadd.f32 %v891, %v1201
  %v1308 = vadd.f32 %v893, %v1203
  %v1309 = vadd.f32 %v895, %v1205
  %v1310 = vadd.f32 %v897, %v1207
  %v1311 = vadd.f32 %v901, %v1211
  %v1312 = vadd.f32 %v903, %v1213
  %v1313 = vadd.f32 %v905, %v1215
  %v1314 = vadd.f32 %v907, %v1217
  %s1315 = scalar_lea.vmem %s1, 96
  %v1316 = vld [vmem:[%s1315] sm:$0xff]
  %v1317 = vld [vmem:[%s1315 + $0x8] sm:$0xff]
  %v1318 = vld [vmem:[%s1315 + $0x10] sm:$0xff]
  %v1319 = vld [vmem:[%s1315 + $0x18] sm:$0x33]
  %v1322 = vunpack.c.l.b16 %v100
  %v1323 = vunpack.c.l.b16 %v101
  %v1324 = vpack.c.b16 %v1323, %v1322
  %v1329 = vunpack.c.l.b16 %v1316
  %v1330 = vunpack.c.h.b16 %v1316
  %v1331 = vunpack.c.l.b16 %v1317
  %v1332 = vunpack.c.h.b16 %v1317
  %v1333 = vunpack.c.l.b16 %v1318
  %v1334 = vunpack.c.h.b16 %v1318
  %v1335 = vunpack.c.l.b16 %v1319
  %v1336 = vunpack.c.h.b16 %v1319
  %v1337 = vpack.c.b16 %v1331, %v1329
  %v1338 = vpack.c.b16 %v1332, %v1330
  %v1339 = vpack.c.b16 %v1335, %v1333
  %v1340 = vpack.c.b16 %v1336, %v1334
  %v1344 = vsel %vm251, %v1324, 0
  %v1347 = vsel %vm324, %v1339, 0
  %v1350 = vsel %vm324, %v1340, 0
  %1352 = vmatprep.subr.bf16.mxu0 %v1338
  %1353 = vmatpush1.bf16.msra.mxu0 %v1337
  %1354 = vmatprep.subr.bf16.mxu0 %v1350
  %1355 = vmatpush1.bf16.msra.mxu0 %v1347
  %1356 = vmatprep.subr.bf16.mxu0 0
  %1357 = vmatpush1.bf16.msra.mxu0 0
  %1358 = vmatprep.subr.bf16.mxu0 0
  %1359 = vmatpush1.bf16.msra.mxu0 0
  %1360 = vmatprep.subr.bf16.mxu0 0
  %1361 = vmatpush1.bf16.msra.mxu0 0
  %1362 = vmatprep.subr.bf16.mxu0 0
  %1363 = vmatpush1.bf16.msra.mxu0 0
  %1364 = vmatprep.subr.bf16.mxu0 0
  %1365 = vmatpush1.bf16.msra.mxu0 0
  %1366 = vmatprep.subr.bf16.mxu0 0
  %1367 = vmatpush1.bf16.msra.mxu0 0
  %1368 = vmatprep.subr.bf16.mxu0 0
  %1369 = vmatpush1.bf16.msra.mxu0 0
  %1370 = vmatprep.subr.bf16.mxu0 0
  %1371 = vmatpush1.bf16.msra.mxu0 0
  %1372 = vmatprep.subr.bf16.mxu0 0
  %1373 = vmatpush1.bf16.msra.mxu0 0
  %1374 = vmatprep.subr.bf16.mxu0 0
  %1375 = vmatpush1.bf16.msra.mxu0 0
  %1376 = vmatprep.subr.bf16.mxu0 0
  %1377 = vmatpush1.bf16.msra.mxu0 0
  %1378 = vmatprep.subr.bf16.mxu0 0
  %1379 = vmatpush1.bf16.msra.mxu0 0
  %1380 = vmatprep.subr.bf16.mxu0 0
  %1381 = vmatpush1.bf16.msra.mxu0 0
  %1382 = vmatprep.subr.bf16.mxu0 0
  %1383 = vmatpush1.bf16.msra.mxu0 0
  %1384 = vmatprep.mubr.bf16.mxu0 0
  %1385 = vmatmul.mubr.bf16.gmra.mrb[0].mxu0 %v259
  %v1386 = vpop.f32.mrb[0].mxu0
  %v1387 = vadd.f32 0.0, %v1386
  %v1388 = vpop.f32.mrb[0].mxu0
  %v1389 = vadd.f32 0.0, %v1388
  %v1390 = vpop.f32.mrb[0].mxu0
  %v1391 = vadd.f32 0.0, %v1390
  %v1392 = vpop.f32.mrb[0].mxu0
  %v1393 = vadd.f32 0.0, %v1392
  %1394 = vmatprep.mubr.bf16.mxu0 0
  %1395 = vmatmul.mubr.bf16.gmra.mrb[0].mxu0 %v262
  %v1396 = vpop.f32.mrb[0].mxu0
  %v1397 = vadd.f32 0.0, %v1396
  %v1398 = vpop.f32.mrb[0].mxu0
  %v1399 = vadd.f32 0.0, %v1398
  %v1400 = vpop.f32.mrb[0].mxu0
  %v1401 = vadd.f32 0.0, %v1400
  %v1402 = vpop.f32.mrb[0].mxu0
  %v1403 = vadd.f32 0.0, %v1402
  %1404 = vmatprep.mubr.bf16.mxu0 0
  %1405 = vmatmul.mubr.bf16.gmra.mrb[0].mxu0 %v265
  %v1406 = vpop.f32.mrb[0].mxu0
  %v1407 = vadd.f32 0.0, %v1406
  %v1408 = vpop.f32.mrb[0].mxu0
  %v1409 = vadd.f32 0.0, %v1408
  %v1410 = vpop.f32.mrb[0].mxu0
  %v1411 = vadd.f32 0.0, %v1410
  %v1412 = vpop.f32.mrb[0].mxu0
  %v1413 = vadd.f32 0.0, %v1412
  %1414 = vmatprep.mubr.bf16.mxu0 0
  %1415 = vmatmul.mubr.bf16.gmra.mrb[0].mxu0 %v268
  %v1416 = vpop.f32.mrb[0].mxu0
  %v1417 = vadd.f32 0.0, %v1416
  %v1418 = vpop.f32.mrb[0].mxu0
  %v1419 = vadd.f32 0.0, %v1418
  %v1420 = vpop.f32.mrb[0].mxu0
  %v1421 = vadd.f32 0.0, %v1420
  %v1422 = vpop.f32.mrb[0].mxu0
  %v1423 = vadd.f32 0.0, %v1422
  %1424 = vmatprep.mubr.bf16.mxu0 0
  %1425 = vmatmul.mubr.bf16.gmra.mrb[0].mxu0 %v271
  %v1426 = vpop.f32.mrb[0].mxu0
  %v1427 = vadd.f32 0.0, %v1426
  %v1428 = vpop.f32.mrb[0].mxu0
  %v1429 = vadd.f32 0.0, %v1428
  %v1430 = vpop.f32.mrb[0].mxu0
  %v1431 = vadd.f32 0.0, %v1430
  %v1432 = vpop.f32.mrb[0].mxu0
  %v1433 = vadd.f32 0.0, %v1432
  %1434 = vmatprep.mubr.bf16.mxu0 0
  %1435 = vmatmul.mubr.bf16.gmra.mrb[0].mxu0 %v274
  %v1436 = vpop.f32.mrb[0].mxu0
  %v1437 = vadd.f32 0.0, %v1436
  %v1438 = vpop.f32.mrb[0].mxu0
  %v1439 = vadd.f32 0.0, %v1438
  %v1440 = vpop.f32.mrb[0].mxu0
  %v1441 = vadd.f32 0.0, %v1440
  %v1442 = vpop.f32.mrb[0].mxu0
  %v1443 = vadd.f32 0.0, %v1442
  %1444 = vmatprep.mubr.bf16.mxu0 0
  %1445 = vmatmul.mubr.bf16.gmra.mrb[0].mxu0 %v277
  %v1446 = vpop.f32.mrb[0].mxu0
  %v1447 = vadd.f32 0.0, %v1446
  %v1448 = vpop.f32.mrb[0].mxu0
  %v1449 = vadd.f32 0.0, %v1448
  %v1450 = vpop.f32.mrb[0].mxu0
  %v1451 = vadd.f32 0.0, %v1450
  %v1452 = vpop.f32.mrb[0].mxu0
  %v1453 = vadd.f32 0.0, %v1452
  %1454 = vmatprep.mubr.bf16.mxu0 0
  %1455 = vmatmul.mubr.bf16.gmra.mrb[0].mxu0 %v280
  %v1456 = vpop.f32.mrb[0].mxu0
  %v1457 = vadd.f32 0.0, %v1456
  %v1458 = vpop.f32.mrb[0].mxu0
  %v1459 = vadd.f32 0.0, %v1458
  %v1460 = vpop.f32.mrb[0].mxu0
  %v1461 = vadd.f32 0.0, %v1460
  %v1462 = vpop.f32.mrb[0].mxu0
  %v1463 = vadd.f32 0.0, %v1462
  %1464 = vmatprep.mubr.bf16.mxu0 0
  %1465 = vmatmul.mubr.bf16.gmra.mrb[0].mxu0 %v283
  %v1466 = vpop.f32.mrb[0].mxu0
  %v1467 = vadd.f32 0.0, %v1466
  %v1468 = vpop.f32.mrb[0].mxu0
  %v1469 = vadd.f32 0.0, %v1468
  %v1470 = vpop.f32.mrb[0].mxu0
  %v1471 = vadd.f32 0.0, %v1470
  %v1472 = vpop.f32.mrb[0].mxu0
  %v1473 = vadd.f32 0.0, %v1472
  %1474 = vmatprep.mubr.bf16.mxu0 0
  %1475 = vmatmul.mubr.bf16.gmra.mrb[0].mxu0 %v286
  %v1476 = vpop.f32.mrb[0].mxu0
  %v1477 = vadd.f32 0.0, %v1476
  %v1478 = vpop.f32.mrb[0].mxu0
  %v1479 = vadd.f32 0.0, %v1478
  %v1480 = vpop.f32.mrb[0].mxu0
  %v1481 = vadd.f32 0.0, %v1480
  %v1482 = vpop.f32.mrb[0].mxu0
  %v1483 = vadd.f32 0.0, %v1482
  %1484 = vmatprep.mubr.bf16.mxu0 0
  %1485 = vmatmul.mubr.bf16.gmra.mrb[0].mxu0 %v289
  %v1486 = vpop.f32.mrb[0].mxu0
  %v1487 = vadd.f32 0.0, %v1486
  %v1488 = vpop.f32.mrb[0].mxu0
  %v1489 = vadd.f32 0.0, %v1488
  %v1490 = vpop.f32.mrb[0].mxu0
  %v1491 = vadd.f32 0.0, %v1490
  %v1492 = vpop.f32.mrb[0].mxu0
  %v1493 = vadd.f32 0.0, %v1492
  %1494 = vmatprep.mubr.bf16.mxu0 0
  %1495 = vmatmul.mubr.bf16.gmra.mrb[0].mxu0 %v292
  %v1496 = vpop.f32.mrb[0].mxu0
  %v1497 = vadd.f32 0.0, %v1496
  %v1498 = vpop.f32.mrb[0].mxu0
  %v1499 = vadd.f32 0.0, %v1498
  %v1500 = vpop.f32.mrb[0].mxu0
  %v1501 = vadd.f32 0.0, %v1500
  %v1502 = vpop.f32.mrb[0].mxu0
  %v1503 = vadd.f32 0.0, %v1502
  %1504 = vmatprep.mubr.bf16.mxu0 0
  %1505 = vmatmul.mubr.bf16.gmra.mrb[0].mxu0 %v295
  %v1506 = vpop.f32.mrb[0].mxu0
  %v1507 = vadd.f32 0.0, %v1506
  %v1508 = vpop.f32.mrb[0].mxu0
  %v1509 = vadd.f32 0.0, %v1508
  %v1510 = vpop.f32.mrb[0].mxu0
  %v1511 = vadd.f32 0.0, %v1510
  %v1512 = vpop.f32.mrb[0].mxu0
  %v1513 = vadd.f32 0.0, %v1512
  %1514 = vmatprep.mubr.bf16.mxu0 0
  %1515 = vmatmul.mubr.bf16.gmra.mrb[0].mxu0 %v298
  %v1516 = vpop.f32.mrb[0].mxu0
  %v1517 = vadd.f32 0.0, %v1516
  %v1518 = vpop.f32.mrb[0].mxu0
  %v1519 = vadd.f32 0.0, %v1518
  %v1520 = vpop.f32.mrb[0].mxu0
  %v1521 = vadd.f32 0.0, %v1520
  %v1522 = vpop.f32.mrb[0].mxu0
  %v1523 = vadd.f32 0.0, %v1522
  %1524 = vmatprep.mubr.bf16.mxu0 0
  %1525 = vmatmul.mubr.bf16.gmra.mrb[0].mxu0 %v301
  %v1526 = vpop.f32.mrb[0].mxu0
  %v1527 = vadd.f32 0.0, %v1526
  %v1528 = vpop.f32.mrb[0].mxu0
  %v1529 = vadd.f32 0.0, %v1528
  %v1530 = vpop.f32.mrb[0].mxu0
  %v1531 = vadd.f32 0.0, %v1530
  %v1532 = vpop.f32.mrb[0].mxu0
  %v1533 = vadd.f32 0.0, %v1532
  %1534 = vmatprep.mubr.bf16.mxu0 0
  %1535 = vmatmul.mubr.bf16.gmra.mrb[0].mxu0 %v304
  %v1536 = vpop.f32.mrb[0].mxu0
  %v1537 = vadd.f32 0.0, %v1536
  %v1538 = vpop.f32.mrb[0].mxu0
  %v1539 = vadd.f32 0.0, %v1538
  %v1540 = vpop.f32.mrb[0].mxu0
  %v1541 = vadd.f32 0.0, %v1540
  %v1542 = vpop.f32.mrb[0].mxu0
  %v1543 = vadd.f32 0.0, %v1542
  %1544 = vmatprep.mubr.bf16.mxu0 0
  %1545 = vmatmul.mubr.bf16.gmra.mrb[0].mxu0 %v307
  %v1546 = vpop.f32.mrb[0].mxu0
  %v1547 = vadd.f32 0.0, %v1546
  %v1548 = vpop.f32.mrb[0].mxu0
  %v1549 = vadd.f32 0.0, %v1548
  %v1550 = vpop.f32.mrb[0].mxu0
  %v1551 = vadd.f32 0.0, %v1550
  %v1552 = vpop.f32.mrb[0].mxu0
  %v1553 = vadd.f32 0.0, %v1552
  %1554 = vmatprep.mubr.bf16.mxu0 0
  %1555 = vmatmul.mubr.bf16.gmra.mrb[0].mxu0 %v310
  %v1556 = vpop.f32.mrb[0].mxu0
  %v1557 = vadd.f32 0.0, %v1556
  %v1558 = vpop.f32.mrb[0].mxu0
  %v1559 = vadd.f32 0.0, %v1558
  %v1560 = vpop.f32.mrb[0].mxu0
  %v1561 = vadd.f32 0.0, %v1560
  %v1562 = vpop.f32.mrb[0].mxu0
  %v1563 = vadd.f32 0.0, %v1562
  %1564 = vmatprep.mubr.bf16.mxu0 0
  %1565 = vmatmul.mubr.bf16.gmra.mrb[0].mxu0 %v313
  %v1566 = vpop.f32.mrb[0].mxu0
  %v1567 = vadd.f32 0.0, %v1566
  %v1568 = vpop.f32.mrb[0].mxu0
  %v1569 = vadd.f32 0.0, %v1568
  %v1570 = vpop.f32.mrb[0].mxu0
  %v1571 = vadd.f32 0.0, %v1570
  %v1572 = vpop.f32.mrb[0].mxu0
  %v1573 = vadd.f32 0.0, %v1572
  %1574 = vmatprep.mubr.bf16.mxu0 0
  %1575 = vmatmul.mubr.bf16.gmra.mrb[0].mxu0 %v316
  %v1576 = vpop.f32.mrb[0].mxu0
  %v1577 = vadd.f32 0.0, %v1576
  %v1578 = vpop.f32.mrb[0].mxu0
  %v1579 = vadd.f32 0.0, %v1578
  %v1580 = vpop.f32.mrb[0].mxu0
  %v1581 = vadd.f32 0.0, %v1580
  %v1582 = vpop.f32.mrb[0].mxu0
  %v1583 = vadd.f32 0.0, %v1582
  %1584 = vmatprep.mubr.bf16.mxu0 0
  %1585 = vmatmul.mubr.bf16.gmra.mrb[0].mxu0 %v319
  %v1586 = vpop.f32.mrb[0].mxu0
  %v1587 = vadd.f32 0.0, %v1586
  %v1588 = vpop.f32.mrb[0].mxu0
  %v1589 = vadd.f32 0.0, %v1588
  %v1590 = vpop.f32.mrb[0].mxu0
  %v1591 = vadd.f32 0.0, %v1590
  %v1592 = vpop.f32.mrb[0].mxu0
  %v1593 = vadd.f32 0.0, %v1592
  %1594 = vmatprep.mubr.bf16.mxu0 0
  %1595 = vmatmul.mubr.bf16.gmra.mrb[0].mxu0 %v322
  %v1596 = vpop.f32.mrb[0].mxu0
  %v1597 = vadd.f32 0.0, %v1596
  %v1598 = vpop.f32.mrb[0].mxu0
  %v1599 = vadd.f32 0.0, %v1598
  %v1600 = vpop.f32.mrb[0].mxu0
  %v1601 = vadd.f32 0.0, %v1600
  %v1602 = vpop.f32.mrb[0].mxu0
  %v1603 = vadd.f32 0.0, %v1602
  %1604 = vmatprep.mubr.bf16.mxu0 0
  %1605 = vmatmul.mubr.bf16.gmra.mrb[0].mxu0 %v938
  %v1606 = vpop.f32.mrb[0].mxu0
  %v1607 = vadd.f32 0.0, %v1606
  %v1608 = vpop.f32.mrb[0].mxu0
  %v1609 = vadd.f32 0.0, %v1608
  %v1610 = vpop.f32.mrb[0].mxu0
  %v1611 = vadd.f32 0.0, %v1610
  %v1612 = vpop.f32.mrb[0].mxu0
  %v1613 = vadd.f32 0.0, %v1612
  %1614 = vmatprep.mubr.bf16.mxu0 0
  %1615 = vmatmul.mubr.bf16.gmra.mrb[0].mxu0 %v1344
  %v1616 = vpop.f32.mrb[0].mxu0
  %v1617 = vadd.f32 0.0, %v1616
  %v1618 = vpop.f32.mrb[0].mxu0
  %v1619 = vadd.f32 0.0, %v1618
  %v1620 = vpop.f32.mrb[0].mxu0
  %v1621 = vadd.f32 0.0, %v1620
  %v1622 = vpop.f32.mrb[0].mxu0
  %v1623 = vadd.f32 0.0, %v1622
  %1624 = vdwg.mxu0
  %v1625 = vadd.f32 %v1219, %v1387
  %v1626 = vadd.f32 %v1220, %v1389
  %v1627 = vadd.f32 %v1221, %v1391
  %v1628 = vadd.f32 %v1222, %v1393
  %v1629 = vadd.f32 %v1223, %v1397
  %v1630 = vadd.f32 %v1224, %v1399
  %v1631 = vadd.f32 %v1225, %v1401
  %v1632 = vadd.f32 %v1226, %v1403
  %v1633 = vadd.f32 %v1227, %v1407
  %v1634 = vadd.f32 %v1228, %v1409
  %v1635 = vadd.f32 %v1229, %v1411
  %v1636 = vadd.f32 %v1230, %v1413
  %v1637 = vadd.f32 %v1231, %v1417
  %v1638 = vadd.f32 %v1232, %v1419
  %v1639 = vadd.f32 %v1233, %v1421
  %v1640 = vadd.f32 %v1234, %v1423
  %v1641 = vadd.f32 %v1235, %v1427
  %v1642 = vadd.f32 %v1236, %v1429
  %v1643 = vadd.f32 %v1237, %v1431
  %v1644 = vadd.f32 %v1238, %v1433
  %v1645 = vadd.f32 %v1239, %v1437
  %v1646 = vadd.f32 %v1240, %v1439
  %v1647 = vadd.f32 %v1241, %v1441
  %v1648 = vadd.f32 %v1242, %v1443
  %v1649 = vadd.f32 %v1243, %v1447
  %v1650 = vadd.f32 %v1244, %v1449
  %v1651 = vadd.f32 %v1245, %v1451
  %v1652 = vadd.f32 %v1246, %v1453
  %v1653 = vadd.f32 %v1247, %v1457
  %v1654 = vadd.f32 %v1248, %v1459
  %v1655 = vadd.f32 %v1249, %v1461
  %v1656 = vadd.f32 %v1250, %v1463
  %v1657 = vadd.f32 %v1251, %v1467
  %v1658 = vadd.f32 %v1252, %v1469
  %v1659 = vadd.f32 %v1253, %v1471
  %v1660 = vadd.f32 %v1254, %v1473
  %v1661 = vadd.f32 %v1255, %v1477
  %v1662 = vadd.f32 %v1256, %v1479
  %v1663 = vadd.f32 %v1257, %v1481
  %v1664 = vadd.f32 %v1258, %v1483
  %v1665 = vadd.f32 %v1259, %v1487
  %v1666 = vadd.f32 %v1260, %v1489
  %v1667 = vadd.f32 %v1261, %v1491
  %v1668 = vadd.f32 %v1262, %v1493
  %v1669 = vadd.f32 %v1263, %v1497
  %v1670 = vadd.f32 %v1264, %v1499
  %v1671 = vadd.f32 %v1265, %v1501
  %v1672 = vadd.f32 %v1266, %v1503
  %v1673 = vadd.f32 %v1267, %v1507
  %v1674 = vadd.f32 %v1268, %v1509
  %v1675 = vadd.f32 %v1269, %v1511
  %v1676 = vadd.f32 %v1270, %v1513
  %v1677 = vadd.f32 %v1271, %v1517
  %v1678 = vadd.f32 %v1272, %v1519
  %v1679 = vadd.f32 %v1273, %v1521
  %v1680 = vadd.f32 %v1274, %v1523
  %v1681 = vadd.f32 %v1275, %v1527
  %v1682 = vadd.f32 %v1276, %v1529
  %v1683 = vadd.f32 %v1277, %v1531
  %v1684 = vadd.f32 %v1278, %v1533
  %v1685 = vadd.f32 %v1279, %v1537
  %v1686 = vadd.f32 %v1280, %v1539
  %v1687 = vadd.f32 %v1281, %v1541
  %v1688 = vadd.f32 %v1282, %v1543
  %v1689 = vadd.f32 %v1283, %v1547
  %v1690 = vadd.f32 %v1284, %v1549
  %v1691 = vadd.f32 %v1285, %v1551
  %v1692 = vadd.f32 %v1286, %v1553
  %v1693 = vadd.f32 %v1287, %v1557
  %v1694 = vadd.f32 %v1288, %v1559
  %v1695 = vadd.f32 %v1289, %v1561
  %v1696 = vadd.f32 %v1290, %v1563
  %v1697 = vadd.f32 %v1291, %v1567
  %v1698 = vadd.f32 %v1292, %v1569
  %v1699 = vadd.f32 %v1293, %v1571
  %v1700 = vadd.f32 %v1294, %v1573
  %v1701 = vadd.f32 %v1295, %v1577
  %v1702 = vadd.f32 %v1296, %v1579
  %v1703 = vadd.f32 %v1297, %v1581
  %v1704 = vadd.f32 %v1298, %v1583
  %v1705 = vadd.f32 %v1299, %v1587
  %v1706 = vadd.f32 %v1300, %v1589
  %v1707 = vadd.f32 %v1301, %v1591
  %v1708 = vadd.f32 %v1302, %v1593
  %v1709 = vadd.f32 %v1303, %v1597
  %v1710 = vadd.f32 %v1304, %v1599
  %v1711 = vadd.f32 %v1305, %v1601
  %v1712 = vadd.f32 %v1306, %v1603
  %v1713 = vadd.f32 %v1307, %v1607
  %v1714 = vadd.f32 %v1308, %v1609
  %v1715 = vadd.f32 %v1309, %v1611
  %v1716 = vadd.f32 %v1310, %v1613
  %v1717 = vadd.f32 %v1311, %v1617
  %v1718 = vadd.f32 %v1312, %v1619
  %v1719 = vadd.f32 %v1313, %v1621
  %v1720 = vadd.f32 %v1314, %v1623
  %s1721 = scalar_lea.vmem %s1, 128
  %v1722 = vld [vmem:[%s1721] sm:$0xff]
  %v1723 = vld [vmem:[%s1721 + $0x8] sm:$0xff]
  %v1724 = vld [vmem:[%s1721 + $0x10] sm:$0xff]
  %v1725 = vld [vmem:[%s1721 + $0x18] sm:$0x33]
  %v1728 = vunpack.c.l.b16 %v102
  %v1729 = vunpack.c.l.b16 %v103
  %v1730 = vpack.c.b16 %v1729, %v1728
  %v1735 = vunpack.c.l.b16 %v1722
  %v1736 = vunpack.c.h.b16 %v1722
  %v1737 = vunpack.c.l.b16 %v1723
  %v1738 = vunpack.c.h.b16 %v1723
  %v1739 = vunpack.c.l.b16 %v1724
  %v1740 = vunpack.c.h.b16 %v1724
  %v1741 = vunpack.c.l.b16 %v1725
  %v1742 = vunpack.c.h.b16 %v1725
  %v1743 = vpack.c.b16 %v1737, %v1735
  %v1744 = vpack.c.b16 %v1738, %v1736
  %v1745 = vpack.c.b16 %v1741, %v1739
  %v1746 = vpack.c.b16 %v1742, %v1740
  %v1750 = vsel %vm251, %v1730, 0
  %v1753 = vsel %vm324, %v1745, 0
  %v1756 = vsel %vm324, %v1746, 0
  %1758 = vmatprep.subr.bf16.mxu0 %v1744
  %1759 = vmatpush1.bf16.msra.mxu0 %v1743
  %1760 = vmatprep.subr.bf16.mxu0 %v1756
  %1761 = vmatpush1.bf16.msra.mxu0 %v1753
  %1762 = vmatprep.subr.bf16.mxu0 0
  %1763 = vmatpush1.bf16.msra.mxu0 0
  %1764 = vmatprep.subr.bf16.mxu0 0
  %1765 = vmatpush1.bf16.msra.mxu0 0
  %1766 = vmatprep.subr.bf16.mxu0 0
  %1767 = vmatpush1.bf16.msra.mxu0 0
  %1768 = vmatprep.subr.bf16.mxu0 0
  %1769 = vmatpush1.bf16.msra.mxu0 0
  %1770 = vmatprep.subr.bf16.mxu0 0
  %1771 = vmatpush1.bf16.msra.mxu0 0
  %1772 = vmatprep.subr.bf16.mxu0 0
  %1773 = vmatpush1.bf16.msra.mxu0 0
  %1774 = vmatprep.subr.bf16.mxu0 0
  %1775 = vmatpush1.bf16.msra.mxu0 0
  %1776 = vmatprep.subr.bf16.mxu0 0
  %1777 = vmatpush1.bf16.msra.mxu0 0
  %1778 = vmatprep.subr.bf16.mxu0 0
  %1779 = vmatpush1.bf16.msra.mxu0 0
  %1780 = vmatprep.subr.bf16.mxu0 0
  %1781 = vmatpush1.bf16.msra.mxu0 0
  %1782 = vmatprep.subr.bf16.mxu0 0
  %1783 = vmatpush1.bf16.msra.mxu0 0
  %1784 = vmatprep.subr.bf16.mxu0 0
  %1785 = vmatpush1.bf16.msra.mxu0 0
  %1786 = vmatprep.subr.bf16.mxu0 0
  %1787 = vmatpush1.bf16.msra.mxu0 0
  %1788 = vmatprep.subr.bf16.mxu0 0
  %1789 = vmatpush1.bf16.msra.mxu0 0
  %1790 = vmatprep.mubr.bf16.mxu0 0
  %1791 = vmatmul.mubr.bf16.gmra.mrb[0].mxu0 %v262
  %v1792 = vpop.f32.mrb[0].mxu0
  %v1793 = vadd.f32 0.0, %v1792
  %v1794 = vpop.f32.mrb[0].mxu0
  %v1795 = vadd.f32 0.0, %v1794
  %v1796 = vpop.f32.mrb[0].mxu0
  %v1797 = vadd.f32 0.0, %v1796
  %v1798 = vpop.f32.mrb[0].mxu0
  %v1799 = vadd.f32 0.0, %v1798
  %1800 = vmatprep.mubr.bf16.mxu0 0
  %1801 = vmatmul.mubr.bf16.gmra.mrb[0].mxu0 %v265
  %v1802 = vpop.f32.mrb[0].mxu0
  %v1803 = vadd.f32 0.0, %v1802
  %v1804 = vpop.f32.mrb[0].mxu0
  %v1805 = vadd.f32 0.0, %v1804
  %v1806 = vpop.f32.mrb[0].mxu0
  %v1807 = vadd.f32 0.0, %v1806
  %v1808 = vpop.f32.mrb[0].mxu0
  %v1809 = vadd.f32 0.0, %v1808
  %1810 = vmatprep.mubr.bf16.mxu0 0
  %1811 = vmatmul.mubr.bf16.gmra.mrb[0].mxu0 %v268
  %v1812 = vpop.f32.mrb[0].mxu0
  %v1813 = vadd.f32 0.0, %v1812
  %v1814 = vpop.f32.mrb[0].mxu0
  %v1815 = vadd.f32 0.0, %v1814
  %v1816 = vpop.f32.mrb[0].mxu0
  %v1817 = vadd.f32 0.0, %v1816
  %v1818 = vpop.f32.mrb[0].mxu0
  %v1819 = vadd.f32 0.0, %v1818
  %1820 = vmatprep.mubr.bf16.mxu0 0
  %1821 = vmatmul.mubr.bf16.gmra.mrb[0].mxu0 %v271
  %v1822 = vpop.f32.mrb[0].mxu0
  %v1823 = vadd.f32 0.0, %v1822
  %v1824 = vpop.f32.mrb[0].mxu0
  %v1825 = vadd.f32 0.0, %v1824
  %v1826 = vpop.f32.mrb[0].mxu0
  %v1827 = vadd.f32 0.0, %v1826
  %v1828 = vpop.f32.mrb[0].mxu0
  %v1829 = vadd.f32 0.0, %v1828
  %1830 = vmatprep.mubr.bf16.mxu0 0
  %1831 = vmatmul.mubr.bf16.gmra.mrb[0].mxu0 %v274
  %v1832 = vpop.f32.mrb[0].mxu0
  %v1833 = vadd.f32 0.0, %v1832
  %v1834 = vpop.f32.mrb[0].mxu0
  %v1835 = vadd.f32 0.0, %v1834
  %v1836 = vpop.f32.mrb[0].mxu0
  %v1837 = vadd.f32 0.0, %v1836
  %v1838 = vpop.f32.mrb[0].mxu0
  %v1839 = vadd.f32 0.0, %v1838
  %1840 = vmatprep.mubr.bf16.mxu0 0
  %1841 = vmatmul.mubr.bf16.gmra.mrb[0].mxu0 %v277
  %v1842 = vpop.f32.mrb[0].mxu0
  %v1843 = vadd.f32 0.0, %v1842
  %v1844 = vpop.f32.mrb[0].mxu0
  %v1845 = vadd.f32 0.0, %v1844
  %v1846 = vpop.f32.mrb[0].mxu0
  %v1847 = vadd.f32 0.0, %v1846
  %v1848 = vpop.f32.mrb[0].mxu0
  %v1849 = vadd.f32 0.0, %v1848
  %1850 = vmatprep.mubr.bf16.mxu0 0
  %1851 = vmatmul.mubr.bf16.gmra.mrb[0].mxu0 %v280
  %v1852 = vpop.f32.mrb[0].mxu0
  %v1853 = vadd.f32 0.0, %v1852
  %v1854 = vpop.f32.mrb[0].mxu0
  %v1855 = vadd.f32 0.0, %v1854
  %v1856 = vpop.f32.mrb[0].mxu0
  %v1857 = vadd.f32 0.0, %v1856
  %v1858 = vpop.f32.mrb[0].mxu0
  %v1859 = vadd.f32 0.0, %v1858
  %1860 = vmatprep.mubr.bf16.mxu0 0
  %1861 = vmatmul.mubr.bf16.gmra.mrb[0].mxu0 %v283
  %v1862 = vpop.f32.mrb[0].mxu0
  %v1863 = vadd.f32 0.0, %v1862
  %v1864 = vpop.f32.mrb[0].mxu0
  %v1865 = vadd.f32 0.0, %v1864
  %v1866 = vpop.f32.mrb[0].mxu0
  %v1867 = vadd.f32 0.0, %v1866
  %v1868 = vpop.f32.mrb[0].mxu0
  %v1869 = vadd.f32 0.0, %v1868
  %1870 = vmatprep.mubr.bf16.mxu0 0
  %1871 = vmatmul.mubr.bf16.gmra.mrb[0].mxu0 %v286
  %v1872 = vpop.f32.mrb[0].mxu0
  %v1873 = vadd.f32 0.0, %v1872
  %v1874 = vpop.f32.mrb[0].mxu0
  %v1875 = vadd.f32 0.0, %v1874
  %v1876 = vpop.f32.mrb[0].mxu0
  %v1877 = vadd.f32 0.0, %v1876
  %v1878 = vpop.f32.mrb[0].mxu0
  %v1879 = vadd.f32 0.0, %v1878
  %1880 = vmatprep.mubr.bf16.mxu0 0
  %1881 = vmatmul.mubr.bf16.gmra.mrb[0].mxu0 %v289
  %v1882 = vpop.f32.mrb[0].mxu0
  %v1883 = vadd.f32 0.0, %v1882
  %v1884 = vpop.f32.mrb[0].mxu0
  %v1885 = vadd.f32 0.0, %v1884
  %v1886 = vpop.f32.mrb[0].mxu0
  %v1887 = vadd.f32 0.0, %v1886
  %v1888 = vpop.f32.mrb[0].mxu0
  %v1889 = vadd.f32 0.0, %v1888
  %1890 = vmatprep.mubr.bf16.mxu0 0
  %1891 = vmatmul.mubr.bf16.gmra.mrb[0].mxu0 %v292
  %v1892 = vpop.f32.mrb[0].mxu0
  %v1893 = vadd.f32 0.0, %v1892
  %v1894 = vpop.f32.mrb[0].mxu0
  %v1895 = vadd.f32 0.0, %v1894
  %v1896 = vpop.f32.mrb[0].mxu0
  %v1897 = vadd.f32 0.0, %v1896
  %v1898 = vpop.f32.mrb[0].mxu0
  %v1899 = vadd.f32 0.0, %v1898
  %1900 = vmatprep.mubr.bf16.mxu0 0
  %1901 = vmatmul.mubr.bf16.gmra.mrb[0].mxu0 %v295
  %v1902 = vpop.f32.mrb[0].mxu0
  %v1903 = vadd.f32 0.0, %v1902
  %v1904 = vpop.f32.mrb[0].mxu0
  %v1905 = vadd.f32 0.0, %v1904
  %v1906 = vpop.f32.mrb[0].mxu0
  %v1907 = vadd.f32 0.0, %v1906
  %v1908 = vpop.f32.mrb[0].mxu0
  %v1909 = vadd.f32 0.0, %v1908
  %1910 = vmatprep.mubr.bf16.mxu0 0
  %1911 = vmatmul.mubr.bf16.gmra.mrb[0].mxu0 %v298
  %v1912 = vpop.f32.mrb[0].mxu0
  %v1913 = vadd.f32 0.0, %v1912
  %v1914 = vpop.f32.mrb[0].mxu0
  %v1915 = vadd.f32 0.0, %v1914
  %v1916 = vpop.f32.mrb[0].mxu0
  %v1917 = vadd.f32 0.0, %v1916
  %v1918 = vpop.f32.mrb[0].mxu0
  %v1919 = vadd.f32 0.0, %v1918
  %1920 = vmatprep.mubr.bf16.mxu0 0
  %1921 = vmatmul.mubr.bf16.gmra.mrb[0].mxu0 %v301
  %v1922 = vpop.f32.mrb[0].mxu0
  %v1923 = vadd.f32 0.0, %v1922
  %v1924 = vpop.f32.mrb[0].mxu0
  %v1925 = vadd.f32 0.0, %v1924
  %v1926 = vpop.f32.mrb[0].mxu0
  %v1927 = vadd.f32 0.0, %v1926
  %v1928 = vpop.f32.mrb[0].mxu0
  %v1929 = vadd.f32 0.0, %v1928
  %1930 = vmatprep.mubr.bf16.mxu0 0
  %1931 = vmatmul.mubr.bf16.gmra.mrb[0].mxu0 %v304
  %v1932 = vpop.f32.mrb[0].mxu0
  %v1933 = vadd.f32 0.0, %v1932
  %v1934 = vpop.f32.mrb[0].mxu0
  %v1935 = vadd.f32 0.0, %v1934
  %v1936 = vpop.f32.mrb[0].mxu0
  %v1937 = vadd.f32 0.0, %v1936
  %v1938 = vpop.f32.mrb[0].mxu0
  %v1939 = vadd.f32 0.0, %v1938
  %1940 = vmatprep.mubr.bf16.mxu0 0
  %1941 = vmatmul.mubr.bf16.gmra.mrb[0].mxu0 %v307
  %v1942 = vpop.f32.mrb[0].mxu0
  %v1943 = vadd.f32 0.0, %v1942
  %v1944 = vpop.f32.mrb[0].mxu0
  %v1945 = vadd.f32 0.0, %v1944
  %v1946 = vpop.f32.mrb[0].mxu0
  %v1947 = vadd.f32 0.0, %v1946
  %v1948 = vpop.f32.mrb[0].mxu0
  %v1949 = vadd.f32 0.0, %v1948
  %1950 = vmatprep.mubr.bf16.mxu0 0
  %1951 = vmatmul.mubr.bf16.gmra.mrb[0].mxu0 %v310
  %v1952 = vpop.f32.mrb[0].mxu0
  %v1953 = vadd.f32 0.0, %v1952
  %v1954 = vpop.f32.mrb[0].mxu0
  %v1955 = vadd.f32 0.0, %v1954
  %v1956 = vpop.f32.mrb[0].mxu0
  %v1957 = vadd.f32 0.0, %v1956
  %v1958 = vpop.f32.mrb[0].mxu0
  %v1959 = vadd.f32 0.0, %v1958
  %1960 = vmatprep.mubr.bf16.mxu0 0
  %1961 = vmatmul.mubr.bf16.gmra.mrb[0].mxu0 %v313
  %v1962 = vpop.f32.mrb[0].mxu0
  %v1963 = vadd.f32 0.0, %v1962
  %v1964 = vpop.f32.mrb[0].mxu0
  %v1965 = vadd.f32 0.0, %v1964
  %v1966 = vpop.f32.mrb[0].mxu0
  %v1967 = vadd.f32 0.0, %v1966
  %v1968 = vpop.f32.mrb[0].mxu0
  %v1969 = vadd.f32 0.0, %v1968
  %1970 = vmatprep.mubr.bf16.mxu0 0
  %1971 = vmatmul.mubr.bf16.gmra.mrb[0].mxu0 %v316
  %v1972 = vpop.f32.mrb[0].mxu0
  %v1973 = vadd.f32 0.0, %v1972
  %v1974 = vpop.f32.mrb[0].mxu0
  %v1975 = vadd.f32 0.0, %v1974
  %v1976 = vpop.f32.mrb[0].mxu0
  %v1977 = vadd.f32 0.0, %v1976
  %v1978 = vpop.f32.mrb[0].mxu0
  %v1979 = vadd.f32 0.0, %v1978
  %1980 = vmatprep.mubr.bf16.mxu0 0
  %1981 = vmatmul.mubr.bf16.gmra.mrb[0].mxu0 %v319
  %v1982 = vpop.f32.mrb[0].mxu0
  %v1983 = vadd.f32 0.0, %v1982
  %v1984 = vpop.f32.mrb[0].mxu0
  %v1985 = vadd.f32 0.0, %v1984
  %v1986 = vpop.f32.mrb[0].mxu0
  %v1987 = vadd.f32 0.0, %v1986
  %v1988 = vpop.f32.mrb[0].mxu0
  %v1989 = vadd.f32 0.0, %v1988
  %1990 = vmatprep.mubr.bf16.mxu0 0
  %1991 = vmatmul.mubr.bf16.gmra.mrb[0].mxu0 %v322
  %v1992 = vpop.f32.mrb[0].mxu0
  %v1993 = vadd.f32 0.0, %v1992
  %v1994 = vpop.f32.mrb[0].mxu0
  %v1995 = vadd.f32 0.0, %v1994
  %v1996 = vpop.f32.mrb[0].mxu0
  %v1997 = vadd.f32 0.0, %v1996
  %v1998 = vpop.f32.mrb[0].mxu0
  %v1999 = vadd.f32 0.0, %v1998
  %2000 = vmatprep.mubr.bf16.mxu0 0
  %2001 = vmatmul.mubr.bf16.gmra.mrb[0].mxu0 %v938
  %v2002 = vpop.f32.mrb[0].mxu0
  %v2003 = vadd.f32 0.0, %v2002
  %v2004 = vpop.f32.mrb[0].mxu0
  %v2005 = vadd.f32 0.0, %v2004
  %v2006 = vpop.f32.mrb[0].mxu0
  %v2007 = vadd.f32 0.0, %v2006
  %v2008 = vpop.f32.mrb[0].mxu0
  %v2009 = vadd.f32 0.0, %v2008
  %2010 = vmatprep.mubr.bf16.mxu0 0
  %2011 = vmatmul.mubr.bf16.gmra.mrb[0].mxu0 %v1344
  %v2012 = vpop.f32.mrb[0].mxu0
  %v2013 = vadd.f32 0.0, %v2012
  %v2014 = vpop.f32.mrb[0].mxu0
  %v2015 = vadd.f32 0.0, %v2014
  %v2016 = vpop.f32.mrb[0].mxu0
  %v2017 = vadd.f32 0.0, %v2016
  %v2018 = vpop.f32.mrb[0].mxu0
  %v2019 = vadd.f32 0.0, %v2018
  %2020 = vmatprep.mubr.bf16.mxu0 0
  %2021 = vmatmul.mubr.bf16.gmra.mrb[0].mxu0 %v1750
  %v2022 = vpop.f32.mrb[0].mxu0
  %v2023 = vadd.f32 0.0, %v2022
  %v2024 = vpop.f32.mrb[0].mxu0
  %v2025 = vadd.f32 0.0, %v2024
  %v2026 = vpop.f32.mrb[0].mxu0
  %v2027 = vadd.f32 0.0, %v2026
  %v2028 = vpop.f32.mrb[0].mxu0
  %v2029 = vadd.f32 0.0, %v2028
  %2030 = vdwg.mxu0
  %v2031 = vadd.f32 %v1625, %v1793
  %v2032 = vadd.f32 %v1626, %v1795
  %v2033 = vadd.f32 %v1627, %v1797
  %v2034 = vadd.f32 %v1628, %v1799
  %v2035 = vadd.f32 %v1629, %v1803
  %v2036 = vadd.f32 %v1630, %v1805
  %v2037 = vadd.f32 %v1631, %v1807
  %v2038 = vadd.f32 %v1632, %v1809
  %v2039 = vadd.f32 %v1633, %v1813
  %v2040 = vadd.f32 %v1634, %v1815
  %v2041 = vadd.f32 %v1635, %v1817
  %v2042 = vadd.f32 %v1636, %v1819
  %v2043 = vadd.f32 %v1637, %v1823
  %v2044 = vadd.f32 %v1638, %v1825
  %v2045 = vadd.f32 %v1639, %v1827
  %v2046 = vadd.f32 %v1640, %v1829
  %v2047 = vadd.f32 %v1641, %v1833
  %v2048 = vadd.f32 %v1642, %v1835
  %v2049 = vadd.f32 %v1643, %v1837
  %v2050 = vadd.f32 %v1644, %v1839
  %v2051 = vadd.f32 %v1645, %v1843
  %v2052 = vadd.f32 %v1646, %v1845
  %v2053 = vadd.f32 %v1647, %v1847
  %v2054 = vadd.f32 %v1648, %v1849
  %v2055 = vadd.f32 %v1649, %v1853
  %v2056 = vadd.f32 %v1650, %v1855
  %v2057 = vadd.f32 %v1651, %v1857
  %v2058 = vadd.f32 %v1652, %v1859
  %v2059 = vadd.f32 %v1653, %v1863
  %v2060 = vadd.f32 %v1654, %v1865
  %v2061 = vadd.f32 %v1655, %v1867
  %v2062 = vadd.f32 %v1656, %v1869
  %v2063 = vadd.f32 %v1657, %v1873
  %v2064 = vadd.f32 %v1658, %v1875
  %v2065 = vadd.f32 %v1659, %v1877
  %v2066 = vadd.f32 %v1660, %v1879
  %v2067 = vadd.f32 %v1661, %v1883
  %v2068 = vadd.f32 %v1662, %v1885
  %v2069 = vadd.f32 %v1663, %v1887
  %v2070 = vadd.f32 %v1664, %v1889
  %v2071 = vadd.f32 %v1665, %v1893
  %v2072 = vadd.f32 %v1666, %v1895
  %v2073 = vadd.f32 %v1667, %v1897
  %v2074 = vadd.f32 %v1668, %v1899
  %v2075 = vadd.f32 %v1669, %v1903
  %v2076 = vadd.f32 %v1670, %v1905
  %v2077 = vadd.f32 %v1671, %v1907
  %v2078 = vadd.f32 %v1672, %v1909
  %v2079 = vadd.f32 %v1673, %v1913
  %v2080 = vadd.f32 %v1674, %v1915
  %v2081 = vadd.f32 %v1675, %v1917
  %v2082 = vadd.f32 %v1676, %v1919
  %v2083 = vadd.f32 %v1677, %v1923
  %v2084 = vadd.f32 %v1678, %v1925
  %v2085 = vadd.f32 %v1679, %v1927
  %v2086 = vadd.f32 %v1680, %v1929
  %v2087 = vadd.f32 %v1681, %v1933
  %v2088 = vadd.f32 %v1682, %v1935
  %v2089 = vadd.f32 %v1683, %v1937
  %v2090 = vadd.f32 %v1684, %v1939
  %v2091 = vadd.f32 %v1685, %v1943
  %v2092 = vadd.f32 %v1686, %v1945
  %v2093 = vadd.f32 %v1687, %v1947
  %v2094 = vadd.f32 %v1688, %v1949
  %v2095 = vadd.f32 %v1689, %v1953
  %v2096 = vadd.f32 %v1690, %v1955
  %v2097 = vadd.f32 %v1691, %v1957
  %v2098 = vadd.f32 %v1692, %v1959
  %v2099 = vadd.f32 %v1693, %v1963
  %v2100 = vadd.f32 %v1694, %v1965
  %v2101 = vadd.f32 %v1695, %v1967
  %v2102 = vadd.f32 %v1696, %v1969
  %v2103 = vadd.f32 %v1697, %v1973
  %v2104 = vadd.f32 %v1698, %v1975
  %v2105 = vadd.f32 %v1699, %v1977
  %v2106 = vadd.f32 %v1700, %v1979
  %v2107 = vadd.f32 %v1701, %v1983
  %v2108 = vadd.f32 %v1702, %v1985
  %v2109 = vadd.f32 %v1703, %v1987
  %v2110 = vadd.f32 %v1704, %v1989
  %v2111 = vadd.f32 %v1705, %v1993
  %v2112 = vadd.f32 %v1706, %v1995
  %v2113 = vadd.f32 %v1707, %v1997
  %v2114 = vadd.f32 %v1708, %v1999
  %v2115 = vadd.f32 %v1709, %v2003
  %v2116 = vadd.f32 %v1710, %v2005
  %v2117 = vadd.f32 %v1711, %v2007
  %v2118 = vadd.f32 %v1712, %v2009
  %v2119 = vadd.f32 %v1713, %v2013
  %v2120 = vadd.f32 %v1714, %v2015
  %v2121 = vadd.f32 %v1715, %v2017
  %v2122 = vadd.f32 %v1716, %v2019
  %v2123 = vadd.f32 %v1717, %v2023
  %v2124 = vadd.f32 %v1718, %v2025
  %v2125 = vadd.f32 %v1719, %v2027
  %v2126 = vadd.f32 %v1720, %v2029
  %v2127 = vmax.f32 %v2031, %v2035
  %v2128 = vmax.f32 %v2032, %v2036
  %v2129 = vmax.f32 %v2033, %v2037
  %v2130 = vmax.f32 %v2034, %v2038
  %v2131 = vmax.f32 %v2039, %v2043
  %v2132 = vmax.f32 %v2040, %v2044
  %v2133 = vmax.f32 %v2041, %v2045
  %v2134 = vmax.f32 %v2042, %v2046
  %v2135 = vmax.f32 %v2047, %v2051
  %v2136 = vmax.f32 %v2048, %v2052
  %v2137 = vmax.f32 %v2049, %v2053
  %v2138 = vmax.f32 %v2050, %v2054
  %v2139 = vmax.f32 %v2055, %v2059
  %v2140 = vmax.f32 %v2056, %v2060
  %v2141 = vmax.f32 %v2057, %v2061
  %v2142 = vmax.f32 %v2058, %v2062
  %v2143 = vmax.f32 %v2063, %v2067
  %v2144 = vmax.f32 %v2064, %v2068
  %v2145 = vmax.f32 %v2065, %v2069
  %v2146 = vmax.f32 %v2066, %v2070
  %v2147 = vmax.f32 %v2071, %v2075
  %v2148 = vmax.f32 %v2072, %v2076
  %v2149 = vmax.f32 %v2073, %v2077
  %v2150 = vmax.f32 %v2074, %v2078
  %v2151 = vmax.f32 %v2079, %v2083
  %v2152 = vmax.f32 %v2080, %v2084
  %v2153 = vmax.f32 %v2081, %v2085
  %v2154 = vmax.f32 %v2082, %v2086
  %v2155 = vmax.f32 %v2087, %v2091
  %v2156 = vmax.f32 %v2088, %v2092
  %v2157 = vmax.f32 %v2089, %v2093
  %v2158 = vmax.f32 %v2090, %v2094
  %v2159 = vmax.f32 %v2095, %v2099
  %v2160 = vmax.f32 %v2096, %v2100
  %v2161 = vmax.f32 %v2097, %v2101
  %v2162 = vmax.f32 %v2098, %v2102
  %v2163 = vmax.f32 %v2103, %v2107
  %v2164 = vmax.f32 %v2104, %v2108
  %v2165 = vmax.f32 %v2105, %v2109
  %v2166 = vmax.f32 %v2106, %v2110
  %v2167 = vmax.f32 %v2111, %v2115
  %v2168 = vmax.f32 %v2112, %v2116
  %v2169 = vmax.f32 %v2113, %v2117
  %v2170 = vmax.f32 %v2114, %v2118
  %v2171 = vmax.f32 %v2119, %v2123
  %v2172 = vmax.f32 %v2120, %v2124
  %v2173 = vmax.f32 %v2121, %v2125
  %v2174 = vmax.f32 %v2122, %v2126
  %v2175 = vld [vmem:[%s2] sm:$0x3]
  %v2177 = vlaneseq
  %v2178 = vshrl.u32 %v2177, 7
  %v2179 = vsub.s32 0, %v2178
  %v2180 = vrot.slane %v2175, %v2179
  %v2181 = vlaneseq
  %v2182 = vshrl.u32 %v2181, 7
  %v2183 = vsub.s32 1, %v2182
  %v2184 = vrot.slane %v2175, %v2183
  %v2187 = vadd.f32 %v2127, %v2180
  %v2188 = vadd.f32 %v2128, %v2184
  %v2189 = vadd.f32 %v2129, %v2180
  %v2190 = vadd.f32 %v2130, %v2184
  %v2191 = vadd.f32 %v2131, %v2180
  %v2192 = vadd.f32 %v2132, %v2184
  %v2193 = vadd.f32 %v2133, %v2180
  %v2194 = vadd.f32 %v2134, %v2184
  %v2195 = vadd.f32 %v2135, %v2180
  %v2196 = vadd.f32 %v2136, %v2184
  %v2197 = vadd.f32 %v2137, %v2180
  %v2198 = vadd.f32 %v2138, %v2184
  %v2199 = vadd.f32 %v2139, %v2180
  %v2200 = vadd.f32 %v2140, %v2184
  %v2201 = vadd.f32 %v2141, %v2180
  %v2202 = vadd.f32 %v2142, %v2184
  %v2203 = vadd.f32 %v2143, %v2180
  %v2204 = vadd.f32 %v2144, %v2184
  %v2205 = vadd.f32 %v2145, %v2180
  %v2206 = vadd.f32 %v2146, %v2184
  %v2207 = vadd.f32 %v2147, %v2180
  %v2208 = vadd.f32 %v2148, %v2184
  %v2209 = vadd.f32 %v2149, %v2180
  %v2210 = vadd.f32 %v2150, %v2184
  %v2211 = vadd.f32 %v2151, %v2180
  %v2212 = vadd.f32 %v2152, %v2184
  %v2213 = vadd.f32 %v2153, %v2180
  %v2214 = vadd.f32 %v2154, %v2184
  %v2215 = vadd.f32 %v2155, %v2180
  %v2216 = vadd.f32 %v2156, %v2184
  %v2217 = vadd.f32 %v2157, %v2180
  %v2218 = vadd.f32 %v2158, %v2184
  %v2219 = vadd.f32 %v2159, %v2180
  %v2220 = vadd.f32 %v2160, %v2184
  %v2221 = vadd.f32 %v2161, %v2180
  %v2222 = vadd.f32 %v2162, %v2184
  %v2223 = vadd.f32 %v2163, %v2180
  %v2224 = vadd.f32 %v2164, %v2184
  %v2225 = vadd.f32 %v2165, %v2180
  %v2226 = vadd.f32 %v2166, %v2184
  %v2227 = vadd.f32 %v2167, %v2180
  %v2228 = vadd.f32 %v2168, %v2184
  %v2229 = vadd.f32 %v2169, %v2180
  %v2230 = vadd.f32 %v2170, %v2184
  %v2231 = vadd.f32 %v2171, %v2180
  %v2232 = vadd.f32 %v2172, %v2184
  %v2233 = vadd.f32 %v2173, %v2180
  %v2234 = vadd.f32 %v2174, %v2184
  %v2235 = vpack.c.bf16 %v2189, %v2187
  %v2236 = vpack.c.bf16 %v2190, %v2188
  %v2237 = vpack.c.bf16 %v2193, %v2191
  %v2238 = vpack.c.bf16 %v2194, %v2192
  %v2239 = vpack.c.bf16 %v2197, %v2195
  %v2240 = vpack.c.bf16 %v2198, %v2196
  %v2241 = vpack.c.bf16 %v2201, %v2199
  %v2242 = vpack.c.bf16 %v2202, %v2200
  %v2243 = vpack.c.bf16 %v2205, %v2203
  %v2244 = vpack.c.bf16 %v2206, %v2204
  %v2245 = vpack.c.bf16 %v2209, %v2207
  %v2246 = vpack.c.bf16 %v2210, %v2208
  %v2247 = vpack.c.bf16 %v2213, %v2211
  %v2248 = vpack.c.bf16 %v2214, %v2212
  %v2249 = vpack.c.bf16 %v2217, %v2215
  %v2250 = vpack.c.bf16 %v2218, %v2216
  %v2251 = vpack.c.bf16 %v2221, %v2219
  %v2252 = vpack.c.bf16 %v2222, %v2220
  %v2253 = vpack.c.bf16 %v2225, %v2223
  %v2254 = vpack.c.bf16 %v2226, %v2224
  %v2255 = vpack.c.bf16 %v2229, %v2227
  %v2256 = vpack.c.bf16 %v2230, %v2228
  %v2257 = vpack.c.bf16 %v2233, %v2231
  %v2258 = vpack.c.bf16 %v2234, %v2232
  %v2259 = vld [vmem:[%s3] sm:$0xf]
  %v2260 = vld [vmem:[%s3 + $0x4] sm:$0xf]
  %v2261 = vld [vmem:[%s3 + $0x8] sm:$0xf]
  %v2262 = vld [vmem:[%s3 + $0xc] sm:$0xf]
  %v2263 = vld [vmem:[%s3 + $0x10] sm:$0xf]
  %v2264 = vld [vmem:[%s3 + $0x14] sm:$0xf]
  %v2265 = vld [vmem:[%s3 + $0x18] sm:$0xf]
  %v2266 = vld [vmem:[%s3 + $0x1c] sm:$0xf]
  %v2267 = vld [vmem:[%s3 + $0x20] sm:$0xf]
  %v2268 = vld [vmem:[%s3 + $0x24] sm:$0xf]
  %v2269 = vld [vmem:[%s3 + $0x28] sm:$0xf]
  %v2270 = vld [vmem:[%s3 + $0x2c] sm:$0xf]
  %v2271 = vld [vmem:[%s3 + $0x30] sm:$0xf]
  %v2272 = vld [vmem:[%s3 + $0x34] sm:$0xf]
  %v2273 = vld [vmem:[%s3 + $0x38] sm:$0xf]
  %v2274 = vld [vmem:[%s3 + $0x3c] sm:$0xf]
  %v2275 = vld [vmem:[%s3 + $0x40] sm:$0xf]
  %v2276 = vld [vmem:[%s3 + $0x44] sm:$0xf]
  %v2277 = vld [vmem:[%s3 + $0x48] sm:$0xf]
  %v2278 = vld [vmem:[%s3 + $0x4c] sm:$0xf]
  %v2279 = vld [vmem:[%s3 + $0x50] sm:$0xf]
  %v2280 = vld [vmem:[%s3 + $0x54] sm:$0xf]
  %v2281 = vld [vmem:[%s3 + $0x58] sm:$0xf]
  %v2282 = vld [vmem:[%s3 + $0x5c] sm:$0xf]
  %v2283 = vld [vmem:[%s3 + $0x60] sm:$0xf]
  %v2284 = vld [vmem:[%s3 + $0x64] sm:$0xf]
  %v2285 = vld [vmem:[%s3 + $0x68] sm:$0xf]
  %v2286 = vld [vmem:[%s3 + $0x6c] sm:$0xf]
  %v2287 = vld [vmem:[%s3 + $0x70] sm:$0xf]
  %v2288 = vld [vmem:[%s3 + $0x74] sm:$0xf]
  %v2319 = vunpack.c.l.b16 %v2259
  %v2320 = vunpack.c.l.b16 %v2260
  %v2321 = vunpack.c.l.b16 %v2261
  %v2322 = vunpack.c.l.b16 %v2262
  %v2323 = vunpack.c.l.b16 %v2263
  %v2324 = vunpack.c.l.b16 %v2264
  %v2325 = vunpack.c.l.b16 %v2265
  %v2326 = vunpack.c.l.b16 %v2266
  %v2327 = vunpack.c.l.b16 %v2267
  %v2328 = vunpack.c.l.b16 %v2268
  %v2329 = vunpack.c.l.b16 %v2269
  %v2330 = vunpack.c.l.b16 %v2270
  %v2331 = vunpack.c.l.b16 %v2271
  %v2332 = vunpack.c.l.b16 %v2272
  %v2333 = vunpack.c.l.b16 %v2273
  %v2334 = vunpack.c.l.b16 %v2274
  %v2335 = vunpack.c.l.b16 %v2275
  %v2336 = vunpack.c.l.b16 %v2276
  %v2337 = vunpack.c.l.b16 %v2277
  %v2338 = vunpack.c.l.b16 %v2278
  %v2339 = vunpack.c.l.b16 %v2279
  %v2340 = vunpack.c.l.b16 %v2280
  %v2341 = vunpack.c.l.b16 %v2281
  %v2342 = vunpack.c.l.b16 %v2282
  %v2343 = vunpack.c.l.b16 %v2283
  %v2344 = vunpack.c.l.b16 %v2284
  %v2345 = vunpack.c.l.b16 %v2285
  %v2346 = vunpack.c.l.b16 %v2286
  %v2347 = vunpack.c.l.b16 %v2287
  %v2348 = vunpack.c.l.b16 %v2288
  %v2349 = vpack.c.b16 %v2320, %v2319
  %v2350 = vpack.c.b16 %v2322, %v2321
  %v2351 = vpack.c.b16 %v2324, %v2323
  %v2352 = vpack.c.b16 %v2326, %v2325
  %v2353 = vpack.c.b16 %v2328, %v2327
  %v2354 = vpack.c.b16 %v2330, %v2329
  %v2355 = vpack.c.b16 %v2332, %v2331
  %v2356 = vpack.c.b16 %v2334, %v2333
  %v2357 = vpack.c.b16 %v2336, %v2335
  %v2358 = vpack.c.b16 %v2338, %v2337
  %v2359 = vpack.c.b16 %v2340, %v2339
  %v2360 = vpack.c.b16 %v2342, %v2341
  %v2361 = vpack.c.b16 %v2344, %v2343
  %v2362 = vpack.c.b16 %v2346, %v2345
  %v2363 = vpack.c.b16 %v2348, %v2347
  %vm2379 = vcmask 916480
  %v2381 = vsel %vm2379, %v2236, 0
  %v2384 = vsel %vm2379, %v2238, 0
  %v2387 = vsel %vm2379, %v2240, 0
  %v2390 = vsel %vm2379, %v2242, 0
  %v2393 = vsel %vm2379, %v2244, 0
  %v2396 = vsel %vm2379, %v2246, 0
  %v2399 = vsel %vm2379, %v2248, 0
  %v2402 = vsel %vm2379, %v2250, 0
  %v2405 = vsel %vm2379, %v2252, 0
  %v2408 = vsel %vm2379, %v2254, 0
  %v2411 = vsel %vm2379, %v2256, 0
  %v2414 = vsel %vm2379, %v2258, 0
  %2416 = vmatprep.subr.bf16.mxu0 0
  %2417 = vmatpush1.bf16.msra.mxu0 %v2349
  %2418 = vmatprep.subr.bf16.mxu0 0
  %2419 = vmatpush1.bf16.msra.mxu0 %v2350
  %2420 = vmatprep.subr.bf16.mxu0 0
  %2421 = vmatpush1.bf16.msra.mxu0 %v2351
  %2422 = vmatprep.subr.bf16.mxu0 0
  %2423 = vmatpush1.bf16.msra.mxu0 %v2352
  %2424 = vmatprep.subr.bf16.mxu0 0
  %2425 = vmatpush1.bf16.msra.mxu0 %v2353
  %2426 = vmatprep.subr.bf16.mxu0 0
  %2427 = vmatpush1.bf16.msra.mxu0 %v2354
  %2428 = vmatprep.subr.bf16.mxu0 0
  %2429 = vmatpush1.bf16.msra.mxu0 %v2355
  %2430 = vmatprep.subr.bf16.mxu0 0
  %2431 = vmatpush1.bf16.msra.mxu0 %v2356
  %2432 = vmatprep.subr.bf16.mxu0 0
  %2433 = vmatpush1.bf16.msra.mxu0 %v2357
  %2434 = vmatprep.subr.bf16.mxu0 0
  %2435 = vmatpush1.bf16.msra.mxu0 %v2358
  %2436 = vmatprep.subr.bf16.mxu0 0
  %2437 = vmatpush1.bf16.msra.mxu0 %v2359
  %2438 = vmatprep.subr.bf16.mxu0 0
  %2439 = vmatpush1.bf16.msra.mxu0 %v2360
  %2440 = vmatprep.subr.bf16.mxu0 0
  %2441 = vmatpush1.bf16.msra.mxu0 %v2361
  %2442 = vmatprep.subr.bf16.mxu0 0
  %2443 = vmatpush1.bf16.msra.mxu0 %v2362
  %2444 = vmatprep.subr.bf16.mxu0 0
  %2445 = vmatpush1.bf16.msra.mxu0 %v2363
  %2446 = vmatprep.subr.bf16.mxu0 0
  %2447 = vmatpush1.bf16.msra.mxu0 0
  %2448 = vmatprep.mubr.bf16.mxu0 %v2381
  %2449 = vmatmul.mubr.bf16.gmra.mrb[0].mxu0 %v2235
  %v2450 = vpop.f32.mrb[0].mxu0
  %v2451 = vadd.f32 0.0, %v2450
  %v2452 = vpop.f32.mrb[0].mxu0
  %v2453 = vpop.f32.mrb[0].mxu0
  %v2454 = vadd.f32 0.0, %v2453
  %v2455 = vpop.f32.mrb[0].mxu0
  %2456 = vmatprep.mubr.bf16.mxu0 %v2384
  %2457 = vmatmul.mubr.bf16.gmra.mrb[0].mxu0 %v2237
  %v2458 = vpop.f32.mrb[0].mxu0
  %v2459 = vadd.f32 0.0, %v2458
  %v2460 = vpop.f32.mrb[0].mxu0
  %v2461 = vpop.f32.mrb[0].mxu0
  %v2462 = vadd.f32 0.0, %v2461
  %v2463 = vpop.f32.mrb[0].mxu0
  %2464 = vmatprep.mubr.bf16.mxu0 %v2387
  %2465 = vmatmul.mubr.bf16.gmra.mrb[0].mxu0 %v2239
  %v2466 = vpop.f32.mrb[0].mxu0
  %v2467 = vadd.f32 0.0, %v2466
  %v2468 = vpop.f32.mrb[0].mxu0
  %v2469 = vpop.f32.mrb[0].mxu0
  %v2470 = vadd.f32 0.0, %v2469
  %v2471 = vpop.f32.mrb[0].mxu0
  %2472 = vmatprep.mubr.bf16.mxu0 %v2390
  %2473 = vmatmul.mubr.bf16.gmra.mrb[0].mxu0 %v2241
  %v2474 = vpop.f32.mrb[0].mxu0
  %v2475 = vadd.f32 0.0, %v2474
  %v2476 = vpop.f32.mrb[0].mxu0
  %v2477 = vpop.f32.mrb[0].mxu0
  %v2478 = vadd.f32 0.0, %v2477
  %v2479 = vpop.f32.mrb[0].mxu0
  %2480 = vmatprep.mubr.bf16.mxu0 %v2393
  %2481 = vmatmul.mubr.bf16.gmra.mrb[0].mxu0 %v2243
  %v2482 = vpop.f32.mrb[0].mxu0
  %v2483 = vadd.f32 0.0, %v2482
  %v2484 = vpop.f32.mrb[0].mxu0
  %v2485 = vpop.f32.mrb[0].mxu0
  %v2486 = vadd.f32 0.0, %v2485
  %v2487 = vpop.f32.mrb[0].mxu0
  %2488 = vmatprep.mubr.bf16.mxu0 %v2396
  %2489 = vmatmul.mubr.bf16.gmra.mrb[0].mxu0 %v2245
  %v2490 = vpop.f32.mrb[0].mxu0
  %v2491 = vadd.f32 0.0, %v2490
  %v2492 = vpop.f32.mrb[0].mxu0
  %v2493 = vpop.f32.mrb[0].mxu0
  %v2494 = vadd.f32 0.0, %v2493
  %v2495 = vpop.f32.mrb[0].mxu0
  %2496 = vmatprep.mubr.bf16.mxu0 %v2399
  %2497 = vmatmul.mubr.bf16.gmra.mrb[0].mxu0 %v2247
  %v2498 = vpop.f32.mrb[0].mxu0
  %v2499 = vadd.f32 0.0, %v2498
  %v2500 = vpop.f32.mrb[0].mxu0
  %v2501 = vpop.f32.mrb[0].mxu0
  %v2502 = vadd.f32 0.0, %v2501
  %v2503 = vpop.f32.mrb[0].mxu0
  %2504 = vmatprep.mubr.bf16.mxu0 %v2402
  %2505 = vmatmul.mubr.bf16.gmra.mrb[0].mxu0 %v2249
  %v2506 = vpop.f32.mrb[0].mxu0
  %v2507 = vadd.f32 0.0, %v2506
  %v2508 = vpop.f32.mrb[0].mxu0
  %v2509 = vpop.f32.mrb[0].mxu0
  %v2510 = vadd.f32 0.0, %v2509
  %v2511 = vpop.f32.mrb[0].mxu0
  %2512 = vmatprep.mubr.bf16.mxu0 %v2405
  %2513 = vmatmul.mubr.bf16.gmra.mrb[0].mxu0 %v2251
  %v2514 = vpop.f32.mrb[0].mxu0
  %v2515 = vadd.f32 0.0, %v2514
  %v2516 = vpop.f32.mrb[0].mxu0
  %v2517 = vpop.f32.mrb[0].mxu0
  %v2518 = vadd.f32 0.0, %v2517
  %v2519 = vpop.f32.mrb[0].mxu0
  %2520 = vmatprep.mubr.bf16.mxu0 %v2408
  %2521 = vmatmul.mubr.bf16.gmra.mrb[0].mxu0 %v2253
  %v2522 = vpop.f32.mrb[0].mxu0
  %v2523 = vadd.f32 0.0, %v2522
  %v2524 = vpop.f32.mrb[0].mxu0
  %v2525 = vpop.f32.mrb[0].mxu0
  %v2526 = vadd.f32 0.0, %v2525
  %v2527 = vpop.f32.mrb[0].mxu0
  %2528 = vmatprep.mubr.bf16.mxu0 %v2411
  %2529 = vmatmul.mubr.bf16.gmra.mrb[0].mxu0 %v2255
  %v2530 = vpop.f32.mrb[0].mxu0
  %v2531 = vadd.f32 0.0, %v2530
  %v2532 = vpop.f32.mrb[0].mxu0
  %v2533 = vpop.f32.mrb[0].mxu0
  %v2534 = vadd.f32 0.0, %v2533
  %v2535 = vpop.f32.mrb[0].mxu0
  %2536 = vmatprep.mubr.bf16.mxu0 %v2414
  %2537 = vmatmul.mubr.bf16.gmra.mrb[0].mxu0 %v2257
  %v2538 = vpop.f32.mrb[0].mxu0
  %v2539 = vadd.f32 0.0, %v2538
  %v2540 = vpop.f32.mrb[0].mxu0
  %v2541 = vpop.f32.mrb[0].mxu0
  %v2542 = vadd.f32 0.0, %v2541
  %v2543 = vpop.f32.mrb[0].mxu0
  %2544 = vdwg.mxu0
  %v2545 = vld [vmem:[%s4] sm:$0xf]
  %v2546 = vld [vmem:[%s4 + $0x4] sm:$0xf]
  %v2547 = vld [vmem:[%s4 + $0x8] sm:$0xf]
  %v2548 = vld [vmem:[%s4 + $0xc] sm:$0xf]
  %v2549 = vld [vmem:[%s4 + $0x10] sm:$0xf]
  %v2550 = vld [vmem:[%s4 + $0x14] sm:$0xf]
  %v2551 = vld [vmem:[%s4 + $0x18] sm:$0xf]
  %v2552 = vld [vmem:[%s4 + $0x1c] sm:$0xf]
  %v2553 = vld [vmem:[%s4 + $0x20] sm:$0xf]
  %v2554 = vld [vmem:[%s4 + $0x24] sm:$0xf]
  %v2555 = vld [vmem:[%s4 + $0x28] sm:$0xf]
  %v2556 = vld [vmem:[%s4 + $0x2c] sm:$0xf]
  %v2557 = vld [vmem:[%s4 + $0x30] sm:$0xf]
  %v2558 = vld [vmem:[%s4 + $0x34] sm:$0xf]
  %v2559 = vld [vmem:[%s4 + $0x38] sm:$0xf]
  %v2560 = vld [vmem:[%s4 + $0x3c] sm:$0xf]
  %v2561 = vld [vmem:[%s4 + $0x40] sm:$0xf]
  %v2562 = vld [vmem:[%s4 + $0x44] sm:$0xf]
  %v2563 = vld [vmem:[%s4 + $0x48] sm:$0xf]
  %v2564 = vld [vmem:[%s4 + $0x4c] sm:$0xf]
  %v2565 = vld [vmem:[%s4 + $0x50] sm:$0xf]
  %v2566 = vld [vmem:[%s4 + $0x54] sm:$0xf]
  %v2567 = vld [vmem:[%s4 + $0x58] sm:$0xf]
  %v2568 = vld [vmem:[%s4 + $0x5c] sm:$0xf]
  %v2569 = vld [vmem:[%s4 + $0x60] sm:$0xf]
  %v2570 = vld [vmem:[%s4 + $0x64] sm:$0xf]
  %v2571 = vld [vmem:[%s4 + $0x68] sm:$0xf]
  %v2572 = vld [vmem:[%s4 + $0x6c] sm:$0xf]
  %v2573 = vld [vmem:[%s4 + $0x70] sm:$0xf]
  %v2574 = vld [vmem:[%s4 + $0x74] sm:$0xf]
  %v2605 = vunpack.c.l.b16 %v2545
  %v2606 = vunpack.c.l.b16 %v2546
  %v2607 = vunpack.c.l.b16 %v2547
  %v2608 = vunpack.c.l.b16 %v2548
  %v2609 = vunpack.c.l.b16 %v2549
  %v2610 = vunpack.c.l.b16 %v2550
  %v2611 = vunpack.c.l.b16 %v2551
  %v2612 = vunpack.c.l.b16 %v2552
  %v2613 = vunpack.c.l.b16 %v2553
  %v2614 = vunpack.c.l.b16 %v2554
  %v2615 = vunpack.c.l.b16 %v2555
  %v2616 = vunpack.c.l.b16 %v2556
  %v2617 = vunpack.c.l.b16 %v2557
  %v2618 = vunpack.c.l.b16 %v2558
  %v2619 = vunpack.c.l.b16 %v2559
  %v2620 = vunpack.c.l.b16 %v2560
  %v2621 = vunpack.c.l.b16 %v2561
  %v2622 = vunpack.c.l.b16 %v2562
  %v2623 = vunpack.c.l.b16 %v2563
  %v2624 = vunpack.c.l.b16 %v2564
  %v2625 = vunpack.c.l.b16 %v2565
  %v2626 = vunpack.c.l.b16 %v2566
  %v2627 = vunpack.c.l.b16 %v2567
  %v2628 = vunpack.c.l.b16 %v2568
  %v2629 = vunpack.c.l.b16 %v2569
  %v2630 = vunpack.c.l.b16 %v2570
  %v2631 = vunpack.c.l.b16 %v2571
  %v2632 = vunpack.c.l.b16 %v2572
  %v2633 = vunpack.c.l.b16 %v2573
  %v2634 = vunpack.c.l.b16 %v2574
  %v2635 = vpack.c.b16 %v2606, %v2605
  %v2636 = vpack.c.b16 %v2608, %v2607
  %v2637 = vpack.c.b16 %v2610, %v2609
  %v2638 = vpack.c.b16 %v2612, %v2611
  %v2639 = vpack.c.b16 %v2614, %v2613
  %v2640 = vpack.c.b16 %v2616, %v2615
  %v2641 = vpack.c.b16 %v2618, %v2617
  %v2642 = vpack.c.b16 %v2620, %v2619
  %v2643 = vpack.c.b16 %v2622, %v2621
  %v2644 = vpack.c.b16 %v2624, %v2623
  %v2645 = vpack.c.b16 %v2626, %v2625
  %v2646 = vpack.c.b16 %v2628, %v2627
  %v2647 = vpack.c.b16 %v2630, %v2629
  %v2648 = vpack.c.b16 %v2632, %v2631
  %v2649 = vpack.c.b16 %v2634, %v2633
  %2665 = vmatprep.subr.bf16.mxu0 0
  %2666 = vmatpush1.bf16.msra.mxu0 %v2635
  %2667 = vmatprep.subr.bf16.mxu0 0
  %2668 = vmatpush1.bf16.msra.mxu0 %v2636
  %2669 = vmatprep.subr.bf16.mxu0 0
  %2670 = vmatpush1.bf16.msra.mxu0 %v2637
  %2671 = vmatprep.subr.bf16.mxu0 0
  %2672 = vmatpush1.bf16.msra.mxu0 %v2638
  %2673 = vmatprep.subr.bf16.mxu0 0
  %2674 = vmatpush1.bf16.msra.mxu0 %v2639
  %2675 = vmatprep.subr.bf16.mxu0 0
  %2676 = vmatpush1.bf16.msra.mxu0 %v2640
  %2677 = vmatprep.subr.bf16.mxu0 0
  %2678 = vmatpush1.bf16.msra.mxu0 %v2641
  %2679 = vmatprep.subr.bf16.mxu0 0
  %2680 = vmatpush1.bf16.msra.mxu0 %v2642
  %2681 = vmatprep.subr.bf16.mxu0 0
  %2682 = vmatpush1.bf16.msra.mxu0 %v2643
  %2683 = vmatprep.subr.bf16.mxu0 0
  %2684 = vmatpush1.bf16.msra.mxu0 %v2644
  %2685 = vmatprep.subr.bf16.mxu0 0
  %2686 = vmatpush1.bf16.msra.mxu0 %v2645
  %2687 = vmatprep.subr.bf16.mxu0 0
  %2688 = vmatpush1.bf16.msra.mxu0 %v2646
  %2689 = vmatprep.subr.bf16.mxu0 0
  %2690 = vmatpush1.bf16.msra.mxu0 %v2647
  %2691 = vmatprep.subr.bf16.mxu0 0
  %2692 = vmatpush1.bf16.msra.mxu0 %v2648
  %2693 = vmatprep.subr.bf16.mxu0 0
  %2694 = vmatpush1.bf16.msra.mxu0 %v2649
  %2695 = vmatprep.subr.bf16.mxu0 0
  %2696 = vmatpush1.bf16.msra.mxu0 0
  %2697 = vmatprep.mubr.bf16.mxu0 %v2381
  %2698 = vmatmul.mubr.bf16.gmra.mrb[0].mxu0 %v2235
  %v2699 = vpop.f32.mrb[0].mxu0
  %v2700 = vadd.f32 0.0, %v2699
  %v2701 = vpop.f32.mrb[0].mxu0
  %v2702 = vpop.f32.mrb[0].mxu0
  %v2703 = vadd.f32 0.0, %v2702
  %v2704 = vpop.f32.mrb[0].mxu0
  %2705 = vmatprep.mubr.bf16.mxu0 %v2384
  %2706 = vmatmul.mubr.bf16.gmra.mrb[0].mxu0 %v2237
  %v2707 = vpop.f32.mrb[0].mxu0
  %v2708 = vadd.f32 0.0, %v2707
  %v2709 = vpop.f32.mrb[0].mxu0
  %v2710 = vpop.f32.mrb[0].mxu0
  %v2711 = vadd.f32 0.0, %v2710
  %v2712 = vpop.f32.mrb[0].mxu0
  %2713 = vmatprep.mubr.bf16.mxu0 %v2387
  %2714 = vmatmul.mubr.bf16.gmra.mrb[0].mxu0 %v2239
  %v2715 = vpop.f32.mrb[0].mxu0
  %v2716 = vadd.f32 0.0, %v2715
  %v2717 = vpop.f32.mrb[0].mxu0
  %v2718 = vpop.f32.mrb[0].mxu0
  %v2719 = vadd.f32 0.0, %v2718
  %v2720 = vpop.f32.mrb[0].mxu0
  %2721 = vmatprep.mubr.bf16.mxu0 %v2390
  %2722 = vmatmul.mubr.bf16.gmra.mrb[0].mxu0 %v2241
  %v2723 = vpop.f32.mrb[0].mxu0
  %v2724 = vadd.f32 0.0, %v2723
  %v2725 = vpop.f32.mrb[0].mxu0
  %v2726 = vpop.f32.mrb[0].mxu0
  %v2727 = vadd.f32 0.0, %v2726
  %v2728 = vpop.f32.mrb[0].mxu0
  %2729 = vmatprep.mubr.bf16.mxu0 %v2393
  %2730 = vmatmul.mubr.bf16.gmra.mrb[0].mxu0 %v2243
  %v2731 = vpop.f32.mrb[0].mxu0
  %v2732 = vadd.f32 0.0, %v2731
  %v2733 = vpop.f32.mrb[0].mxu0
  %v2734 = vpop.f32.mrb[0].mxu0
  %v2735 = vadd.f32 0.0, %v2734
  %v2736 = vpop.f32.mrb[0].mxu0
  %2737 = vmatprep.mubr.bf16.mxu0 %v2396
  %2738 = vmatmul.mubr.bf16.gmra.mrb[0].mxu0 %v2245
  %v2739 = vpop.f32.mrb[0].mxu0
  %v2740 = vadd.f32 0.0, %v2739
  %v2741 = vpop.f32.mrb[0].mxu0
  %v2742 = vpop.f32.mrb[0].mxu0
  %v2743 = vadd.f32 0.0, %v2742
  %v2744 = vpop.f32.mrb[0].mxu0
  %2745 = vmatprep.mubr.bf16.mxu0 %v2399
  %2746 = vmatmul.mubr.bf16.gmra.mrb[0].mxu0 %v2247
  %v2747 = vpop.f32.mrb[0].mxu0
  %v2748 = vadd.f32 0.0, %v2747
  %v2749 = vpop.f32.mrb[0].mxu0
  %v2750 = vpop.f32.mrb[0].mxu0
  %v2751 = vadd.f32 0.0, %v2750
  %v2752 = vpop.f32.mrb[0].mxu0
  %2753 = vmatprep.mubr.bf16.mxu0 %v2402
  %2754 = vmatmul.mubr.bf16.gmra.mrb[0].mxu0 %v2249
  %v2755 = vpop.f32.mrb[0].mxu0
  %v2756 = vadd.f32 0.0, %v2755
  %v2757 = vpop.f32.mrb[0].mxu0
  %v2758 = vpop.f32.mrb[0].mxu0
  %v2759 = vadd.f32 0.0, %v2758
  %v2760 = vpop.f32.mrb[0].mxu0
  %2761 = vmatprep.mubr.bf16.mxu0 %v2405
  %2762 = vmatmul.mubr.bf16.gmra.mrb[0].mxu0 %v2251
  %v2763 = vpop.f32.mrb[0].mxu0
  %v2764 = vadd.f32 0.0, %v2763
  %v2765 = vpop.f32.mrb[0].mxu0
  %v2766 = vpop.f32.mrb[0].mxu0
  %v2767 = vadd.f32 0.0, %v2766
  %v2768 = vpop.f32.mrb[0].mxu0
  %2769 = vmatprep.mubr.bf16.mxu0 %v2408
  %2770 = vmatmul.mubr.bf16.gmra.mrb[0].mxu0 %v2253
  %v2771 = vpop.f32.mrb[0].mxu0
  %v2772 = vadd.f32 0.0, %v2771
  %v2773 = vpop.f32.mrb[0].mxu0
  %v2774 = vpop.f32.mrb[0].mxu0
  %v2775 = vadd.f32 0.0, %v2774
  %v2776 = vpop.f32.mrb[0].mxu0
  %2777 = vmatprep.mubr.bf16.mxu0 %v2411
  %2778 = vmatmul.mubr.bf16.gmra.mrb[0].mxu0 %v2255
  %v2779 = vpop.f32.mrb[0].mxu0
  %v2780 = vadd.f32 0.0, %v2779
  %v2781 = vpop.f32.mrb[0].mxu0
  %v2782 = vpop.f32.mrb[0].mxu0
  %v2783 = vadd.f32 0.0, %v2782
  %v2784 = vpop.f32.mrb[0].mxu0
  %2785 = vmatprep.mubr.bf16.mxu0 %v2414
  %2786 = vmatmul.mubr.bf16.gmra.mrb[0].mxu0 %v2257
  %v2787 = vpop.f32.mrb[0].mxu0
  %v2788 = vadd.f32 0.0, %v2787
  %v2789 = vpop.f32.mrb[0].mxu0
  %v2790 = vpop.f32.mrb[0].mxu0
  %v2791 = vadd.f32 0.0, %v2790
  %v2792 = vpop.f32.mrb[0].mxu0
  %2793 = vdwg.mxu0
  %v2794 = vmax.f32 %v2451, %v2700
  %v2795 = vmax.f32 %v2454, %v2703
  %v2796 = vmax.f32 %v2459, %v2708
  %v2797 = vmax.f32 %v2462, %v2711
  %v2798 = vmax.f32 %v2467, %v2716
  %v2799 = vmax.f32 %v2470, %v2719
  %v2800 = vmax.f32 %v2475, %v2724
  %v2801 = vmax.f32 %v2478, %v2727
  %v2802 = vmax.f32 %v2483, %v2732
  %v2803 = vmax.f32 %v2486, %v2735
  %v2804 = vmax.f32 %v2491, %v2740
  %v2805 = vmax.f32 %v2494, %v2743
  %v2806 = vmax.f32 %v2499, %v2748
  %v2807 = vmax.f32 %v2502, %v2751
  %v2808 = vmax.f32 %v2507, %v2756
  %v2809 = vmax.f32 %v2510, %v2759
  %v2810 = vmax.f32 %v2515, %v2764
  %v2811 = vmax.f32 %v2518, %v2767
  %v2812 = vmax.f32 %v2523, %v2772
  %v2813 = vmax.f32 %v2526, %v2775
  %v2814 = vmax.f32 %v2531, %v2780
  %v2815 = vmax.f32 %v2534, %v2783
  %v2816 = vmax.f32 %v2539, %v2788
  %v2817 = vmax.f32 %v2542, %v2791
  %v2818 = vmax.f32 %v2794, 0.0
  %v2819 = vmax.f32 %v2795, 0.0
  %v2820 = vmax.f32 %v2796, 0.0
  %v2821 = vmax.f32 %v2797, 0.0
  %v2822 = vmax.f32 %v2798, 0.0
  %v2823 = vmax.f32 %v2799, 0.0
  %v2824 = vmax.f32 %v2800, 0.0
  %v2825 = vmax.f32 %v2801, 0.0
  %v2826 = vmax.f32 %v2802, 0.0
  %v2827 = vmax.f32 %v2803, 0.0
  %v2828 = vmax.f32 %v2804, 0.0
  %v2829 = vmax.f32 %v2805, 0.0
  %v2830 = vmax.f32 %v2806, 0.0
  %v2831 = vmax.f32 %v2807, 0.0
  %v2832 = vmax.f32 %v2808, 0.0
  %v2833 = vmax.f32 %v2809, 0.0
  %v2834 = vmax.f32 %v2810, 0.0
  %v2835 = vmax.f32 %v2811, 0.0
  %v2836 = vmax.f32 %v2812, 0.0
  %v2837 = vmax.f32 %v2813, 0.0
  %v2838 = vmax.f32 %v2814, 0.0
  %v2839 = vmax.f32 %v2815, 0.0
  %v2840 = vmax.f32 %v2816, 0.0
  %v2841 = vmax.f32 %v2817, 0.0
  %v2842 = vpack.c.bf16 %v2819, %v2818
  %v2843 = vpack.c.bf16 %v2821, %v2820
  %v2844 = vpack.c.bf16 %v2823, %v2822
  %v2845 = vpack.c.bf16 %v2825, %v2824
  %v2846 = vpack.c.bf16 %v2827, %v2826
  %v2847 = vpack.c.bf16 %v2829, %v2828
  %v2848 = vpack.c.bf16 %v2831, %v2830
  %v2849 = vpack.c.bf16 %v2833, %v2832
  %v2850 = vpack.c.bf16 %v2835, %v2834
  %v2851 = vpack.c.bf16 %v2837, %v2836
  %v2852 = vpack.c.bf16 %v2839, %v2838
  %v2853 = vpack.c.bf16 %v2841, %v2840
  %v2854 = vld [vmem:[%s5] sm:$0xff]
  %v2855 = vld [vmem:[%s5 + $0x8] sm:$0xff]
  %v2856 = vld [vmem:[%s5 + $0x10] sm:$0xff]
  %v2857 = vld [vmem:[%s5 + $0x18] sm:$0xff]
  %v2858 = vld [vmem:[%s5 + $0x20] sm:$0xff]
  %v2859 = vld [vmem:[%s5 + $0x28] sm:$0xff]
  %v2860 = vld [vmem:[%s5 + $0x30] sm:$0xff]
  %v2861 = vld [vmem:[%s5 + $0x38] sm:$0xff]
  %v2862 = vld [vmem:[%s5 + $0x40] sm:$0xff]
  %v2863 = vld [vmem:[%s5 + $0x48] sm:$0xff]
  %v2864 = vld [vmem:[%s5 + $0x50] sm:$0xff]
  %v2865 = vld [vmem:[%s5 + $0x58] sm:$0xff]
  %v2866 = vld [vmem:[%s5 + $0x60] sm:$0xff]
  %v2867 = vld [vmem:[%s5 + $0x68] sm:$0xff]
  %v2868 = vld [vmem:[%s5 + $0x70] sm:$0xff]
  %s2869 = scalar_lea.vmem %s5, 120
  %v2870 = vld [vmem:[%s2869] sm:$0xff]
  %v2871 = vld [vmem:[%s2869 + $0x8] sm:$0xff]
  %v2872 = vld [vmem:[%s2869 + $0x10] sm:$0xff]
  %v2873 = vld [vmem:[%s2869 + $0x18] sm:$0xff]
  %v2874 = vld [vmem:[%s2869 + $0x20] sm:$0xff]
  %v2875 = vld [vmem:[%s2869 + $0x28] sm:$0xff]
  %v2876 = vld [vmem:[%s2869 + $0x30] sm:$0xff]
  %v2877 = vld [vmem:[%s2869 + $0x38] sm:$0xff]
  %v2878 = vld [vmem:[%s2869 + $0x40] sm:$0xff]
  %v2879 = vld [vmem:[%s2869 + $0x48] sm:$0xff]
  %v2880 = vld [vmem:[%s2869 + $0x50] sm:$0xff]
  %v2881 = vld [vmem:[%s2869 + $0x58] sm:$0xff]
  %v2882 = vld [vmem:[%s2869 + $0x60] sm:$0xff]
  %v2883 = vld [vmem:[%s2869 + $0x68] sm:$0xff]
  %v2884 = vld [vmem:[%s2869 + $0x70] sm:$0xff]
  %v2900 = vunpack.c.l.b16 %v2870
  %v2901 = vunpack.c.h.b16 %v2870
  %v2902 = vunpack.c.l.b16 %v2871
  %v2903 = vunpack.c.h.b16 %v2871
  %v2904 = vunpack.c.l.b16 %v2872
  %v2905 = vunpack.c.h.b16 %v2872
  %v2906 = vunpack.c.l.b16 %v2873
  %v2907 = vunpack.c.h.b16 %v2873
  %v2908 = vunpack.c.l.b16 %v2874
  %v2909 = vunpack.c.h.b16 %v2874
  %v2910 = vunpack.c.l.b16 %v2875
  %v2911 = vunpack.c.h.b16 %v2875
  %v2912 = vunpack.c.l.b16 %v2876
  %v2913 = vunpack.c.h.b16 %v2876
  %v2914 = vunpack.c.l.b16 %v2877
  %v2915 = vunpack.c.h.b16 %v2877
  %v2916 = vunpack.c.l.b16 %v2878
  %v2917 = vunpack.c.h.b16 %v2878
  %v2918 = vunpack.c.l.b16 %v2879
  %v2919 = vunpack.c.h.b16 %v2879
  %v2920 = vunpack.c.l.b16 %v2880
  %v2921 = vunpack.c.h.b16 %v2880
  %v2922 = vunpack.c.l.b16 %v2881
  %v2923 = vunpack.c.h.b16 %v2881
  %v2924 = vunpack.c.l.b16 %v2882
  %v2925 = vunpack.c.h.b16 %v2882
  %v2926 = vunpack.c.l.b16 %v2883
  %v2927 = vunpack.c.h.b16 %v2883
  %v2928 = vunpack.c.l.b16 %v2884
  %v2929 = vunpack.c.h.b16 %v2884
  %v2930 = vpack.c.b16 %v2902, %v2900
  %v2931 = vpack.c.b16 %v2903, %v2901
  %v2932 = vpack.c.b16 %v2906, %v2904
  %v2933 = vpack.c.b16 %v2907, %v2905
  %v2934 = vpack.c.b16 %v2910, %v2908
  %v2935 = vpack.c.b16 %v2911, %v2909
  %v2936 = vpack.c.b16 %v2914, %v2912
  %v2937 = vpack.c.b16 %v2915, %v2913
  %v2938 = vpack.c.b16 %v2918, %v2916
  %v2939 = vpack.c.b16 %v2919, %v2917
  %v2940 = vpack.c.b16 %v2922, %v2920
  %v2941 = vpack.c.b16 %v2923, %v2921
  %v2942 = vpack.c.b16 %v2926, %v2924
  %v2943 = vpack.c.b16 %v2927, %v2925
  %v2944 = vpack.c.b16 %v2928, %v2928
  %v2945 = vpack.c.b16 %v2929, %v2929
  %vm2960 = vcmask 982016
  %v2962 = vsel %vm2960, %v2843, 0
  %v2965 = vsel %vm2960, %v2844, 0
  %v2968 = vsel %vm2960, %v2845, 0
  %v2971 = vsel %vm2960, %v2846, 0
  %v2974 = vsel %vm2960, %v2847, 0
  %v2977 = vsel %vm2960, %v2848, 0
  %v2980 = vsel %vm2960, %v2849, 0
  %v2983 = vsel %vm2960, %v2850, 0
  %vm2985 = vcmask 1043456
  %v2987 = vsel %vm2985, %v2944, 0
  %v2990 = vsel %vm2985, %v2945, 0
  %2992 = vmatprep.subr.bf16.mxu0 %v2931
  %2993 = vmatpush1.bf16.msra.mxu0 %v2930
  %2994 = vmatprep.subr.bf16.mxu0 %v2933
  %2995 = vmatpush1.bf16.msra.mxu0 %v2932
  %2996 = vmatprep.subr.bf16.mxu0 %v2935
  %2997 = vmatpush1.bf16.msra.mxu0 %v2934
  %2998 = vmatprep.subr.bf16.mxu0 %v2937
  %2999 = vmatpush1.bf16.msra.mxu0 %v2936
  %3000 = vmatprep.subr.bf16.mxu0 %v2939
  %3001 = vmatpush1.bf16.msra.mxu0 %v2938
  %3002 = vmatprep.subr.bf16.mxu0 %v2941
  %3003 = vmatpush1.bf16.msra.mxu0 %v2940
  %3004 = vmatprep.subr.bf16.mxu0 %v2943
  %3005 = vmatpush1.bf16.msra.mxu0 %v2942
  %3006 = vmatprep.subr.bf16.mxu0 %v2990
  %3007 = vmatpush1.bf16.msra.mxu0 %v2987
  %3008 = vmatprep.subr.bf16.mxu0 0
  %3009 = vmatpush1.bf16.msra.mxu0 0
  %3010 = vmatprep.subr.bf16.mxu0 0
  %3011 = vmatpush1.bf16.msra.mxu0 0
  %3012 = vmatprep.subr.bf16.mxu0 0
  %3013 = vmatpush1.bf16.msra.mxu0 0
  %3014 = vmatprep.subr.bf16.mxu0 0
  %3015 = vmatpush1.bf16.msra.mxu0 0
  %3016 = vmatprep.subr.bf16.mxu0 0
  %3017 = vmatpush1.bf16.msra.mxu0 0
  %3018 = vmatprep.subr.bf16.mxu0 0
  %3019 = vmatpush1.bf16.msra.mxu0 0
  %3020 = vmatprep.subr.bf16.mxu0 0
  %3021 = vmatpush1.bf16.msra.mxu0 0
  %3022 = vmatprep.subr.bf16.mxu0 0
  %3023 = vmatpush1.bf16.msra.mxu0 0
  %3024 = vmatprep.mubr.bf16.mxu0 0
  %3025 = vmatmul.mubr.bf16.gmra.mrb[0].mxu0 %v2962
  %v3026 = vpop.f32.mrb[0].mxu0
  %v3027 = vadd.f32 0.0, %v3026
  %v3028 = vpop.f32.mrb[0].mxu0
  %v3029 = vadd.f32 0.0, %v3028
  %v3030 = vpop.f32.mrb[0].mxu0
  %v3031 = vadd.f32 0.0, %v3030
  %v3032 = vpop.f32.mrb[0].mxu0
  %v3033 = vadd.f32 0.0, %v3032
  %3034 = vmatprep.mubr.bf16.mxu0 0
  %3035 = vmatmul.mubr.bf16.gmra.mrb[0].mxu0 %v2965
  %v3036 = vpop.f32.mrb[0].mxu0
  %v3037 = vadd.f32 0.0, %v3036
  %v3038 = vpop.f32.mrb[0].mxu0
  %v3039 = vadd.f32 0.0, %v3038
  %v3040 = vpop.f32.mrb[0].mxu0
  %v3041 = vadd.f32 0.0, %v3040
  %v3042 = vpop.f32.mrb[0].mxu0
  %v3043 = vadd.f32 0.0, %v3042
  %3044 = vmatprep.mubr.bf16.mxu0 0
  %3045 = vmatmul.mubr.bf16.gmra.mrb[0].mxu0 %v2968
  %v3046 = vpop.f32.mrb[0].mxu0
  %v3047 = vadd.f32 0.0, %v3046
  %v3048 = vpop.f32.mrb[0].mxu0
  %v3049 = vadd.f32 0.0, %v3048
  %v3050 = vpop.f32.mrb[0].mxu0
  %v3051 = vadd.f32 0.0, %v3050
  %v3052 = vpop.f32.mrb[0].mxu0
  %v3053 = vadd.f32 0.0, %v3052
  %3054 = vmatprep.mubr.bf16.mxu0 0
  %3055 = vmatmul.mubr.bf16.gmra.mrb[0].mxu0 %v2971
  %v3056 = vpop.f32.mrb[0].mxu0
  %v3057 = vadd.f32 0.0, %v3056
  %v3058 = vpop.f32.mrb[0].mxu0
  %v3059 = vadd.f32 0.0, %v3058
  %v3060 = vpop.f32.mrb[0].mxu0
  %v3061 = vadd.f32 0.0, %v3060
  %v3062 = vpop.f32.mrb[0].mxu0
  %v3063 = vadd.f32 0.0, %v3062
  %3064 = vmatprep.mubr.bf16.mxu0 0
  %3065 = vmatmul.mubr.bf16.gmra.mrb[0].mxu0 %v2974
  %v3066 = vpop.f32.mrb[0].mxu0
  %v3067 = vadd.f32 0.0, %v3066
  %v3068 = vpop.f32.mrb[0].mxu0
  %v3069 = vadd.f32 0.0, %v3068
  %v3070 = vpop.f32.mrb[0].mxu0
  %v3071 = vadd.f32 0.0, %v3070
  %v3072 = vpop.f32.mrb[0].mxu0
  %v3073 = vadd.f32 0.0, %v3072
  %3074 = vmatprep.mubr.bf16.mxu0 0
  %3075 = vmatmul.mubr.bf16.gmra.mrb[0].mxu0 %v2977
  %v3076 = vpop.f32.mrb[0].mxu0
  %v3077 = vadd.f32 0.0, %v3076
  %v3078 = vpop.f32.mrb[0].mxu0
  %v3079 = vadd.f32 0.0, %v3078
  %v3080 = vpop.f32.mrb[0].mxu0
  %v3081 = vadd.f32 0.0, %v3080
  %v3082 = vpop.f32.mrb[0].mxu0
  %v3083 = vadd.f32 0.0, %v3082
  %3084 = vmatprep.mubr.bf16.mxu0 0
  %3085 = vmatmul.mubr.bf16.gmra.mrb[0].mxu0 %v2980
  %v3086 = vpop.f32.mrb[0].mxu0
  %v3087 = vadd.f32 0.0, %v3086
  %v3088 = vpop.f32.mrb[0].mxu0
  %v3089 = vadd.f32 0.0, %v3088
  %v3090 = vpop.f32.mrb[0].mxu0
  %v3091 = vadd.f32 0.0, %v3090
  %v3092 = vpop.f32.mrb[0].mxu0
  %v3093 = vadd.f32 0.0, %v3092
  %3094 = vmatprep.mubr.bf16.mxu0 0
  %3095 = vmatmul.mubr.bf16.gmra.mrb[0].mxu0 %v2983
  %v3096 = vpop.f32.mrb[0].mxu0
  %v3097 = vadd.f32 0.0, %v3096
  %v3098 = vpop.f32.mrb[0].mxu0
  %v3099 = vadd.f32 0.0, %v3098
  %v3100 = vpop.f32.mrb[0].mxu0
  %v3101 = vadd.f32 0.0, %v3100
  %v3102 = vpop.f32.mrb[0].mxu0
  %v3103 = vadd.f32 0.0, %v3102
  %3104 = vdwg.mxu0
  %v3120 = vunpack.c.l.b16 %v2854
  %v3121 = vunpack.c.h.b16 %v2854
  %v3122 = vunpack.c.l.b16 %v2855
  %v3123 = vunpack.c.h.b16 %v2855
  %v3124 = vunpack.c.l.b16 %v2856
  %v3125 = vunpack.c.h.b16 %v2856
  %v3126 = vunpack.c.l.b16 %v2857
  %v3127 = vunpack.c.h.b16 %v2857
  %v3128 = vunpack.c.l.b16 %v2858
  %v3129 = vunpack.c.h.b16 %v2858
  %v3130 = vunpack.c.l.b16 %v2859
  %v3131 = vunpack.c.h.b16 %v2859
  %v3132 = vunpack.c.l.b16 %v2860
  %v3133 = vunpack.c.h.b16 %v2860
  %v3134 = vunpack.c.l.b16 %v2861
  %v3135 = vunpack.c.h.b16 %v2861
  %v3136 = vunpack.c.l.b16 %v2862
  %v3137 = vunpack.c.h.b16 %v2862
  %v3138 = vunpack.c.l.b16 %v2863
  %v3139 = vunpack.c.h.b16 %v2863
  %v3140 = vunpack.c.l.b16 %v2864
  %v3141 = vunpack.c.h.b16 %v2864
  %v3142 = vunpack.c.l.b16 %v2865
  %v3143 = vunpack.c.h.b16 %v2865
  %v3144 = vunpack.c.l.b16 %v2866
  %v3145 = vunpack.c.h.b16 %v2866
  %v3146 = vunpack.c.l.b16 %v2867
  %v3147 = vunpack.c.h.b16 %v2867
  %v3148 = vunpack.c.l.b16 %v2868
  %v3149 = vunpack.c.h.b16 %v2868
  %v3150 = vpack.c.b16 %v3122, %v3120
  %v3151 = vpack.c.b16 %v3123, %v3121
  %v3152 = vpack.c.b16 %v3126, %v3124
  %v3153 = vpack.c.b16 %v3127, %v3125
  %v3154 = vpack.c.b16 %v3130, %v3128
  %v3155 = vpack.c.b16 %v3131, %v3129
  %v3156 = vpack.c.b16 %v3134, %v3132
  %v3157 = vpack.c.b16 %v3135, %v3133
  %v3158 = vpack.c.b16 %v3138, %v3136
  %v3159 = vpack.c.b16 %v3139, %v3137
  %v3160 = vpack.c.b16 %v3142, %v3140
  %v3161 = vpack.c.b16 %v3143, %v3141
  %v3162 = vpack.c.b16 %v3146, %v3144
  %v3163 = vpack.c.b16 %v3147, %v3145
  %v3164 = vpack.c.b16 %v3148, %v3148
  %v3165 = vpack.c.b16 %v3149, %v3149
  %v3181 = vsel %vm2960, %v2842, 0
  %v3184 = vsel %vm2985, %v3164, 0
  %v3187 = vsel %vm2985, %v3165, 0
  %3189 = vmatprep.subr.bf16.mxu0 %v3151
  %3190 = vmatpush1.bf16.msra.mxu0 %v3150
  %3191 = vmatprep.subr.bf16.mxu0 %v3153
  %3192 = vmatpush1.bf16.msra.mxu0 %v3152
  %3193 = vmatprep.subr.bf16.mxu0 %v3155
  %3194 = vmatpush1.bf16.msra.mxu0 %v3154
  %3195 = vmatprep.subr.bf16.mxu0 %v3157
  %3196 = vmatpush1.bf16.msra.mxu0 %v3156
  %3197 = vmatprep.subr.bf16.mxu0 %v3159
  %3198 = vmatpush1.bf16.msra.mxu0 %v3158
  %3199 = vmatprep.subr.bf16.mxu0 %v3161
  %3200 = vmatpush1.bf16.msra.mxu0 %v3160
  %3201 = vmatprep.subr.bf16.mxu0 %v3163
  %3202 = vmatpush1.bf16.msra.mxu0 %v3162
  %3203 = vmatprep.subr.bf16.mxu0 %v3187
  %3204 = vmatpush1.bf16.msra.mxu0 %v3184
  %3205 = vmatprep.subr.bf16.mxu0 0
  %3206 = vmatpush1.bf16.msra.mxu0 0
  %3207 = vmatprep.subr.bf16.mxu0 0
  %3208 = vmatpush1.bf16.msra.mxu0 0
  %3209 = vmatprep.subr.bf16.mxu0 0
  %3210 = vmatpush1.bf16.msra.mxu0 0
  %3211 = vmatprep.subr.bf16.mxu0 0
  %3212 = vmatpush1.bf16.msra.mxu0 0
  %3213 = vmatprep.subr.bf16.mxu0 0
  %3214 = vmatpush1.bf16.msra.mxu0 0
  %3215 = vmatprep.subr.bf16.mxu0 0
  %3216 = vmatpush1.bf16.msra.mxu0 0
  %3217 = vmatprep.subr.bf16.mxu0 0
  %3218 = vmatpush1.bf16.msra.mxu0 0
  %3219 = vmatprep.subr.bf16.mxu0 0
  %3220 = vmatpush1.bf16.msra.mxu0 0
  %3221 = vmatprep.mubr.bf16.mxu0 0
  %3222 = vmatmul.mubr.bf16.gmra.mrb[0].mxu0 %v3181
  %v3223 = vpop.f32.mrb[0].mxu0
  %v3224 = vadd.f32 %v3027, %v3223
  %v3225 = vpop.f32.mrb[0].mxu0
  %v3226 = vadd.f32 %v3029, %v3225
  %v3227 = vpop.f32.mrb[0].mxu0
  %v3228 = vadd.f32 %v3031, %v3227
  %v3229 = vpop.f32.mrb[0].mxu0
  %v3230 = vadd.f32 %v3033, %v3229
  %3231 = vmatprep.mubr.bf16.mxu0 0
  %3232 = vmatmul.mubr.bf16.gmra.mrb[0].mxu0 %v2962
  %v3233 = vpop.f32.mrb[0].mxu0
  %v3234 = vadd.f32 %v3037, %v3233
  %v3235 = vpop.f32.mrb[0].mxu0
  %v3236 = vadd.f32 %v3039, %v3235
  %v3237 = vpop.f32.mrb[0].mxu0
  %v3238 = vadd.f32 %v3041, %v3237
  %v3239 = vpop.f32.mrb[0].mxu0
  %v3240 = vadd.f32 %v3043, %v3239
  %3241 = vmatprep.mubr.bf16.mxu0 0
  %3242 = vmatmul.mubr.bf16.gmra.mrb[0].mxu0 %v2965
  %v3243 = vpop.f32.mrb[0].mxu0
  %v3244 = vadd.f32 %v3047, %v3243
  %v3245 = vpop.f32.mrb[0].mxu0
  %v3246 = vadd.f32 %v3049, %v3245
  %v3247 = vpop.f32.mrb[0].mxu0
  %v3248 = vadd.f32 %v3051, %v3247
  %v3249 = vpop.f32.mrb[0].mxu0
  %v3250 = vadd.f32 %v3053, %v3249
  %3251 = vmatprep.mubr.bf16.mxu0 0
  %3252 = vmatmul.mubr.bf16.gmra.mrb[0].mxu0 %v2968
  %v3253 = vpop.f32.mrb[0].mxu0
  %v3254 = vadd.f32 %v3057, %v3253
  %v3255 = vpop.f32.mrb[0].mxu0
  %v3256 = vadd.f32 %v3059, %v3255
  %v3257 = vpop.f32.mrb[0].mxu0
  %v3258 = vadd.f32 %v3061, %v3257
  %v3259 = vpop.f32.mrb[0].mxu0
  %v3260 = vadd.f32 %v3063, %v3259
  %3261 = vmatprep.mubr.bf16.mxu0 0
  %3262 = vmatmul.mubr.bf16.gmra.mrb[0].mxu0 %v2971
  %v3263 = vpop.f32.mrb[0].mxu0
  %v3264 = vadd.f32 %v3067, %v3263
  %v3265 = vpop.f32.mrb[0].mxu0
  %v3266 = vadd.f32 %v3069, %v3265
  %v3267 = vpop.f32.mrb[0].mxu0
  %v3268 = vadd.f32 %v3071, %v3267
  %v3269 = vpop.f32.mrb[0].mxu0
  %v3270 = vadd.f32 %v3073, %v3269
  %3271 = vmatprep.mubr.bf16.mxu0 0
  %3272 = vmatmul.mubr.bf16.gmra.mrb[0].mxu0 %v2974
  %v3273 = vpop.f32.mrb[0].mxu0
  %v3274 = vadd.f32 %v3077, %v3273
  %v3275 = vpop.f32.mrb[0].mxu0
  %v3276 = vadd.f32 %v3079, %v3275
  %v3277 = vpop.f32.mrb[0].mxu0
  %v3278 = vadd.f32 %v3081, %v3277
  %v3279 = vpop.f32.mrb[0].mxu0
  %v3280 = vadd.f32 %v3083, %v3279
  %3281 = vmatprep.mubr.bf16.mxu0 0
  %3282 = vmatmul.mubr.bf16.gmra.mrb[0].mxu0 %v2977
  %v3283 = vpop.f32.mrb[0].mxu0
  %v3284 = vadd.f32 %v3087, %v3283
  %v3285 = vpop.f32.mrb[0].mxu0
  %v3286 = vadd.f32 %v3089, %v3285
  %v3287 = vpop.f32.mrb[0].mxu0
  %v3288 = vadd.f32 %v3091, %v3287
  %v3289 = vpop.f32.mrb[0].mxu0
  %v3290 = vadd.f32 %v3093, %v3289
  %3291 = vmatprep.mubr.bf16.mxu0 0
  %3292 = vmatmul.mubr.bf16.gmra.mrb[0].mxu0 %v2980
  %v3293 = vpop.f32.mrb[0].mxu0
  %v3294 = vadd.f32 %v3097, %v3293
  %v3295 = vpop.f32.mrb[0].mxu0
  %v3296 = vadd.f32 %v3099, %v3295
  %v3297 = vpop.f32.mrb[0].mxu0
  %v3298 = vadd.f32 %v3101, %v3297
  %v3299 = vpop.f32.mrb[0].mxu0
  %v3300 = vadd.f32 %v3103, %v3299
  %3301 = vdwg.mxu0
  %s3302 = scalar_lea.vmem %s5, 240
  %v3303 = vld [vmem:[%s3302] sm:$0xff]
  %v3304 = vld [vmem:[%s3302 + $0x8] sm:$0xff]
  %v3305 = vld [vmem:[%s3302 + $0x10] sm:$0xff]
  %v3306 = vld [vmem:[%s3302 + $0x18] sm:$0xff]
  %v3307 = vld [vmem:[%s3302 + $0x20] sm:$0xff]
  %v3308 = vld [vmem:[%s3302 + $0x28] sm:$0xff]
  %v3309 = vld [vmem:[%s3302 + $0x30] sm:$0xff]
  %v3310 = vld [vmem:[%s3302 + $0x38] sm:$0xff]
  %v3311 = vld [vmem:[%s3302 + $0x40] sm:$0xff]
  %v3312 = vld [vmem:[%s3302 + $0x48] sm:$0xff]
  %v3313 = vld [vmem:[%s3302 + $0x50] sm:$0xff]
  %v3314 = vld [vmem:[%s3302 + $0x58] sm:$0xff]
  %v3315 = vld [vmem:[%s3302 + $0x60] sm:$0xff]
  %v3316 = vld [vmem:[%s3302 + $0x68] sm:$0xff]
  %v3317 = vld [vmem:[%s3302 + $0x70] sm:$0xff]
  %v3333 = vunpack.c.l.b16 %v3303
  %v3334 = vunpack.c.h.b16 %v3303
  %v3335 = vunpack.c.l.b16 %v3304
  %v3336 = vunpack.c.h.b16 %v3304
  %v3337 = vunpack.c.l.b16 %v3305
  %v3338 = vunpack.c.h.b16 %v3305
  %v3339 = vunpack.c.l.b16 %v3306
  %v3340 = vunpack.c.h.b16 %v3306
  %v3341 = vunpack.c.l.b16 %v3307
  %v3342 = vunpack.c.h.b16 %v3307
  %v3343 = vunpack.c.l.b16 %v3308
  %v3344 = vunpack.c.h.b16 %v3308
  %v3345 = vunpack.c.l.b16 %v3309
  %v3346 = vunpack.c.h.b16 %v3309
  %v3347 = vunpack.c.l.b16 %v3310
  %v3348 = vunpack.c.h.b16 %v3310
  %v3349 = vunpack.c.l.b16 %v3311
  %v3350 = vunpack.c.h.b16 %v3311
  %v3351 = vunpack.c.l.b16 %v3312
  %v3352 = vunpack.c.h.b16 %v3312
  %v3353 = vunpack.c.l.b16 %v3313
  %v3354 = vunpack.c.h.b16 %v3313
  %v3355 = vunpack.c.l.b16 %v3314
  %v3356 = vunpack.c.h.b16 %v3314
  %v3357 = vunpack.c.l.b16 %v3315
  %v3358 = vunpack.c.h.b16 %v3315
  %v3359 = vunpack.c.l.b16 %v3316
  %v3360 = vunpack.c.h.b16 %v3316
  %v3361 = vunpack.c.l.b16 %v3317
  %v3362 = vunpack.c.h.b16 %v3317
  %v3363 = vpack.c.b16 %v3335, %v3333
  %v3364 = vpack.c.b16 %v3336, %v3334
  %v3365 = vpack.c.b16 %v3339, %v3337
  %v3366 = vpack.c.b16 %v3340, %v3338
  %v3367 = vpack.c.b16 %v3343, %v3341
  %v3368 = vpack.c.b16 %v3344, %v3342
  %v3369 = vpack.c.b16 %v3347, %v3345
  %v3370 = vpack.c.b16 %v3348, %v3346
  %v3371 = vpack.c.b16 %v3351, %v3349
  %v3372 = vpack.c.b16 %v3352, %v3350
  %v3373 = vpack.c.b16 %v3355, %v3353
  %v3374 = vpack.c.b16 %v3356, %v3354
  %v3375 = vpack.c.b16 %v3359, %v3357
  %v3376 = vpack.c.b16 %v3360, %v3358
  %v3377 = vpack.c.b16 %v3361, %v3361
  %v3378 = vpack.c.b16 %v3362, %v3362
  %v3394 = vsel %vm2960, %v2851, 0
  %v3397 = vsel %vm2985, %v3377, 0
  %v3400 = vsel %vm2985, %v3378, 0
  %3402 = vmatprep.subr.bf16.mxu0 %v3364
  %3403 = vmatpush1.bf16.msra.mxu0 %v3363
  %3404 = vmatprep.subr.bf16.mxu0 %v3366
  %3405 = vmatpush1.bf16.msra.mxu0 %v3365
  %3406 = vmatprep.subr.bf16.mxu0 %v3368
  %3407 = vmatpush1.bf16.msra.mxu0 %v3367
  %3408 = vmatprep.subr.bf16.mxu0 %v3370
  %3409 = vmatpush1.bf16.msra.mxu0 %v3369
  %3410 = vmatprep.subr.bf16.mxu0 %v3372
  %3411 = vmatpush1.bf16.msra.mxu0 %v3371
  %3412 = vmatprep.subr.bf16.mxu0 %v3374
  %3413 = vmatpush1.bf16.msra.mxu0 %v3373
  %3414 = vmatprep.subr.bf16.mxu0 %v3376
  %3415 = vmatpush1.bf16.msra.mxu0 %v3375
  %3416 = vmatprep.subr.bf16.mxu0 %v3400
  %3417 = vmatpush1.bf16.msra.mxu0 %v3397
  %3418 = vmatprep.subr.bf16.mxu0 0
  %3419 = vmatpush1.bf16.msra.mxu0 0
  %3420 = vmatprep.subr.bf16.mxu0 0
  %3421 = vmatpush1.bf16.msra.mxu0 0
  %3422 = vmatprep.subr.bf16.mxu0 0
  %3423 = vmatpush1.bf16.msra.mxu0 0
  %3424 = vmatprep.subr.bf16.mxu0 0
  %3425 = vmatpush1.bf16.msra.mxu0 0
  %3426 = vmatprep.subr.bf16.mxu0 0
  %3427 = vmatpush1.bf16.msra.mxu0 0
  %3428 = vmatprep.subr.bf16.mxu0 0
  %3429 = vmatpush1.bf16.msra.mxu0 0
  %3430 = vmatprep.subr.bf16.mxu0 0
  %3431 = vmatpush1.bf16.msra.mxu0 0
  %3432 = vmatprep.subr.bf16.mxu0 0
  %3433 = vmatpush1.bf16.msra.mxu0 0
  %3434 = vmatprep.mubr.bf16.mxu0 0
  %3435 = vmatmul.mubr.bf16.gmra.mrb[0].mxu0 %v2965
  %v3436 = vpop.f32.mrb[0].mxu0
  %v3437 = vadd.f32 0.0, %v3436
  %v3438 = vpop.f32.mrb[0].mxu0
  %v3439 = vadd.f32 0.0, %v3438
  %v3440 = vpop.f32.mrb[0].mxu0
  %v3441 = vadd.f32 0.0, %v3440
  %v3442 = vpop.f32.mrb[0].mxu0
  %v3443 = vadd.f32 0.0, %v3442
  %3444 = vmatprep.mubr.bf16.mxu0 0
  %3445 = vmatmul.mubr.bf16.gmra.mrb[0].mxu0 %v2968
  %v3446 = vpop.f32.mrb[0].mxu0
  %v3447 = vadd.f32 0.0, %v3446
  %v3448 = vpop.f32.mrb[0].mxu0
  %v3449 = vadd.f32 0.0, %v3448
  %v3450 = vpop.f32.mrb[0].mxu0
  %v3451 = vadd.f32 0.0, %v3450
  %v3452 = vpop.f32.mrb[0].mxu0
  %v3453 = vadd.f32 0.0, %v3452
  %3454 = vmatprep.mubr.bf16.mxu0 0
  %3455 = vmatmul.mubr.bf16.gmra.mrb[0].mxu0 %v2971
  %v3456 = vpop.f32.mrb[0].mxu0
  %v3457 = vadd.f32 0.0, %v3456
  %v3458 = vpop.f32.mrb[0].mxu0
  %v3459 = vadd.f32 0.0, %v3458
  %v3460 = vpop.f32.mrb[0].mxu0
  %v3461 = vadd.f32 0.0, %v3460
  %v3462 = vpop.f32.mrb[0].mxu0
  %v3463 = vadd.f32 0.0, %v3462
  %3464 = vmatprep.mubr.bf16.mxu0 0
  %3465 = vmatmul.mubr.bf16.gmra.mrb[0].mxu0 %v2974
  %v3466 = vpop.f32.mrb[0].mxu0
  %v3467 = vadd.f32 0.0, %v3466
  %v3468 = vpop.f32.mrb[0].mxu0
  %v3469 = vadd.f32 0.0, %v3468
  %v3470 = vpop.f32.mrb[0].mxu0
  %v3471 = vadd.f32 0.0, %v3470
  %v3472 = vpop.f32.mrb[0].mxu0
  %v3473 = vadd.f32 0.0, %v3472
  %3474 = vmatprep.mubr.bf16.mxu0 0
  %3475 = vmatmul.mubr.bf16.gmra.mrb[0].mxu0 %v2977
  %v3476 = vpop.f32.mrb[0].mxu0
  %v3477 = vadd.f32 0.0, %v3476
  %v3478 = vpop.f32.mrb[0].mxu0
  %v3479 = vadd.f32 0.0, %v3478
  %v3480 = vpop.f32.mrb[0].mxu0
  %v3481 = vadd.f32 0.0, %v3480
  %v3482 = vpop.f32.mrb[0].mxu0
  %v3483 = vadd.f32 0.0, %v3482
  %3484 = vmatprep.mubr.bf16.mxu0 0
  %3485 = vmatmul.mubr.bf16.gmra.mrb[0].mxu0 %v2980
  %v3486 = vpop.f32.mrb[0].mxu0
  %v3487 = vadd.f32 0.0, %v3486
  %v3488 = vpop.f32.mrb[0].mxu0
  %v3489 = vadd.f32 0.0, %v3488
  %v3490 = vpop.f32.mrb[0].mxu0
  %v3491 = vadd.f32 0.0, %v3490
  %v3492 = vpop.f32.mrb[0].mxu0
  %v3493 = vadd.f32 0.0, %v3492
  %3494 = vmatprep.mubr.bf16.mxu0 0
  %3495 = vmatmul.mubr.bf16.gmra.mrb[0].mxu0 %v2983
  %v3496 = vpop.f32.mrb[0].mxu0
  %v3497 = vadd.f32 0.0, %v3496
  %v3498 = vpop.f32.mrb[0].mxu0
  %v3499 = vadd.f32 0.0, %v3498
  %v3500 = vpop.f32.mrb[0].mxu0
  %v3501 = vadd.f32 0.0, %v3500
  %v3502 = vpop.f32.mrb[0].mxu0
  %v3503 = vadd.f32 0.0, %v3502
  %3504 = vmatprep.mubr.bf16.mxu0 0
  %3505 = vmatmul.mubr.bf16.gmra.mrb[0].mxu0 %v3394
  %v3506 = vpop.f32.mrb[0].mxu0
  %v3507 = vadd.f32 0.0, %v3506
  %v3508 = vpop.f32.mrb[0].mxu0
  %v3509 = vadd.f32 0.0, %v3508
  %v3510 = vpop.f32.mrb[0].mxu0
  %v3511 = vadd.f32 0.0, %v3510
  %v3512 = vpop.f32.mrb[0].mxu0
  %v3513 = vadd.f32 0.0, %v3512
  %3514 = vdwg.mxu0
  %v3515 = vadd.f32 %v3224, %v3437
  %v3516 = vadd.f32 %v3226, %v3439
  %v3517 = vadd.f32 %v3228, %v3441
  %v3518 = vadd.f32 %v3230, %v3443
  %v3519 = vadd.f32 %v3234, %v3447
  %v3520 = vadd.f32 %v3236, %v3449
  %v3521 = vadd.f32 %v3238, %v3451
  %v3522 = vadd.f32 %v3240, %v3453
  %v3523 = vadd.f32 %v3244, %v3457
  %v3524 = vadd.f32 %v3246, %v3459
  %v3525 = vadd.f32 %v3248, %v3461
  %v3526 = vadd.f32 %v3250, %v3463
  %v3527 = vadd.f32 %v3254, %v3467
  %v3528 = vadd.f32 %v3256, %v3469
  %v3529 = vadd.f32 %v3258, %v3471
  %v3530 = vadd.f32 %v3260, %v3473
  %v3531 = vadd.f32 %v3264, %v3477
  %v3532 = vadd.f32 %v3266, %v3479
  %v3533 = vadd.f32 %v3268, %v3481
  %v3534 = vadd.f32 %v3270, %v3483
  %v3535 = vadd.f32 %v3274, %v3487
  %v3536 = vadd.f32 %v3276, %v3489
  %v3537 = vadd.f32 %v3278, %v3491
  %v3538 = vadd.f32 %v3280, %v3493
  %v3539 = vadd.f32 %v3284, %v3497
  %v3540 = vadd.f32 %v3286, %v3499
  %v3541 = vadd.f32 %v3288, %v3501
  %v3542 = vadd.f32 %v3290, %v3503
  %v3543 = vadd.f32 %v3294, %v3507
  %v3544 = vadd.f32 %v3296, %v3509
  %v3545 = vadd.f32 %v3298, %v3511
  %v3546 = vadd.f32 %v3300, %v3513
  %s3547 = scalar_lea.vmem %s5, 360
  %v3548 = vld [vmem:[%s3547] sm:$0xff]
  %v3549 = vld [vmem:[%s3547 + $0x8] sm:$0xff]
  %v3550 = vld [vmem:[%s3547 + $0x10] sm:$0xff]
  %v3551 = vld [vmem:[%s3547 + $0x18] sm:$0xff]
  %v3552 = vld [vmem:[%s3547 + $0x20] sm:$0xff]
  %v3553 = vld [vmem:[%s3547 + $0x28] sm:$0xff]
  %v3554 = vld [vmem:[%s3547 + $0x30] sm:$0xff]
  %v3555 = vld [vmem:[%s3547 + $0x38] sm:$0xff]
  %v3556 = vld [vmem:[%s3547 + $0x40] sm:$0xff]
  %v3557 = vld [vmem:[%s3547 + $0x48] sm:$0xff]
  %v3558 = vld [vmem:[%s3547 + $0x50] sm:$0xff]
  %v3559 = vld [vmem:[%s3547 + $0x58] sm:$0xff]
  %v3560 = vld [vmem:[%s3547 + $0x60] sm:$0xff]
  %v3561 = vld [vmem:[%s3547 + $0x68] sm:$0xff]
  %v3562 = vld [vmem:[%s3547 + $0x70] sm:$0xff]
  %v3578 = vunpack.c.l.b16 %v3548
  %v3579 = vunpack.c.h.b16 %v3548
  %v3580 = vunpack.c.l.b16 %v3549
  %v3581 = vunpack.c.h.b16 %v3549
  %v3582 = vunpack.c.l.b16 %v3550
  %v3583 = vunpack.c.h.b16 %v3550
  %v3584 = vunpack.c.l.b16 %v3551
  %v3585 = vunpack.c.h.b16 %v3551
  %v3586 = vunpack.c.l.b16 %v3552
  %v3587 = vunpack.c.h.b16 %v3552
  %v3588 = vunpack.c.l.b16 %v3553
  %v3589 = vunpack.c.h.b16 %v3553
  %v3590 = vunpack.c.l.b16 %v3554
  %v3591 = vunpack.c.h.b16 %v3554
  %v3592 = vunpack.c.l.b16 %v3555
  %v3593 = vunpack.c.h.b16 %v3555
  %v3594 = vunpack.c.l.b16 %v3556
  %v3595 = vunpack.c.h.b16 %v3556
  %v3596 = vunpack.c.l.b16 %v3557
  %v3597 = vunpack.c.h.b16 %v3557
  %v3598 = vunpack.c.l.b16 %v3558
  %v3599 = vunpack.c.h.b16 %v3558
  %v3600 = vunpack.c.l.b16 %v3559
  %v3601 = vunpack.c.h.b16 %v3559
  %v3602 = vunpack.c.l.b16 %v3560
  %v3603 = vunpack.c.h.b16 %v3560
  %v3604 = vunpack.c.l.b16 %v3561
  %v3605 = vunpack.c.h.b16 %v3561
  %v3606 = vunpack.c.l.b16 %v3562
  %v3607 = vunpack.c.h.b16 %v3562
  %v3608 = vpack.c.b16 %v3580, %v3578
  %v3609 = vpack.c.b16 %v3581, %v3579
  %v3610 = vpack.c.b16 %v3584, %v3582
  %v3611 = vpack.c.b16 %v3585, %v3583
  %v3612 = vpack.c.b16 %v3588, %v3586
  %v3613 = vpack.c.b16 %v3589, %v3587
  %v3614 = vpack.c.b16 %v3592, %v3590
  %v3615 = vpack.c.b16 %v3593, %v3591
  %v3616 = vpack.c.b16 %v3596, %v3594
  %v3617 = vpack.c.b16 %v3597, %v3595
  %v3618 = vpack.c.b16 %v3600, %v3598
  %v3619 = vpack.c.b16 %v3601, %v3599
  %v3620 = vpack.c.b16 %v3604, %v3602
  %v3621 = vpack.c.b16 %v3605, %v3603
  %v3622 = vpack.c.b16 %v3606, %v3606
  %v3623 = vpack.c.b16 %v3607, %v3607
  %v3639 = vsel %vm2960, %v2852, 0
  %v3642 = vsel %vm2985, %v3622, 0
  %v3645 = vsel %vm2985, %v3623, 0
  %3647 = vmatprep.subr.bf16.mxu0 %v3609
  %3648 = vmatpush1.bf16.msra.mxu0 %v3608
  %3649 = vmatprep.subr.bf16.mxu0 %v3611
  %3650 = vmatpush1.bf16.msra.mxu0 %v3610
  %3651 = vmatprep.subr.bf16.mxu0 %v3613
  %3652 = vmatpush1.bf16.msra.mxu0 %v3612
  %3653 = vmatprep.subr.bf16.mxu0 %v3615
  %3654 = vmatpush1.bf16.msra.mxu0 %v3614
  %3655 = vmatprep.subr.bf16.mxu0 %v3617
  %3656 = vmatpush1.bf16.msra.mxu0 %v3616
  %3657 = vmatprep.subr.bf16.mxu0 %v3619
  %3658 = vmatpush1.bf16.msra.mxu0 %v3618
  %3659 = vmatprep.subr.bf16.mxu0 %v3621
  %3660 = vmatpush1.bf16.msra.mxu0 %v3620
  %3661 = vmatprep.subr.bf16.mxu0 %v3645
  %3662 = vmatpush1.bf16.msra.mxu0 %v3642
  %3663 = vmatprep.subr.bf16.mxu0 0
  %3664 = vmatpush1.bf16.msra.mxu0 0
  %3665 = vmatprep.subr.bf16.mxu0 0
  %3666 = vmatpush1.bf16.msra.mxu0 0
  %3667 = vmatprep.subr.bf16.mxu0 0
  %3668 = vmatpush1.bf16.msra.mxu0 0
  %3669 = vmatprep.subr.bf16.mxu0 0
  %3670 = vmatpush1.bf16.msra.mxu0 0
  %3671 = vmatprep.subr.bf16.mxu0 0
  %3672 = vmatpush1.bf16.msra.mxu0 0
  %3673 = vmatprep.subr.bf16.mxu0 0
  %3674 = vmatpush1.bf16.msra.mxu0 0
  %3675 = vmatprep.subr.bf16.mxu0 0
  %3676 = vmatpush1.bf16.msra.mxu0 0
  %3677 = vmatprep.subr.bf16.mxu0 0
  %3678 = vmatpush1.bf16.msra.mxu0 0
  %3679 = vmatprep.mubr.bf16.mxu0 0
  %3680 = vmatmul.mubr.bf16.gmra.mrb[0].mxu0 %v2968
  %v3681 = vpop.f32.mrb[0].mxu0
  %v3682 = vadd.f32 0.0, %v3681
  %v3683 = vpop.f32.mrb[0].mxu0
  %v3684 = vadd.f32 0.0, %v3683
  %v3685 = vpop.f32.mrb[0].mxu0
  %v3686 = vadd.f32 0.0, %v3685
  %v3687 = vpop.f32.mrb[0].mxu0
  %v3688 = vadd.f32 0.0, %v3687
  %3689 = vmatprep.mubr.bf16.mxu0 0
  %3690 = vmatmul.mubr.bf16.gmra.mrb[0].mxu0 %v2971
  %v3691 = vpop.f32.mrb[0].mxu0
  %v3692 = vadd.f32 0.0, %v3691
  %v3693 = vpop.f32.mrb[0].mxu0
  %v3694 = vadd.f32 0.0, %v3693
  %v3695 = vpop.f32.mrb[0].mxu0
  %v3696 = vadd.f32 0.0, %v3695
  %v3697 = vpop.f32.mrb[0].mxu0
  %v3698 = vadd.f32 0.0, %v3697
  %3699 = vmatprep.mubr.bf16.mxu0 0
  %3700 = vmatmul.mubr.bf16.gmra.mrb[0].mxu0 %v2974
  %v3701 = vpop.f32.mrb[0].mxu0
  %v3702 = vadd.f32 0.0, %v3701
  %v3703 = vpop.f32.mrb[0].mxu0
  %v3704 = vadd.f32 0.0, %v3703
  %v3705 = vpop.f32.mrb[0].mxu0
  %v3706 = vadd.f32 0.0, %v3705
  %v3707 = vpop.f32.mrb[0].mxu0
  %v3708 = vadd.f32 0.0, %v3707
  %3709 = vmatprep.mubr.bf16.mxu0 0
  %3710 = vmatmul.mubr.bf16.gmra.mrb[0].mxu0 %v2977
  %v3711 = vpop.f32.mrb[0].mxu0
  %v3712 = vadd.f32 0.0, %v3711
  %v3713 = vpop.f32.mrb[0].mxu0
  %v3714 = vadd.f32 0.0, %v3713
  %v3715 = vpop.f32.mrb[0].mxu0
  %v3716 = vadd.f32 0.0, %v3715
  %v3717 = vpop.f32.mrb[0].mxu0
  %v3718 = vadd.f32 0.0, %v3717
  %3719 = vmatprep.mubr.bf16.mxu0 0
  %3720 = vmatmul.mubr.bf16.gmra.mrb[0].mxu0 %v2980
  %v3721 = vpop.f32.mrb[0].mxu0
  %v3722 = vadd.f32 0.0, %v3721
  %v3723 = vpop.f32.mrb[0].mxu0
  %v3724 = vadd.f32 0.0, %v3723
  %v3725 = vpop.f32.mrb[0].mxu0
  %v3726 = vadd.f32 0.0, %v3725
  %v3727 = vpop.f32.mrb[0].mxu0
  %v3728 = vadd.f32 0.0, %v3727
  %3729 = vmatprep.mubr.bf16.mxu0 0
  %3730 = vmatmul.mubr.bf16.gmra.mrb[0].mxu0 %v2983
  %v3731 = vpop.f32.mrb[0].mxu0
  %v3732 = vadd.f32 0.0, %v3731
  %v3733 = vpop.f32.mrb[0].mxu0
  %v3734 = vadd.f32 0.0, %v3733
  %v3735 = vpop.f32.mrb[0].mxu0
  %v3736 = vadd.f32 0.0, %v3735
  %v3737 = vpop.f32.mrb[0].mxu0
  %v3738 = vadd.f32 0.0, %v3737
  %3739 = vmatprep.mubr.bf16.mxu0 0
  %3740 = vmatmul.mubr.bf16.gmra.mrb[0].mxu0 %v3394
  %v3741 = vpop.f32.mrb[0].mxu0
  %v3742 = vadd.f32 0.0, %v3741
  %v3743 = vpop.f32.mrb[0].mxu0
  %v3744 = vadd.f32 0.0, %v3743
  %v3745 = vpop.f32.mrb[0].mxu0
  %v3746 = vadd.f32 0.0, %v3745
  %v3747 = vpop.f32.mrb[0].mxu0
  %v3748 = vadd.f32 0.0, %v3747
  %3749 = vmatprep.mubr.bf16.mxu0 0
  %3750 = vmatmul.mubr.bf16.gmra.mrb[0].mxu0 %v3639
  %v3751 = vpop.f32.mrb[0].mxu0
  %v3752 = vadd.f32 0.0, %v3751
  %v3753 = vpop.f32.mrb[0].mxu0
  %v3754 = vadd.f32 0.0, %v3753
  %v3755 = vpop.f32.mrb[0].mxu0
  %v3756 = vadd.f32 0.0, %v3755
  %v3757 = vpop.f32.mrb[0].mxu0
  %v3758 = vadd.f32 0.0, %v3757
  %3759 = vdwg.mxu0
  %v3760 = vadd.f32 %v3515, %v3682
  %v3761 = vadd.f32 %v3516, %v3684
  %v3762 = vadd.f32 %v3517, %v3686
  %v3763 = vadd.f32 %v3518, %v3688
  %v3764 = vadd.f32 %v3519, %v3692
  %v3765 = vadd.f32 %v3520, %v3694
  %v3766 = vadd.f32 %v3521, %v3696
  %v3767 = vadd.f32 %v3522, %v3698
  %v3768 = vadd.f32 %v3523, %v3702
  %v3769 = vadd.f32 %v3524, %v3704
  %v3770 = vadd.f32 %v3525, %v3706
  %v3771 = vadd.f32 %v3526, %v3708
  %v3772 = vadd.f32 %v3527, %v3712
  %v3773 = vadd.f32 %v3528, %v3714
  %v3774 = vadd.f32 %v3529, %v3716
  %v3775 = vadd.f32 %v3530, %v3718
  %v3776 = vadd.f32 %v3531, %v3722
  %v3777 = vadd.f32 %v3532, %v3724
  %v3778 = vadd.f32 %v3533, %v3726
  %v3779 = vadd.f32 %v3534, %v3728
  %v3780 = vadd.f32 %v3535, %v3732
  %v3781 = vadd.f32 %v3536, %v3734
  %v3782 = vadd.f32 %v3537, %v3736
  %v3783 = vadd.f32 %v3538, %v3738
  %v3784 = vadd.f32 %v3539, %v3742
  %v3785 = vadd.f32 %v3540, %v3744
  %v3786 = vadd.f32 %v3541, %v3746
  %v3787 = vadd.f32 %v3542, %v3748
  %v3788 = vadd.f32 %v3543, %v3752
  %v3789 = vadd.f32 %v3544, %v3754
  %v3790 = vadd.f32 %v3545, %v3756
  %v3791 = vadd.f32 %v3546, %v3758
  %s3792 = scalar_lea.vmem %s5, 480
  %v3793 = vld [vmem:[%s3792] sm:$0xff]
  %v3794 = vld [vmem:[%s3792 + $0x8] sm:$0xff]
  %v3795 = vld [vmem:[%s3792 + $0x10] sm:$0xff]
  %v3796 = vld [vmem:[%s3792 + $0x18] sm:$0xff]
  %v3797 = vld [vmem:[%s3792 + $0x20] sm:$0xff]
  %v3798 = vld [vmem:[%s3792 + $0x28] sm:$0xff]
  %v3799 = vld [vmem:[%s3792 + $0x30] sm:$0xff]
  %v3800 = vld [vmem:[%s3792 + $0x38] sm:$0xff]
  %v3801 = vld [vmem:[%s3792 + $0x40] sm:$0xff]
  %v3802 = vld [vmem:[%s3792 + $0x48] sm:$0xff]
  %v3803 = vld [vmem:[%s3792 + $0x50] sm:$0xff]
  %v3804 = vld [vmem:[%s3792 + $0x58] sm:$0xff]
  %v3805 = vld [vmem:[%s3792 + $0x60] sm:$0xff]
  %v3806 = vld [vmem:[%s3792 + $0x68] sm:$0xff]
  %v3807 = vld [vmem:[%s3792 + $0x70] sm:$0xff]
  %v3823 = vunpack.c.l.b16 %v3793
  %v3824 = vunpack.c.h.b16 %v3793
  %v3825 = vunpack.c.l.b16 %v3794
  %v3826 = vunpack.c.h.b16 %v3794
  %v3827 = vunpack.c.l.b16 %v3795
  %v3828 = vunpack.c.h.b16 %v3795
  %v3829 = vunpack.c.l.b16 %v3796
  %v3830 = vunpack.c.h.b16 %v3796
  %v3831 = vunpack.c.l.b16 %v3797
  %v3832 = vunpack.c.h.b16 %v3797
  %v3833 = vunpack.c.l.b16 %v3798
  %v3834 = vunpack.c.h.b16 %v3798
  %v3835 = vunpack.c.l.b16 %v3799
  %v3836 = vunpack.c.h.b16 %v3799
  %v3837 = vunpack.c.l.b16 %v3800
  %v3838 = vunpack.c.h.b16 %v3800
  %v3839 = vunpack.c.l.b16 %v3801
  %v3840 = vunpack.c.h.b16 %v3801
  %v3841 = vunpack.c.l.b16 %v3802
  %v3842 = vunpack.c.h.b16 %v3802
  %v3843 = vunpack.c.l.b16 %v3803
  %v3844 = vunpack.c.h.b16 %v3803
  %v3845 = vunpack.c.l.b16 %v3804
  %v3846 = vunpack.c.h.b16 %v3804
  %v3847 = vunpack.c.l.b16 %v3805
  %v3848 = vunpack.c.h.b16 %v3805
  %v3849 = vunpack.c.l.b16 %v3806
  %v3850 = vunpack.c.h.b16 %v3806
  %v3851 = vunpack.c.l.b16 %v3807
  %v3852 = vunpack.c.h.b16 %v3807
  %v3853 = vpack.c.b16 %v3825, %v3823
  %v3854 = vpack.c.b16 %v3826, %v3824
  %v3855 = vpack.c.b16 %v3829, %v3827
  %v3856 = vpack.c.b16 %v3830, %v3828
  %v3857 = vpack.c.b16 %v3833, %v3831
  %v3858 = vpack.c.b16 %v3834, %v3832
  %v3859 = vpack.c.b16 %v3837, %v3835
  %v3860 = vpack.c.b16 %v3838, %v3836
  %v3861 = vpack.c.b16 %v3841, %v3839
  %v3862 = vpack.c.b16 %v3842, %v3840
  %v3863 = vpack.c.b16 %v3845, %v3843
  %v3864 = vpack.c.b16 %v3846, %v3844
  %v3865 = vpack.c.b16 %v3849, %v3847
  %v3866 = vpack.c.b16 %v3850, %v3848
  %v3867 = vpack.c.b16 %v3851, %v3851
  %v3868 = vpack.c.b16 %v3852, %v3852
  %v3884 = vsel %vm2960, %v2853, 0
  %v3887 = vsel %vm2985, %v3867, 0
  %v3890 = vsel %vm2985, %v3868, 0
  %3892 = vmatprep.subr.bf16.mxu0 %v3854
  %3893 = vmatpush1.bf16.msra.mxu0 %v3853
  %3894 = vmatprep.subr.bf16.mxu0 %v3856
  %3895 = vmatpush1.bf16.msra.mxu0 %v3855
  %3896 = vmatprep.subr.bf16.mxu0 %v3858
  %3897 = vmatpush1.bf16.msra.mxu0 %v3857
  %3898 = vmatprep.subr.bf16.mxu0 %v3860
  %3899 = vmatpush1.bf16.msra.mxu0 %v3859
  %3900 = vmatprep.subr.bf16.mxu0 %v3862
  %3901 = vmatpush1.bf16.msra.mxu0 %v3861
  %3902 = vmatprep.subr.bf16.mxu0 %v3864
  %3903 = vmatpush1.bf16.msra.mxu0 %v3863
  %3904 = vmatprep.subr.bf16.mxu0 %v3866
  %3905 = vmatpush1.bf16.msra.mxu0 %v3865
  %3906 = vmatprep.subr.bf16.mxu0 %v3890
  %3907 = vmatpush1.bf16.msra.mxu0 %v3887
  %3908 = vmatprep.subr.bf16.mxu0 0
  %3909 = vmatpush1.bf16.msra.mxu0 0
  %3910 = vmatprep.subr.bf16.mxu0 0
  %3911 = vmatpush1.bf16.msra.mxu0 0
  %3912 = vmatprep.subr.bf16.mxu0 0
  %3913 = vmatpush1.bf16.msra.mxu0 0
  %3914 = vmatprep.subr.bf16.mxu0 0
  %3915 = vmatpush1.bf16.msra.mxu0 0
  %3916 = vmatprep.subr.bf16.mxu0 0
  %3917 = vmatpush1.bf16.msra.mxu0 0
  %3918 = vmatprep.subr.bf16.mxu0 0
  %3919 = vmatpush1.bf16.msra.mxu0 0
  %3920 = vmatprep.subr.bf16.mxu0 0
  %3921 = vmatpush1.bf16.msra.mxu0 0
  %3922 = vmatprep.subr.bf16.mxu0 0
  %3923 = vmatpush1.bf16.msra.mxu0 0
  %3924 = vmatprep.mubr.bf16.mxu0 0
  %3925 = vmatmul.mubr.bf16.gmra.mrb[0].mxu0 %v2971
  %v3926 = vpop.f32.mrb[0].mxu0
  %v3927 = vadd.f32 0.0, %v3926
  %v3928 = vpop.f32.mrb[0].mxu0
  %v3929 = vadd.f32 0.0, %v3928
  %v3930 = vpop.f32.mrb[0].mxu0
  %v3931 = vadd.f32 0.0, %v3930
  %v3932 = vpop.f32.mrb[0].mxu0
  %v3933 = vadd.f32 0.0, %v3932
  %3934 = vmatprep.mubr.bf16.mxu0 0
  %3935 = vmatmul.mubr.bf16.gmra.mrb[0].mxu0 %v2974
  %v3936 = vpop.f32.mrb[0].mxu0
  %v3937 = vadd.f32 0.0, %v3936
  %v3938 = vpop.f32.mrb[0].mxu0
  %v3939 = vadd.f32 0.0, %v3938
  %v3940 = vpop.f32.mrb[0].mxu0
  %v3941 = vadd.f32 0.0, %v3940
  %v3942 = vpop.f32.mrb[0].mxu0
  %v3943 = vadd.f32 0.0, %v3942
  %3944 = vmatprep.mubr.bf16.mxu0 0
  %3945 = vmatmul.mubr.bf16.gmra.mrb[0].mxu0 %v2977
  %v3946 = vpop.f32.mrb[0].mxu0
  %v3947 = vadd.f32 0.0, %v3946
  %v3948 = vpop.f32.mrb[0].mxu0
  %v3949 = vadd.f32 0.0, %v3948
  %v3950 = vpop.f32.mrb[0].mxu0
  %v3951 = vadd.f32 0.0, %v3950
  %v3952 = vpop.f32.mrb[0].mxu0
  %v3953 = vadd.f32 0.0, %v3952
  %3954 = vmatprep.mubr.bf16.mxu0 0
  %3955 = vmatmul.mubr.bf16.gmra.mrb[0].mxu0 %v2980
  %v3956 = vpop.f32.mrb[0].mxu0
  %v3957 = vadd.f32 0.0, %v3956
  %v3958 = vpop.f32.mrb[0].mxu0
  %v3959 = vadd.f32 0.0, %v3958
  %v3960 = vpop.f32.mrb[0].mxu0
  %v3961 = vadd.f32 0.0, %v3960
  %v3962 = vpop.f32.mrb[0].mxu0
  %v3963 = vadd.f32 0.0, %v3962
  %3964 = vmatprep.mubr.bf16.mxu0 0
  %3965 = vmatmul.mubr.bf16.gmra.mrb[0].mxu0 %v2983
  %v3966 = vpop.f32.mrb[0].mxu0
  %v3967 = vadd.f32 0.0, %v3966
  %v3968 = vpop.f32.mrb[0].mxu0
  %v3969 = vadd.f32 0.0, %v3968
  %v3970 = vpop.f32.mrb[0].mxu0
  %v3971 = vadd.f32 0.0, %v3970
  %v3972 = vpop.f32.mrb[0].mxu0
  %v3973 = vadd.f32 0.0, %v3972
  %3974 = vmatprep.mubr.bf16.mxu0 0
  %3975 = vmatmul.mubr.bf16.gmra.mrb[0].mxu0 %v3394
  %v3976 = vpop.f32.mrb[0].mxu0
  %v3977 = vadd.f32 0.0, %v3976
  %v3978 = vpop.f32.mrb[0].mxu0
  %v3979 = vadd.f32 0.0, %v3978
  %v3980 = vpop.f32.mrb[0].mxu0
  %v3981 = vadd.f32 0.0, %v3980
  %v3982 = vpop.f32.mrb[0].mxu0
  %v3983 = vadd.f32 0.0, %v3982
  %3984 = vmatprep.mubr.bf16.mxu0 0
  %3985 = vmatmul.mubr.bf16.gmra.mrb[0].mxu0 %v3639
  %v3986 = vpop.f32.mrb[0].mxu0
  %v3987 = vadd.f32 0.0, %v3986
  %v3988 = vpop.f32.mrb[0].mxu0
  %v3989 = vadd.f32 0.0, %v3988
  %v3990 = vpop.f32.mrb[0].mxu0
  %v3991 = vadd.f32 0.0, %v3990
  %v3992 = vpop.f32.mrb[0].mxu0
  %v3993 = vadd.f32 0.0, %v3992
  %3994 = vmatprep.mubr.bf16.mxu0 0
  %3995 = vmatmul.mubr.bf16.gmra.mrb[0].mxu0 %v3884
  %v3996 = vpop.f32.mrb[0].mxu0
  %v3997 = vadd.f32 0.0, %v3996
  %v3998 = vpop.f32.mrb[0].mxu0
  %v3999 = vadd.f32 0.0, %v3998
  %v4000 = vpop.f32.mrb[0].mxu0
  %v4001 = vadd.f32 0.0, %v4000
  %v4002 = vpop.f32.mrb[0].mxu0
  %v4003 = vadd.f32 0.0, %v4002
  %4004 = vdwg.mxu0
  %v4005 = vadd.f32 %v3760, %v3927
  %v4006 = vadd.f32 %v3761, %v3929
  %v4007 = vadd.f32 %v3762, %v3931
  %v4008 = vadd.f32 %v3763, %v3933
  %v4009 = vadd.f32 %v3764, %v3937
  %v4010 = vadd.f32 %v3765, %v3939
  %v4011 = vadd.f32 %v3766, %v3941
  %v4012 = vadd.f32 %v3767, %v3943
  %v4013 = vadd.f32 %v3768, %v3947
  %v4014 = vadd.f32 %v3769, %v3949
  %v4015 = vadd.f32 %v3770, %v3951
  %v4016 = vadd.f32 %v3771, %v3953
  %v4017 = vadd.f32 %v3772, %v3957
  %v4018 = vadd.f32 %v3773, %v3959
  %v4019 = vadd.f32 %v3774, %v3961
  %v4020 = vadd.f32 %v3775, %v3963
  %v4021 = vadd.f32 %v3776, %v3967
  %v4022 = vadd.f32 %v3777, %v3969
  %v4023 = vadd.f32 %v3778, %v3971
  %v4024 = vadd.f32 %v3779, %v3973
  %v4025 = vadd.f32 %v3780, %v3977
  %v4026 = vadd.f32 %v3781, %v3979
  %v4027 = vadd.f32 %v3782, %v3981
  %v4028 = vadd.f32 %v3783, %v3983
  %v4029 = vadd.f32 %v3784, %v3987
  %v4030 = vadd.f32 %v3785, %v3989
  %v4031 = vadd.f32 %v3786, %v3991
  %v4032 = vadd.f32 %v3787, %v3993
  %v4033 = vadd.f32 %v3788, %v3997
  %v4034 = vadd.f32 %v3789, %v3999
  %v4035 = vadd.f32 %v3790, %v4001
  %v4036 = vadd.f32 %v3791, %v4003
  %v4037 = vmax.f32 %v4005, %v4009
  %v4038 = vmax.f32 %v4006, %v4010
  %v4039 = vmax.f32 %v4007, %v4011
  %v4040 = vmax.f32 %v4008, %v4012
  %v4041 = vmax.f32 %v4013, %v4017
  %v4042 = vmax.f32 %v4014, %v4018
  %v4043 = vmax.f32 %v4015, %v4019
  %v4044 = vmax.f32 %v4016, %v4020
  %v4045 = vmax.f32 %v4021, %v4025
  %v4046 = vmax.f32 %v4022, %v4026
  %v4047 = vmax.f32 %v4023, %v4027
  %v4048 = vmax.f32 %v4024, %v4028
  %v4049 = vmax.f32 %v4029, %v4033
  %v4050 = vmax.f32 %v4030, %v4034
  %v4051 = vmax.f32 %v4031, %v4035
  %v4052 = vmax.f32 %v4032, %v4036
  %v4053 = vld [vmem:[%s6] sm:$0x3]
  %v4055 = vlaneseq
  %v4056 = vshrl.u32 %v4055, 7
  %v4057 = vsub.s32 0, %v4056
  %v4058 = vrot.slane %v4053, %v4057
  %v4059 = vlaneseq
  %v4060 = vshrl.u32 %v4059, 7
  %v4061 = vsub.s32 1, %v4060
  %v4062 = vrot.slane %v4053, %v4061
  %v4065 = vadd.f32 %v4037, %v4058
  %v4066 = vadd.f32 %v4038, %v4062
  %v4067 = vadd.f32 %v4039, %v4058
  %v4068 = vadd.f32 %v4040, %v4062
  %v4069 = vadd.f32 %v4041, %v4058
  %v4070 = vadd.f32 %v4042, %v4062
  %v4071 = vadd.f32 %v4043, %v4058
  %v4072 = vadd.f32 %v4044, %v4062
  %v4073 = vadd.f32 %v4045, %v4058
  %v4074 = vadd.f32 %v4046, %v4062
  %v4075 = vadd.f32 %v4047, %v4058
  %v4076 = vadd.f32 %v4048, %v4062
  %v4077 = vadd.f32 %v4049, %v4058
  %v4078 = vadd.f32 %v4050, %v4062
  %v4079 = vadd.f32 %v4051, %v4058
  %v4080 = vadd.f32 %v4052, %v4062
  %v4081 = vpack.c.bf16 %v4067, %v4065
  %v4082 = vpack.c.bf16 %v4068, %v4066
  %v4083 = vpack.c.bf16 %v4071, %v4069
  %v4084 = vpack.c.bf16 %v4072, %v4070
  %v4085 = vpack.c.bf16 %v4075, %v4073
  %v4086 = vpack.c.bf16 %v4076, %v4074
  %v4087 = vpack.c.bf16 %v4079, %v4077
  %v4088 = vpack.c.bf16 %v4080, %v4078
  %v4089 = vld [vmem:[%s7] sm:$0xf]
  %v4090 = vld [vmem:[%s7 + $0x4] sm:$0xf]
  %v4091 = vld [vmem:[%s7 + $0x8] sm:$0xf]
  %v4092 = vld [vmem:[%s7 + $0xc] sm:$0xf]
  %v4093 = vld [vmem:[%s7 + $0x10] sm:$0xf]
  %v4094 = vld [vmem:[%s7 + $0x14] sm:$0xf]
  %v4095 = vld [vmem:[%s7 + $0x18] sm:$0xf]
  %v4096 = vld [vmem:[%s7 + $0x1c] sm:$0xf]
  %v4097 = vld [vmem:[%s7 + $0x20] sm:$0xf]
  %v4098 = vld [vmem:[%s7 + $0x24] sm:$0xf]
  %v4099 = vld [vmem:[%s7 + $0x28] sm:$0xf]
  %v4100 = vld [vmem:[%s7 + $0x2c] sm:$0xf]
  %v4101 = vld [vmem:[%s7 + $0x30] sm:$0xf]
  %v4102 = vld [vmem:[%s7 + $0x34] sm:$0xf]
  %v4103 = vld [vmem:[%s7 + $0x38] sm:$0xf]
  %v4104 = vld [vmem:[%s7 + $0x3c] sm:$0xf]
  %v4105 = vld [vmem:[%s7 + $0x40] sm:$0xf]
  %v4106 = vld [vmem:[%s7 + $0x44] sm:$0xf]
  %v4107 = vld [vmem:[%s7 + $0x48] sm:$0xf]
  %v4108 = vld [vmem:[%s7 + $0x4c] sm:$0xf]
  %v4129 = vunpack.c.l.b16 %v4089
  %v4130 = vunpack.c.l.b16 %v4090
  %v4131 = vunpack.c.l.b16 %v4091
  %v4132 = vunpack.c.l.b16 %v4092
  %v4133 = vunpack.c.l.b16 %v4093
  %v4134 = vunpack.c.l.b16 %v4094
  %v4135 = vunpack.c.l.b16 %v4095
  %v4136 = vunpack.c.l.b16 %v4096
  %v4137 = vunpack.c.l.b16 %v4097
  %v4138 = vunpack.c.l.b16 %v4098
  %v4139 = vunpack.c.l.b16 %v4099
  %v4140 = vunpack.c.l.b16 %v4100
  %v4141 = vunpack.c.l.b16 %v4101
  %v4142 = vunpack.c.l.b16 %v4102
  %v4143 = vunpack.c.l.b16 %v4103
  %v4144 = vunpack.c.l.b16 %v4104
  %v4145 = vunpack.c.l.b16 %v4105
  %v4146 = vunpack.c.l.b16 %v4106
  %v4147 = vunpack.c.l.b16 %v4107
  %v4148 = vunpack.c.l.b16 %v4108
  %v4149 = vpack.c.b16 %v4130, %v4129
  %v4150 = vpack.c.b16 %v4132, %v4131
  %v4151 = vpack.c.b16 %v4134, %v4133
  %v4152 = vpack.c.b16 %v4136, %v4135
  %v4153 = vpack.c.b16 %v4138, %v4137
  %v4154 = vpack.c.b16 %v4140, %v4139
  %v4155 = vpack.c.b16 %v4142, %v4141
  %v4156 = vpack.c.b16 %v4144, %v4143
  %v4157 = vpack.c.b16 %v4146, %v4145
  %v4158 = vpack.c.b16 %v4148, %v4147
  %vm4169 = vcmask 261120
  %v4171 = vsel %vm4169, %v4082, 0
  %v4174 = vsel %vm4169, %v4084, 0
  %v4177 = vsel %vm4169, %v4086, 0
  %v4180 = vsel %vm4169, %v4088, 0
  %4182 = vmatprep.subr.bf16.mxu0 0
  %4183 = vmatpush1.bf16.msra.mxu0 %v4149
  %4184 = vmatprep.subr.bf16.mxu0 0
  %4185 = vmatpush1.bf16.msra.mxu0 %v4150
  %4186 = vmatprep.subr.bf16.mxu0 0
  %4187 = vmatpush1.bf16.msra.mxu0 %v4151
  %4188 = vmatprep.subr.bf16.mxu0 0
  %4189 = vmatpush1.bf16.msra.mxu0 %v4152
  %4190 = vmatprep.subr.bf16.mxu0 0
  %4191 = vmatpush1.bf16.msra.mxu0 %v4153
  %4192 = vmatprep.subr.bf16.mxu0 0
  %4193 = vmatpush1.bf16.msra.mxu0 %v4154
  %4194 = vmatprep.subr.bf16.mxu0 0
  %4195 = vmatpush1.bf16.msra.mxu0 %v4155
  %4196 = vmatprep.subr.bf16.mxu0 0
  %4197 = vmatpush1.bf16.msra.mxu0 %v4156
  %4198 = vmatprep.subr.bf16.mxu0 0
  %4199 = vmatpush1.bf16.msra.mxu0 %v4157
  %4200 = vmatprep.subr.bf16.mxu0 0
  %4201 = vmatpush1.bf16.msra.mxu0 %v4158
  %4202 = vmatprep.subr.bf16.mxu0 0
  %4203 = vmatpush1.bf16.msra.mxu0 0
  %4204 = vmatprep.subr.bf16.mxu0 0
  %4205 = vmatpush1.bf16.msra.mxu0 0
  %4206 = vmatprep.subr.bf16.mxu0 0
  %4207 = vmatpush1.bf16.msra.mxu0 0
  %4208 = vmatprep.subr.bf16.mxu0 0
  %4209 = vmatpush1.bf16.msra.mxu0 0
  %4210 = vmatprep.subr.bf16.mxu0 0
  %4211 = vmatpush1.bf16.msra.mxu0 0
  %4212 = vmatprep.subr.bf16.mxu0 0
  %4213 = vmatpush1.bf16.msra.mxu0 0
  %4214 = vmatprep.mubr.bf16.mxu0 %v4171
  %4215 = vmatmul.mubr.bf16.gmra.mrb[0].mxu0 %v4081
  %v4216 = vpop.f32.mrb[0].mxu0
  %v4217 = vadd.f32 0.0, %v4216
  %v4218 = vpop.f32.mrb[0].mxu0
  %v4219 = vpop.f32.mrb[0].mxu0
  %v4220 = vadd.f32 0.0, %v4219
  %v4221 = vpop.f32.mrb[0].mxu0
  %4222 = vmatprep.mubr.bf16.mxu0 %v4174
  %4223 = vmatmul.mubr.bf16.gmra.mrb[0].mxu0 %v4083
  %v4224 = vpop.f32.mrb[0].mxu0
  %v4225 = vadd.f32 0.0, %v4224
  %v4226 = vpop.f32.mrb[0].mxu0
  %v4227 = vpop.f32.mrb[0].mxu0
  %v4228 = vadd.f32 0.0, %v4227
  %v4229 = vpop.f32.mrb[0].mxu0
  %4230 = vmatprep.mubr.bf16.mxu0 %v4177
  %4231 = vmatmul.mubr.bf16.gmra.mrb[0].mxu0 %v4085
  %v4232 = vpop.f32.mrb[0].mxu0
  %v4233 = vadd.f32 0.0, %v4232
  %v4234 = vpop.f32.mrb[0].mxu0
  %v4235 = vpop.f32.mrb[0].mxu0
  %v4236 = vadd.f32 0.0, %v4235
  %v4237 = vpop.f32.mrb[0].mxu0
  %4238 = vmatprep.mubr.bf16.mxu0 %v4180
  %4239 = vmatmul.mubr.bf16.gmra.mrb[0].mxu0 %v4087
  %v4240 = vpop.f32.mrb[0].mxu0
  %v4241 = vadd.f32 0.0, %v4240
  %v4242 = vpop.f32.mrb[0].mxu0
  %v4243 = vpop.f32.mrb[0].mxu0
  %v4244 = vadd.f32 0.0, %v4243
  %v4245 = vpop.f32.mrb[0].mxu0
  %4246 = vdwg.mxu0
  %v4247 = vld [vmem:[%s8] sm:$0xf]
  %v4248 = vld [vmem:[%s8 + $0x4] sm:$0xf]
  %v4249 = vld [vmem:[%s8 + $0x8] sm:$0xf]
  %v4250 = vld [vmem:[%s8 + $0xc] sm:$0xf]
  %v4251 = vld [vmem:[%s8 + $0x10] sm:$0xf]
  %v4252 = vld [vmem:[%s8 + $0x14] sm:$0xf]
  %v4253 = vld [vmem:[%s8 + $0x18] sm:$0xf]
  %v4254 = vld [vmem:[%s8 + $0x1c] sm:$0xf]
  %v4255 = vld [vmem:[%s8 + $0x20] sm:$0xf]
  %v4256 = vld [vmem:[%s8 + $0x24] sm:$0xf]
  %v4257 = vld [vmem:[%s8 + $0x28] sm:$0xf]
  %v4258 = vld [vmem:[%s8 + $0x2c] sm:$0xf]
  %v4259 = vld [vmem:[%s8 + $0x30] sm:$0xf]
  %v4260 = vld [vmem:[%s8 + $0x34] sm:$0xf]
  %v4261 = vld [vmem:[%s8 + $0x38] sm:$0xf]
  %v4262 = vld [vmem:[%s8 + $0x3c] sm:$0xf]
  %v4263 = vld [vmem:[%s8 + $0x40] sm:$0xf]
  %v4264 = vld [vmem:[%s8 + $0x44] sm:$0xf]
  %v4265 = vld [vmem:[%s8 + $0x48] sm:$0xf]
  %v4266 = vld [vmem:[%s8 + $0x4c] sm:$0xf]
  %v4287 = vunpack.c.l.b16 %v4247
  %v4288 = vunpack.c.l.b16 %v4248
  %v4289 = vunpack.c.l.b16 %v4249
  %v4290 = vunpack.c.l.b16 %v4250
  %v4291 = vunpack.c.l.b16 %v4251
  %v4292 = vunpack.c.l.b16 %v4252
  %v4293 = vunpack.c.l.b16 %v4253
  %v4294 = vunpack.c.l.b16 %v4254
  %v4295 = vunpack.c.l.b16 %v4255
  %v4296 = vunpack.c.l.b16 %v4256
  %v4297 = vunpack.c.l.b16 %v4257
  %v4298 = vunpack.c.l.b16 %v4258
  %v4299 = vunpack.c.l.b16 %v4259
  %v4300 = vunpack.c.l.b16 %v4260
  %v4301 = vunpack.c.l.b16 %v4261
  %v4302 = vunpack.c.l.b16 %v4262
  %v4303 = vunpack.c.l.b16 %v4263
  %v4304 = vunpack.c.l.b16 %v4264
  %v4305 = vunpack.c.l.b16 %v4265
  %v4306 = vunpack.c.l.b16 %v4266
  %v4307 = vpack.c.b16 %v4288, %v4287
  %v4308 = vpack.c.b16 %v4290, %v4289
  %v4309 = vpack.c.b16 %v4292, %v4291
  %v4310 = vpack.c.b16 %v4294, %v4293
  %v4311 = vpack.c.b16 %v4296, %v4295
  %v4312 = vpack.c.b16 %v4298, %v4297
  %v4313 = vpack.c.b16 %v4300, %v4299
  %v4314 = vpack.c.b16 %v4302, %v4301
  %v4315 = vpack.c.b16 %v4304, %v4303
  %v4316 = vpack.c.b16 %v4306, %v4305
  %4327 = vmatprep.subr.bf16.mxu0 0
  %4328 = vmatpush1.bf16.msra.mxu0 %v4307
  %4329 = vmatprep.subr.bf16.mxu0 0
  %4330 = vmatpush1.bf16.msra.mxu0 %v4308
  %4331 = vmatprep.subr.bf16.mxu0 0
  %4332 = vmatpush1.bf16.msra.mxu0 %v4309
  %4333 = vmatprep.subr.bf16.mxu0 0
  %4334 = vmatpush1.bf16.msra.mxu0 %v4310
  %4335 = vmatprep.subr.bf16.mxu0 0
  %4336 = vmatpush1.bf16.msra.mxu0 %v4311
  %4337 = vmatprep.subr.bf16.mxu0 0
  %4338 = vmatpush1.bf16.msra.mxu0 %v4312
  %4339 = vmatprep.subr.bf16.mxu0 0
  %4340 = vmatpush1.bf16.msra.mxu0 %v4313
  %4341 = vmatprep.subr.bf16.mxu0 0
  %4342 = vmatpush1.bf16.msra.mxu0 %v4314
  %4343 = vmatprep.subr.bf16.mxu0 0
  %4344 = vmatpush1.bf16.msra.mxu0 %v4315
  %4345 = vmatprep.subr.bf16.mxu0 0
  %4346 = vmatpush1.bf16.msra.mxu0 %v4316
  %4347 = vmatprep.subr.bf16.mxu0 0
  %4348 = vmatpush1.bf16.msra.mxu0 0
  %4349 = vmatprep.subr.bf16.mxu0 0
  %4350 = vmatpush1.bf16.msra.mxu0 0
  %4351 = vmatprep.subr.bf16.mxu0 0
  %4352 = vmatpush1.bf16.msra.mxu0 0
  %4353 = vmatprep.subr.bf16.mxu0 0
  %4354 = vmatpush1.bf16.msra.mxu0 0
  %4355 = vmatprep.subr.bf16.mxu0 0
  %4356 = vmatpush1.bf16.msra.mxu0 0
  %4357 = vmatprep.subr.bf16.mxu0 0
  %4358 = vmatpush1.bf16.msra.mxu0 0
  %4359 = vmatprep.mubr.bf16.mxu0 %v4171
  %4360 = vmatmul.mubr.bf16.gmra.mrb[0].mxu0 %v4081
  %v4361 = vpop.f32.mrb[0].mxu0
  %v4362 = vadd.f32 0.0, %v4361
  %v4363 = vpop.f32.mrb[0].mxu0
  %v4364 = vpop.f32.mrb[0].mxu0
  %v4365 = vadd.f32 0.0, %v4364
  %v4366 = vpop.f32.mrb[0].mxu0
  %4367 = vmatprep.mubr.bf16.mxu0 %v4174
  %4368 = vmatmul.mubr.bf16.gmra.mrb[0].mxu0 %v4083
  %v4369 = vpop.f32.mrb[0].mxu0
  %v4370 = vadd.f32 0.0, %v4369
  %v4371 = vpop.f32.mrb[0].mxu0
  %v4372 = vpop.f32.mrb[0].mxu0
  %v4373 = vadd.f32 0.0, %v4372
  %v4374 = vpop.f32.mrb[0].mxu0
  %4375 = vmatprep.mubr.bf16.mxu0 %v4177
  %4376 = vmatmul.mubr.bf16.gmra.mrb[0].mxu0 %v4085
  %v4377 = vpop.f32.mrb[0].mxu0
  %v4378 = vadd.f32 0.0, %v4377
  %v4379 = vpop.f32.mrb[0].mxu0
  %v4380 = vpop.f32.mrb[0].mxu0
  %v4381 = vadd.f32 0.0, %v4380
  %v4382 = vpop.f32.mrb[0].mxu0
  %4383 = vmatprep.mubr.bf16.mxu0 %v4180
  %4384 = vmatmul.mubr.bf16.gmra.mrb[0].mxu0 %v4087
  %v4385 = vpop.f32.mrb[0].mxu0
  %v4386 = vadd.f32 0.0, %v4385
  %v4387 = vpop.f32.mrb[0].mxu0
  %v4388 = vpop.f32.mrb[0].mxu0
  %v4389 = vadd.f32 0.0, %v4388
  %v4390 = vpop.f32.mrb[0].mxu0
  %4391 = vdwg.mxu0
  %v4392 = vmax.f32 %v4217, %v4362
  %v4393 = vmax.f32 %v4220, %v4365
  %v4394 = vmax.f32 %v4225, %v4370
  %v4395 = vmax.f32 %v4228, %v4373
  %v4396 = vmax.f32 %v4233, %v4378
  %v4397 = vmax.f32 %v4236, %v4381
  %v4398 = vmax.f32 %v4241, %v4386
  %v4399 = vmax.f32 %v4244, %v4389
  %v4400 = vmax.f32 %v4392, 0.0
  %v4401 = vmax.f32 %v4393, 0.0
  %v4402 = vmax.f32 %v4394, 0.0
  %v4403 = vmax.f32 %v4395, 0.0
  %v4404 = vmax.f32 %v4396, 0.0
  %v4405 = vmax.f32 %v4397, 0.0
  %v4406 = vmax.f32 %v4398, 0.0
  %v4407 = vmax.f32 %v4399, 0.0
  %v4408 = vpack.c.bf16 %v4401, %v4400
  %v4409 = vpack.c.bf16 %v4403, %v4402
  %v4410 = vpack.c.bf16 %v4405, %v4404
  %v4411 = vpack.c.bf16 %v4407, %v4406
  %v4412 = vld [vmem:[%s9] sm:$0xf]
  %v4413 = vld [vmem:[%s9 + $0x4] sm:$0xf]
  %v4414 = vld [vmem:[%s9 + $0x8] sm:$0xf]
  %v4415 = vld [vmem:[%s9 + $0xc] sm:$0xf]
  %v4416 = vld [vmem:[%s9 + $0x10] sm:$0xf]
  %v4417 = vld [vmem:[%s9 + $0x14] sm:$0xf]
  %v4418 = vld [vmem:[%s9 + $0x18] sm:$0xf]
  %v4419 = vld [vmem:[%s9 + $0x1c] sm:$0xf]
  %v4420 = vld [vmem:[%s9 + $0x20] sm:$0xf]
  %v4421 = vld [vmem:[%s9 + $0x24] sm:$0xf]
  %s4422 = scalar_lea.vmem %s9, 40
  %v4423 = vld [vmem:[%s4422] sm:$0xf]
  %v4424 = vld [vmem:[%s4422 + $0x4] sm:$0xf]
  %v4425 = vld [vmem:[%s4422 + $0x8] sm:$0xf]
  %v4426 = vld [vmem:[%s4422 + $0xc] sm:$0xf]
  %v4427 = vld [vmem:[%s4422 + $0x10] sm:$0xf]
  %v4428 = vld [vmem:[%s4422 + $0x14] sm:$0xf]
  %v4429 = vld [vmem:[%s4422 + $0x18] sm:$0xf]
  %v4430 = vld [vmem:[%s4422 + $0x1c] sm:$0xf]
  %v4431 = vld [vmem:[%s4422 + $0x20] sm:$0xf]
  %v4432 = vld [vmem:[%s4422 + $0x24] sm:$0xf]
  %v4443 = vunpack.c.l.b16 %v4423
  %v4444 = vunpack.c.l.b16 %v4424
  %v4445 = vunpack.c.l.b16 %v4425
  %v4446 = vunpack.c.l.b16 %v4426
  %v4447 = vunpack.c.l.b16 %v4427
  %v4448 = vunpack.c.l.b16 %v4428
  %v4449 = vunpack.c.l.b16 %v4429
  %v4450 = vunpack.c.l.b16 %v4430
  %v4451 = vunpack.c.l.b16 %v4431
  %v4452 = vunpack.c.l.b16 %v4432
  %v4453 = vpack.c.b16 %v4444, %v4443
  %v4454 = vpack.c.b16 %v4446, %v4445
  %v4455 = vpack.c.b16 %v4448, %v4447
  %v4456 = vpack.c.b16 %v4450, %v4449
  %v4457 = vpack.c.b16 %v4452, %v4451
  %vm4463 = vcmask 654336
  %v4465 = vsel %vm4463, %v4409, 0
  %4467 = vmatprep.subr.bf16.mxu0 0
  %4468 = vmatpush1.bf16.msra.mxu0 %v4453
  %4469 = vmatprep.subr.bf16.mxu0 0
  %4470 = vmatpush1.bf16.msra.mxu0 %v4454
  %4471 = vmatprep.subr.bf16.mxu0 0
  %4472 = vmatpush1.bf16.msra.mxu0 %v4455
  %4473 = vmatprep.subr.bf16.mxu0 0
  %4474 = vmatpush1.bf16.msra.mxu0 %v4456
  %4475 = vmatprep.subr.bf16.mxu0 0
  %4476 = vmatpush1.bf16.msra.mxu0 %v4457
  %4477 = vmatprep.subr.bf16.mxu0 0
  %4478 = vmatpush1.bf16.msra.mxu0 0
  %4479 = vmatprep.subr.bf16.mxu0 0
  %4480 = vmatpush1.bf16.msra.mxu0 0
  %4481 = vmatprep.subr.bf16.mxu0 0
  %4482 = vmatpush1.bf16.msra.mxu0 0
  %4483 = vmatprep.subr.bf16.mxu0 0
  %4484 = vmatpush1.bf16.msra.mxu0 0
  %4485 = vmatprep.subr.bf16.mxu0 0
  %4486 = vmatpush1.bf16.msra.mxu0 0
  %4487 = vmatprep.subr.bf16.mxu0 0
  %4488 = vmatpush1.bf16.msra.mxu0 0
  %4489 = vmatprep.subr.bf16.mxu0 0
  %4490 = vmatpush1.bf16.msra.mxu0 0
  %4491 = vmatprep.subr.bf16.mxu0 0
  %4492 = vmatpush1.bf16.msra.mxu0 0
  %4493 = vmatprep.subr.bf16.mxu0 0
  %4494 = vmatpush1.bf16.msra.mxu0 0
  %4495 = vmatprep.subr.bf16.mxu0 0
  %4496 = vmatpush1.bf16.msra.mxu0 0
  %4497 = vmatprep.subr.bf16.mxu0 0
  %4498 = vmatpush1.bf16.msra.mxu0 0
  %4499 = vmatprep.mubr.bf16.mxu0 0
  %4500 = vmatmul.mubr.bf16.gmra.mrb[0].mxu0 %v4465
  %v4501 = vpop.f32.mrb[0].mxu0
  %v4502 = vadd.f32 0.0, %v4501
  %v4503 = vpop.f32.mrb[0].mxu0
  %v4504 = vpop.f32.mrb[0].mxu0
  %v4505 = vadd.f32 0.0, %v4504
  %v4506 = vpop.f32.mrb[0].mxu0
  %4507 = vdwg.mxu0
  %v4518 = vunpack.c.l.b16 %v4412
  %v4519 = vunpack.c.l.b16 %v4413
  %v4520 = vunpack.c.l.b16 %v4414
  %v4521 = vunpack.c.l.b16 %v4415
  %v4522 = vunpack.c.l.b16 %v4416
  %v4523 = vunpack.c.l.b16 %v4417
  %v4524 = vunpack.c.l.b16 %v4418
  %v4525 = vunpack.c.l.b16 %v4419
  %v4526 = vunpack.c.l.b16 %v4420
  %v4527 = vunpack.c.l.b16 %v4421
  %v4528 = vpack.c.b16 %v4519, %v4518
  %v4529 = vpack.c.b16 %v4521, %v4520
  %v4530 = vpack.c.b16 %v4523, %v4522
  %v4531 = vpack.c.b16 %v4525, %v4524
  %v4532 = vpack.c.b16 %v4527, %v4526
  %v4539 = vsel %vm4463, %v4408, 0
  %4541 = vmatprep.subr.bf16.mxu0 0
  %4542 = vmatpush1.bf16.msra.mxu0 %v4528
  %4543 = vmatprep.subr.bf16.mxu0 0
  %4544 = vmatpush1.bf16.msra.mxu0 %v4529
  %4545 = vmatprep.subr.bf16.mxu0 0
  %4546 = vmatpush1.bf16.msra.mxu0 %v4530
  %4547 = vmatprep.subr.bf16.mxu0 0
  %4548 = vmatpush1.bf16.msra.mxu0 %v4531
  %4549 = vmatprep.subr.bf16.mxu0 0
  %4550 = vmatpush1.bf16.msra.mxu0 %v4532
  %4551 = vmatprep.subr.bf16.mxu0 0
  %4552 = vmatpush1.bf16.msra.mxu0 0
  %4553 = vmatprep.subr.bf16.mxu0 0
  %4554 = vmatpush1.bf16.msra.mxu0 0
  %4555 = vmatprep.subr.bf16.mxu0 0
  %4556 = vmatpush1.bf16.msra.mxu0 0
  %4557 = vmatprep.subr.bf16.mxu0 0
  %4558 = vmatpush1.bf16.msra.mxu0 0
  %4559 = vmatprep.subr.bf16.mxu0 0
  %4560 = vmatpush1.bf16.msra.mxu0 0
  %4561 = vmatprep.subr.bf16.mxu0 0
  %4562 = vmatpush1.bf16.msra.mxu0 0
  %4563 = vmatprep.subr.bf16.mxu0 0
  %4564 = vmatpush1.bf16.msra.mxu0 0
  %4565 = vmatprep.subr.bf16.mxu0 0
  %4566 = vmatpush1.bf16.msra.mxu0 0
  %4567 = vmatprep.subr.bf16.mxu0 0
  %4568 = vmatpush1.bf16.msra.mxu0 0
  %4569 = vmatprep.subr.bf16.mxu0 0
  %4570 = vmatpush1.bf16.msra.mxu0 0
  %4571 = vmatprep.subr.bf16.mxu0 0
  %4572 = vmatpush1.bf16.msra.mxu0 0
  %4573 = vmatprep.mubr.bf16.mxu0 0
  %4574 = vmatmul.mubr.bf16.gmra.mrb[0].mxu0 %v4539
  %v4575 = vpop.f32.mrb[0].mxu0
  %v4576 = vadd.f32 %v4502, %v4575
  %v4577 = vpop.f32.mrb[0].mxu0
  %v4578 = vpop.f32.mrb[0].mxu0
  %v4579 = vadd.f32 %v4505, %v4578
  %v4580 = vpop.f32.mrb[0].mxu0
  %4581 = vdwg.mxu0
  %s4582 = scalar_lea.vmem %s9, 80
  %v4583 = vld [vmem:[%s4582] sm:$0xf]
  %v4584 = vld [vmem:[%s4582 + $0x4] sm:$0xf]
  %v4585 = vld [vmem:[%s4582 + $0x8] sm:$0xf]
  %v4586 = vld [vmem:[%s4582 + $0xc] sm:$0xf]
  %v4587 = vld [vmem:[%s4582 + $0x10] sm:$0xf]
  %v4588 = vld [vmem:[%s4582 + $0x14] sm:$0xf]
  %v4589 = vld [vmem:[%s4582 + $0x18] sm:$0xf]
  %v4590 = vld [vmem:[%s4582 + $0x1c] sm:$0xf]
  %v4591 = vld [vmem:[%s4582 + $0x20] sm:$0xf]
  %v4592 = vld [vmem:[%s4582 + $0x24] sm:$0xf]
  %v4603 = vunpack.c.l.b16 %v4583
  %v4604 = vunpack.c.l.b16 %v4584
  %v4605 = vunpack.c.l.b16 %v4585
  %v4606 = vunpack.c.l.b16 %v4586
  %v4607 = vunpack.c.l.b16 %v4587
  %v4608 = vunpack.c.l.b16 %v4588
  %v4609 = vunpack.c.l.b16 %v4589
  %v4610 = vunpack.c.l.b16 %v4590
  %v4611 = vunpack.c.l.b16 %v4591
  %v4612 = vunpack.c.l.b16 %v4592
  %v4613 = vpack.c.b16 %v4604, %v4603
  %v4614 = vpack.c.b16 %v4606, %v4605
  %v4615 = vpack.c.b16 %v4608, %v4607
  %v4616 = vpack.c.b16 %v4610, %v4609
  %v4617 = vpack.c.b16 %v4612, %v4611
  %v4624 = vsel %vm4463, %v4410, 0
  %4626 = vmatprep.subr.bf16.mxu0 0
  %4627 = vmatpush1.bf16.msra.mxu0 %v4613
  %4628 = vmatprep.subr.bf16.mxu0 0
  %4629 = vmatpush1.bf16.msra.mxu0 %v4614
  %4630 = vmatprep.subr.bf16.mxu0 0
  %4631 = vmatpush1.bf16.msra.mxu0 %v4615
  %4632 = vmatprep.subr.bf16.mxu0 0
  %4633 = vmatpush1.bf16.msra.mxu0 %v4616
  %4634 = vmatprep.subr.bf16.mxu0 0
  %4635 = vmatpush1.bf16.msra.mxu0 %v4617
  %4636 = vmatprep.subr.bf16.mxu0 0
  %4637 = vmatpush1.bf16.msra.mxu0 0
  %4638 = vmatprep.subr.bf16.mxu0 0
  %4639 = vmatpush1.bf16.msra.mxu0 0
  %4640 = vmatprep.subr.bf16.mxu0 0
  %4641 = vmatpush1.bf16.msra.mxu0 0
  %4642 = vmatprep.subr.bf16.mxu0 0
  %4643 = vmatpush1.bf16.msra.mxu0 0
  %4644 = vmatprep.subr.bf16.mxu0 0
  %4645 = vmatpush1.bf16.msra.mxu0 0
  %4646 = vmatprep.subr.bf16.mxu0 0
  %4647 = vmatpush1.bf16.msra.mxu0 0
  %4648 = vmatprep.subr.bf16.mxu0 0
  %4649 = vmatpush1.bf16.msra.mxu0 0
  %4650 = vmatprep.subr.bf16.mxu0 0
  %4651 = vmatpush1.bf16.msra.mxu0 0
  %4652 = vmatprep.subr.bf16.mxu0 0
  %4653 = vmatpush1.bf16.msra.mxu0 0
  %4654 = vmatprep.subr.bf16.mxu0 0
  %4655 = vmatpush1.bf16.msra.mxu0 0
  %4656 = vmatprep.subr.bf16.mxu0 0
  %4657 = vmatpush1.bf16.msra.mxu0 0
  %4658 = vmatprep.mubr.bf16.mxu0 0
  %4659 = vmatmul.mubr.bf16.gmra.mrb[0].mxu0 %v4624
  %v4660 = vpop.f32.mrb[0].mxu0
  %v4661 = vadd.f32 0.0, %v4660
  %v4662 = vpop.f32.mrb[0].mxu0
  %v4663 = vpop.f32.mrb[0].mxu0
  %v4664 = vadd.f32 0.0, %v4663
  %v4665 = vpop.f32.mrb[0].mxu0
  %4666 = vdwg.mxu0
  %v4667 = vadd.f32 %v4576, %v4661
  %v4668 = vadd.f32 %v4579, %v4664
  %s4669 = scalar_lea.vmem %s9, 120
  %v4670 = vld [vmem:[%s4669] sm:$0xf]
  %v4671 = vld [vmem:[%s4669 + $0x4] sm:$0xf]
  %v4672 = vld [vmem:[%s4669 + $0x8] sm:$0xf]
  %v4673 = vld [vmem:[%s4669 + $0xc] sm:$0xf]
  %v4674 = vld [vmem:[%s4669 + $0x10] sm:$0xf]
  %v4675 = vld [vmem:[%s4669 + $0x14] sm:$0xf]
  %v4676 = vld [vmem:[%s4669 + $0x18] sm:$0xf]
  %v4677 = vld [vmem:[%s4669 + $0x1c] sm:$0xf]
  %v4678 = vld [vmem:[%s4669 + $0x20] sm:$0xf]
  %v4679 = vld [vmem:[%s4669 + $0x24] sm:$0xf]
  %v4690 = vunpack.c.l.b16 %v4670
  %v4691 = vunpack.c.l.b16 %v4671
  %v4692 = vunpack.c.l.b16 %v4672
  %v4693 = vunpack.c.l.b16 %v4673
  %v4694 = vunpack.c.l.b16 %v4674
  %v4695 = vunpack.c.l.b16 %v4675
  %v4696 = vunpack.c.l.b16 %v4676
  %v4697 = vunpack.c.l.b16 %v4677
  %v4698 = vunpack.c.l.b16 %v4678
  %v4699 = vunpack.c.l.b16 %v4679
  %v4700 = vpack.c.b16 %v4691, %v4690
  %v4701 = vpack.c.b16 %v4693, %v4692
  %v4702 = vpack.c.b16 %v4695, %v4694
  %v4703 = vpack.c.b16 %v4697, %v4696
  %v4704 = vpack.c.b16 %v4699, %v4698
  %v4711 = vsel %vm4463, %v4411, 0
  %4713 = vmatprep.subr.bf16.mxu0 0
  %4714 = vmatpush1.bf16.msra.mxu0 %v4700
  %4715 = vmatprep.subr.bf16.mxu0 0
  %4716 = vmatpush1.bf16.msra.mxu0 %v4701
  %4717 = vmatprep.subr.bf16.mxu0 0
  %4718 = vmatpush1.bf16.msra.mxu0 %v4702
  %4719 = vmatprep.subr.bf16.mxu0 0
  %4720 = vmatpush1.bf16.msra.mxu0 %v4703
  %4721 = vmatprep.subr.bf16.mxu0 0
  %4722 = vmatpush1.bf16.msra.mxu0 %v4704
  %4723 = vmatprep.subr.bf16.mxu0 0
  %4724 = vmatpush1.bf16.msra.mxu0 0
  %4725 = vmatprep.subr.bf16.mxu0 0
  %4726 = vmatpush1.bf16.msra.mxu0 0
  %4727 = vmatprep.subr.bf16.mxu0 0
  %4728 = vmatpush1.bf16.msra.mxu0 0
  %4729 = vmatprep.subr.bf16.mxu0 0
  %4730 = vmatpush1.bf16.msra.mxu0 0
  %4731 = vmatprep.subr.bf16.mxu0 0
  %4732 = vmatpush1.bf16.msra.mxu0 0
  %4733 = vmatprep.subr.bf16.mxu0 0
  %4734 = vmatpush1.bf16.msra.mxu0 0
  %4735 = vmatprep.subr.bf16.mxu0 0
  %4736 = vmatpush1.bf16.msra.mxu0 0
  %4737 = vmatprep.subr.bf16.mxu0 0
  %4738 = vmatpush1.bf16.msra.mxu0 0
  %4739 = vmatprep.subr.bf16.mxu0 0
  %4740 = vmatpush1.bf16.msra.mxu0 0
  %4741 = vmatprep.subr.bf16.mxu0 0
  %4742 = vmatpush1.bf16.msra.mxu0 0
  %4743 = vmatprep.subr.bf16.mxu0 0
  %4744 = vmatpush1.bf16.msra.mxu0 0
  %4745 = vmatprep.mubr.bf16.mxu0 0
  %4746 = vmatmul.mubr.bf16.gmra.mrb[0].mxu0 %v4711
  %v4747 = vpop.f32.mrb[0].mxu0
  %v4748 = vadd.f32 0.0, %v4747
  %v4749 = vpop.f32.mrb[0].mxu0
  %v4750 = vpop.f32.mrb[0].mxu0
  %v4751 = vadd.f32 0.0, %v4750
  %v4752 = vpop.f32.mrb[0].mxu0
  %4753 = vdwg.mxu0
  %v4754 = vadd.f32 %v4667, %v4748
  %v4755 = vadd.f32 %v4668, %v4751
  %v4756 = vld [vmem:[%s10] sm:$0x1]
  %v4758 = vlaneseq
  %v4759 = vshrl.u32 %v4758, 7
  %v4760 = vsub.s32 0, %v4759
  %v4761 = vrot.slane %v4756, %v4760
  %v4763 = vadd.f32 %v4754, %v4761
  %v4764 = vadd.f32 %v4755, %v4761
  %v4765 = vmax.f32 %v4763, 0.0
  %v4766 = vmax.f32 %v4764, 0.0
  %v4767 = vpack.c.bf16 %v4766, %v4765
  %v4768 = vld [vmem:[%s11] sm:$0xf]
  %v4769 = vld [vmem:[%s11 + $0x4] sm:$0xf]
  %v4770 = vld [vmem:[%s11 + $0x8] sm:$0xf]
  %v4771 = vld [vmem:[%s11 + $0xc] sm:$0xf]
  %v4772 = vld [vmem:[%s11 + $0x10] sm:$0xf]
  %v4773 = vld [vmem:[%s11 + $0x14] sm:$0xf]
  %v4774 = vld [vmem:[%s11 + $0x18] sm:$0xf]
  %v4775 = vld [vmem:[%s11 + $0x1c] sm:$0xf]
  %v4776 = vld [vmem:[%s11 + $0x20] sm:$0xf]
  %v4777 = vld [vmem:[%s11 + $0x24] sm:$0xf]
  %v4778 = vld [vmem:[%s11 + $0x28] sm:$0xf]
  %v4779 = vld [vmem:[%s11 + $0x2c] sm:$0xf]
  %v4780 = vld [vmem:[%s11 + $0x30] sm:$0xf]
  %v4781 = vld [vmem:[%s11 + $0x34] sm:$0xf]
  %v4782 = vld [vmem:[%s11 + $0x38] sm:$0xf]
  %v4783 = vld [vmem:[%s11 + $0x3c] sm:$0xf]
  %v4784 = vld [vmem:[%s12] sm:$0x1]
  %v4786 = vlaneseq
  %v4787 = vshrl.u32 %v4786, 7
  %v4788 = vsub.s32 0, %v4787
  %v4789 = vrot.slane %v4784, %v4788
  %v4807 = vunpack.c.l.b16 %v4768
  %v4808 = vunpack.c.l.b16 %v4769
  %v4809 = vunpack.c.l.b16 %v4770
  %v4810 = vunpack.c.l.b16 %v4771
  %v4811 = vunpack.c.l.b16 %v4772
  %v4812 = vunpack.c.l.b16 %v4773
  %v4813 = vunpack.c.l.b16 %v4774
  %v4814 = vunpack.c.l.b16 %v4775
  %v4815 = vunpack.c.l.b16 %v4776
  %v4816 = vunpack.c.l.b16 %v4777
  %v4817 = vunpack.c.l.b16 %v4778
  %v4818 = vunpack.c.l.b16 %v4779
  %v4819 = vunpack.c.l.b16 %v4780
  %v4820 = vunpack.c.l.b16 %v4781
  %v4821 = vunpack.c.l.b16 %v4782
  %v4822 = vunpack.c.l.b16 %v4783
  %v4823 = vpack.c.b16 %v4808, %v4807
  %v4824 = vpack.c.b16 %v4810, %v4809
  %v4825 = vpack.c.b16 %v4812, %v4811
  %v4826 = vpack.c.b16 %v4814, %v4813
  %v4827 = vpack.c.b16 %v4816, %v4815
  %v4828 = vpack.c.b16 %v4818, %v4817
  %v4829 = vpack.c.b16 %v4820, %v4819
  %v4830 = vpack.c.b16 %v4822, %v4821
  %4839 = vmatprep.subr.bf16.mxu0 0
  %4840 = vmatpush1.bf16.msra.mxu0 %v4823
  %4841 = vmatprep.subr.bf16.mxu0 0
  %4842 = vmatpush1.bf16.msra.mxu0 %v4824
  %4843 = vmatprep.subr.bf16.mxu0 0
  %4844 = vmatpush1.bf16.msra.mxu0 %v4825
  %4845 = vmatprep.subr.bf16.mxu0 0
  %4846 = vmatpush1.bf16.msra.mxu0 %v4826
  %4847 = vmatprep.subr.bf16.mxu0 0
  %4848 = vmatpush1.bf16.msra.mxu0 %v4827
  %4849 = vmatprep.subr.bf16.mxu0 0
  %4850 = vmatpush1.bf16.msra.mxu0 %v4828
  %4851 = vmatprep.subr.bf16.mxu0 0
  %4852 = vmatpush1.bf16.msra.mxu0 %v4829
  %4853 = vmatprep.subr.bf16.mxu0 0
  %4854 = vmatpush1.bf16.msra.mxu0 %v4830
  %4855 = vmatprep.subr.bf16.mxu0 0
  %4856 = vmatpush1.bf16.msra.mxu0 0
  %4857 = vmatprep.subr.bf16.mxu0 0
  %4858 = vmatpush1.bf16.msra.mxu0 0
  %4859 = vmatprep.subr.bf16.mxu0 0
  %4860 = vmatpush1.bf16.msra.mxu0 0
  %4861 = vmatprep.subr.bf16.mxu0 0
  %4862 = vmatpush1.bf16.msra.mxu0 0
  %4863 = vmatprep.subr.bf16.mxu0 0
  %4864 = vmatpush1.bf16.msra.mxu0 0
  %4865 = vmatprep.subr.bf16.mxu0 0
  %4866 = vmatpush1.bf16.msra.mxu0 0
  %4867 = vmatprep.subr.bf16.mxu0 0
  %4868 = vmatpush1.bf16.msra.mxu0 0
  %4869 = vmatprep.subr.bf16.mxu0 0
  %4870 = vmatpush1.bf16.msra.mxu0 0
  %4871 = vmatprep.mubr.bf16.mxu0 0
  %4872 = vmatmul.mubr.bf16.gmra.mrb[0].mxu0 %v4767
  %v4873 = vpop.f32.mrb[0].mxu0
  %v4874 = vadd.f32 %v4789, %v4873
  %v4875 = vpop.f32.mrb[0].mxu0
  %v4876 = vpop.f32.mrb[0].mxu0
  %v4877 = vadd.f32 %v4789, %v4876
  %v4878 = vpop.f32.mrb[0].mxu0
  %4879 = vdwg.mxu0
  %v4880 = vld [vmem:[%s13] sm:$0x1]
  %v4882 = vlaneseq
  %v4883 = vshrl.u32 %v4882, 7
  %v4884 = vsub.s32 0, %v4883
  %v4885 = vrot.slane %v4880, %v4884
  %v4887 = vadd.f32 %v4874, %v4885
  %v4888 = vadd.f32 %v4877, %v4885
  %4889 = vmax.xlane.f32.xlu0 %v4887
  %v4890 = vpop.xlane.xlu0 %4889
  %4891 = vmax.xlane.f32.xlu0 %v4888
  %v4892 = vpop.xlane.xlu0 %4891
  %v4893 = vsub.f32 %v4887, %v4890
  %v4894 = vsub.f32 %v4888, %v4892
  %v4895 = vmul.f32 %v4893, 1.442695
  %v4896 = vpow.pop %v4895
  %v4897 = vmul.f32 %v4894, 1.442695
  %v4898 = vpow.pop %v4897
  %4899 = vadd.xlane.f32.xlu0 %v4896
  %v4900 = vpop.xlane.xlu0 %4899
  %4901 = vadd.xlane.f32.xlu0 %v4898
  %v4902 = vpop.xlane.xlu0 %4901
  %v4903 = vlog2.pop %v4900
  %v4904 = vmul.f32 %v4903, 0.6931472
  %v4905 = vlog2.pop %v4902
  %v4906 = vmul.f32 %v4905, 0.6931472
  %v4907 = vsub.f32 %v4893, %v4904
  %v4908 = vsub.f32 %v4894, %v4906
  %4909 = vst [vmem:[%s14] sm:$0xff] %v4907
  %4910 = vst [vmem:[%s14 + $0x8] sm:$0xff] %v4908
  // Predicated region
  $region58: #{lenet_forward.1} parent=0 // pred_check
    _
  $region59: #{lenet_forward.1} parent=0 // pred_check_branch
    %4912 = sbr.rel (0) target = $region61
  $region60: #{lenet_forward.1} parent=0 // pred_region
    _
  $region61: #{lenet_forward.1} parent=0 // pred_fallthru
    _
  // Predicated region
  $region62: #{lenet_forward.1} parent=0 // pred_check
    _
  $region63: #{lenet_forward.1} parent=0 // pred_check_branch
    %4914 = sbr.rel (0) target = $region65
  $region64: #{lenet_forward.1} parent=0 // pred_region
    _
  $region65: #{lenet_forward.1} parent=0 // pred_fallthru
    _

</llo_original>
